<compile_context>
chip_gen: v5e
topology: v5e:2x2
jax: 0.10.0
libtpu: 0.0.40
codegen_flags: <defaults>
</compile_context>

<pallas_src>
import jax
import jax.numpy as jnp
from jax.experimental import pallas as pl
from jax.experimental.pallas import tpu as pltpu

EPS = 1e-5  # torch.nn.BatchNorm1d default eps


def simsiam_kernel(x_ref,
                   w1_ref, g1_ref, b1_ref,
                   w2_ref, g2_ref, b2_ref,
                   w3_ref,
                   wp1_ref, gp1_ref, bp1_ref,
                   wp2_ref, bp2_ref,
                   p_ref, z_ref):
    x = x_ref[...]                     # [B, prev_dim] f32 (view selected by the grid)
    B = x.shape[0]
    ones_row = jnp.ones((1, B), jnp.float32)   # hoisted: reused by all 4 BNs
    inv_b = 1.0 / B

    def bn(h, gamma=None, beta=None):
        # One-pass batch statistics; batch-axis sums on the MXU (idle in the
        # weight-bound regime) instead of a cross-sublane XLU reduce.
        s1 = jnp.dot(ones_row, h, preferred_element_type=jnp.float32)        # [1, N]
        s2 = jnp.dot(ones_row, h * h, preferred_element_type=jnp.float32)    # [1, N]
        mu = s1 * inv_b
        var = jnp.maximum(s2 * inv_b - mu * mu, 0.0)   # clamp cancellation residue
        hn = (h - mu) * jax.lax.rsqrt(var + EPS)
        if gamma is not None:
            hn = hn * gamma + beta
        return hn

    def lin(h, w_ref):
        # bf16 x bf16 feeds the MXU at full rate; accumulate in f32.
        return jnp.dot(h.astype(jnp.bfloat16), w_ref[...],
                       preferred_element_type=jnp.float32)

    # ---- projector: Lin -> BN -> ReLU -> Lin -> BN -> ReLU -> Lin -> BN(affine=False)
    h = jnp.maximum(bn(lin(x, w1_ref), g1_ref[...], b1_ref[...]), 0.0)
    h = jnp.maximum(bn(lin(h, w2_ref), g2_ref[...], b2_ref[...]), 0.0)
    z = bn(lin(h, w3_ref))                       # affine=False

    # ---- predictor: Lin -> BN -> ReLU -> Lin(+bias)
    q = jnp.maximum(bn(lin(z, wp1_ref), gp1_ref[...], bp1_ref[...]), 0.0)
    p = lin(q, wp2_ref) + bp2_ref[...]

    p_ref[...] = p.astype(p_ref.dtype)
    z_ref[...] = z.astype(z_ref.dtype)


def _resident_spec(arr):
    # Full-array block whose block index never changes across the view grid axis,
    # so Pallas keeps it VMEM-resident instead of re-DMAing it per view.
    return pl.BlockSpec(arr.shape, lambda v: (0,) * arr.ndim)


def simsiam_forward(x1, x2, params):
    """x1, x2: [B, prev_dim] float32 encoder features. Returns (p1, p2, z1, z2)."""
    B, prev_dim = x1.shape
    dim = params["w3"].shape[1]

    x = jnp.stack([x1, x2], axis=0)              # [2, B, prev_dim]
    bf16 = lambda k: params[k].astype(jnp.bfloat16)   # cast MXU weights at the boundary

    inputs = (x,
              bf16("w1"), params["g1"], params["b1"],
              bf16("w2"), params["g2"], params["b2"],
              bf16("w3"),
              bf16("wp1"), params["gp1"], params["bp1"],
              bf16("wp2"), params["bp2"])

    in_specs = [pl.BlockSpec((None, B, prev_dim), lambda v: (v, 0, 0))]
    in_specs += [_resident_spec(a) for a in inputs[1:]]
    out_spec = pl.BlockSpec((None, B, dim), lambda v: (v, 0, 0))

    p, z = pl.pallas_call(
        simsiam_kernel,
        out_shape=(jax.ShapeDtypeStruct((2, B, dim), jnp.float32),
                   jax.ShapeDtypeStruct((2, B, dim), jnp.float32)),
        grid=(2,),                               # view axis
        in_specs=in_specs,
        out_specs=(out_spec, out_spec),
        compiler_params=pltpu.CompilerParams(
            dimension_semantics=("parallel",),   # views -> both TCs on v7x
            vmem_limit_bytes=48 * 1024 * 1024),  # above 16/32 MiB defaults, < v7x physical
    )(*inputs)

    p1, p2 = p[0], p[1]
    z1, z2 = z[0], z[1]
    # z1/z2 are "detached" in torch.
    return p1, p2, jax.lax.stop_gradient(z1), jax.lax.stop_gradient(z2)


def init_params(key, prev_dim, dim, pred_dim):
    """Deterministic synthetic init (matches shapes of the torch module). Weights stored
    [in_features, out_features] so the kernel computes x @ W (== torch x @ W.T)."""
    ks = jax.random.split(key, 8)

    def lin(k, fan_in, fan_out):
        bound = 1.0 / (fan_in ** 0.5)
        return jax.random.uniform(k, (fan_in, fan_out), jnp.float32, -bound, bound)

    return {
        # projector
        "w1": lin(ks[0], prev_dim, prev_dim),
        "g1": jnp.ones((1, prev_dim), jnp.float32),
        "b1": jnp.zeros((1, prev_dim), jnp.float32),
        "w2": lin(ks[1], prev_dim, prev_dim),
        "g2": jnp.ones((1, prev_dim), jnp.float32),
        "b2": jnp.zeros((1, prev_dim), jnp.float32),
        "w3": lin(ks[2], prev_dim, dim),
        # predictor
        "wp1": lin(ks[3], dim, pred_dim),
        "gp1": jnp.ones((1, pred_dim), jnp.float32),
        "bp1": jnp.zeros((1, pred_dim), jnp.float32),
        "wp2": lin(ks[4], pred_dim, dim),
        "bp2": jax.random.uniform(ks[5], (1, dim), jnp.float32,
                                  -1.0 / (pred_dim ** 0.5), 1.0 / (pred_dim ** 0.5)),
    }


def ref_forward(x1, x2, pr):
    """Plain-JAX reference with the same bf16 matmul / f32 BN numerics."""
    def bn(h, g=None, b=None):
        mu = h.mean(0, keepdims=True)
        var = ((h - mu) ** 2).mean(0, keepdims=True)
        hn = (h - mu) / jnp.sqrt(var + EPS)
        return hn * g + b if g is not None else hn

    def lin(h, w):
        return jnp.dot(h.astype(jnp.bfloat16), w.astype(jnp.bfloat16),
                       preferred_element_type=jnp.float32)

    def branch(x):
        h = jnp.maximum(bn(lin(x, pr["w1"]), pr["g1"], pr["b1"]), 0.0)
        h = jnp.maximum(bn(lin(h, pr["w2"]), pr["g2"], pr["b2"]), 0.0)
        z = bn(lin(h, pr["w3"]))
        q = jnp.maximum(bn(lin(z, pr["wp1"]), pr["gp1"], pr["bp1"]), 0.0)
        return lin(q, pr["wp2"]) + pr["bp2"], z

    p1, z1 = branch(x1)
    p2, z2 = branch(x2)
    return p1, p2, z1, z2


if __name__ == "__main__":
    # Small but MXU/lane-friendly shapes (all multiples of 128 / dense 8x128 vregs).
    # Stand-ins for the real SimSiam dims prev_dim=2048, dim=2048, pred_dim=512.
    B, PREV_DIM, DIM, PRED_DIM = 128, 256, 256, 128

    key = jax.random.PRNGKey(0)
    k_x1, k_x2, k_p = jax.random.split(key, 3)
    x1 = jax.random.normal(k_x1, (B, PREV_DIM), jnp.float32)
    x2 = jax.random.normal(k_x2, (B, PREV_DIM), jnp.float32)
    params = init_params(k_p, PREV_DIM, DIM, PRED_DIM)

    p1, p2, z1, z2 = jax.jit(simsiam_forward)(x1, x2, params)
    jax.block_until_ready((p1, p2, z1, z2))

    assert p1.shape == (B, DIM) and p2.shape == (B, DIM)
    assert z1.shape == (B, DIM) and z2.shape == (B, DIM)

    rp1, rp2, rz1, rz2 = jax.jit(ref_forward)(x1, x2, params)
    for got, ref, name in ((p1, rp1, "p1"), (p2, rp2, "p2"),
                           (z1, rz1, "z1"), (z2, rz2, "z2")):
        err = float(jnp.max(jnp.abs(got - ref)))
        assert jnp.allclose(got, ref, atol=1e-2, rtol=1e-2), (name, err)

    print("KERNEL_OK")
</pallas_src>

<mosaic_0001>
module attributes {stable_mosaic.version = 11 : i64} {
  func.func @simsiam_kernel(%arg0: i32, %arg1: memref<1x128x256xf32, #tpu.memory_space<vmem>>, %arg2: memref<256x256xbf16, #tpu.memory_space<vmem>>, %arg3: memref<1x256xf32, #tpu.memory_space<vmem>>, %arg4: memref<1x256xf32, #tpu.memory_space<vmem>>, %arg5: memref<256x256xbf16, #tpu.memory_space<vmem>>, %arg6: memref<1x256xf32, #tpu.memory_space<vmem>>, %arg7: memref<1x256xf32, #tpu.memory_space<vmem>>, %arg8: memref<256x256xbf16, #tpu.memory_space<vmem>>, %arg9: memref<256x128xbf16, #tpu.memory_space<vmem>>, %arg10: memref<1x128xf32, #tpu.memory_space<vmem>>, %arg11: memref<1x128xf32, #tpu.memory_space<vmem>>, %arg12: memref<128x256xbf16, #tpu.memory_space<vmem>>, %arg13: memref<1x256xf32, #tpu.memory_space<vmem>>, %arg14: memref<1x128x256xf32, #tpu.memory_space<vmem>>, %arg15: memref<1x128x256xf32, #tpu.memory_space<vmem>>) attributes {dimension_semantics = [#tpu.dimension_semantics<parallel>], iteration_bounds = array<i64: 2>, scalar_prefetch = 0 : i64, scratch_operands = 0 : i64, tpu.core_type = #tpu.core_type<tc>, window_params = [{transform_indices = @transform_0, window_bounds = array<i64: 1, 128, 256>}, {pipeline_mode = #tpu.pipeline_mode<synchronous>, transform_indices = @transform_1, window_bounds = array<i64: 256, 256>}, {pipeline_mode = #tpu.pipeline_mode<synchronous>, transform_indices = @transform_2, window_bounds = array<i64: 1, 256>}, {pipeline_mode = #tpu.pipeline_mode<synchronous>, transform_indices = @transform_3, window_bounds = array<i64: 1, 256>}, {pipeline_mode = #tpu.pipeline_mode<synchronous>, transform_indices = @transform_4, window_bounds = array<i64: 256, 256>}, {pipeline_mode = #tpu.pipeline_mode<synchronous>, transform_indices = @transform_5, window_bounds = array<i64: 1, 256>}, {pipeline_mode = #tpu.pipeline_mode<synchronous>, transform_indices = @transform_6, window_bounds = array<i64: 1, 256>}, {pipeline_mode = #tpu.pipeline_mode<synchronous>, transform_indices = @transform_7, window_bounds = array<i64: 256, 256>}, {pipeline_mode = #tpu.pipeline_mode<synchronous>, transform_indices = @transform_8, window_bounds = array<i64: 256, 128>}, {pipeline_mode = #tpu.pipeline_mode<synchronous>, transform_indices = @transform_9, window_bounds = array<i64: 1, 128>}, {pipeline_mode = #tpu.pipeline_mode<synchronous>, transform_indices = @transform_10, window_bounds = array<i64: 1, 128>}, {pipeline_mode = #tpu.pipeline_mode<synchronous>, transform_indices = @transform_11, window_bounds = array<i64: 128, 256>}, {pipeline_mode = #tpu.pipeline_mode<synchronous>, transform_indices = @transform_12, window_bounds = array<i64: 1, 256>}, {transform_indices = @transform_13, window_bounds = array<i64: 1, 128, 256>}, {transform_indices = @transform_14, window_bounds = array<i64: 1, 128, 256>}]} {
    %c0 = arith.constant 0 : index
    %c0_0 = arith.constant 0 : index
    %c0_1 = arith.constant 0 : index
    %0 = vector.load %arg1[%c0, %c0_0, %c0_1] : memref<1x128x256xf32, #tpu.memory_space<vmem>>, vector<1x128x256xf32>
    %1 = vector.shape_cast %0 : vector<1x128x256xf32> to vector<128x256xf32>
    %cst = arith.constant 1.000000e+00 : f32
    %2 = vector.broadcast %cst : f32 to vector<1x128xf32>
    %3 = arith.truncf %1 : vector<128x256xf32> to vector<128x256xbf16>
    %c0_2 = arith.constant 0 : index
    %c0_3 = arith.constant 0 : index
    %4 = vector.load %arg2[%c0_2, %c0_3] : memref<256x256xbf16, #tpu.memory_space<vmem>>, vector<256x256xbf16>
    %cst_4 = arith.constant dense<0.000000e+00> : vector<128x256xf32>
    %5 = tpu.matmul %3, %4, %cst_4 {dimension_numbers = #tpu.dot_dimension_numbers<[1], [0], [0], [1], [0, 0, 1, 1], [], []>} : vector<128x256xbf16>, vector<256x256xbf16>, vector<128x256xf32> -> vector<128x256xf32>
    %c0_5 = arith.constant 0 : index
    %c0_6 = arith.constant 0 : index
    %6 = vector.load %arg3[%c0_5, %c0_6] : memref<1x256xf32, #tpu.memory_space<vmem>>, vector<1x256xf32>
    %c0_7 = arith.constant 0 : index
    %c0_8 = arith.constant 0 : index
    %7 = vector.load %arg4[%c0_7, %c0_8] : memref<1x256xf32, #tpu.memory_space<vmem>>, vector<1x256xf32>
    %cst_9 = arith.constant dense<0.000000e+00> : vector<1x256xf32>
    %8 = tpu.matmul %2, %5, %cst_9 {dimension_numbers = #tpu.dot_dimension_numbers<[1], [0], [0], [1], [0, 0, 1, 1], [], []>} : vector<1x128xf32>, vector<128x256xf32>, vector<1x256xf32> -> vector<1x256xf32>
    %9 = arith.mulf %5, %5 : vector<128x256xf32>
    %cst_10 = arith.constant dense<0.000000e+00> : vector<1x256xf32>
    %10 = tpu.matmul %2, %9, %cst_10 {dimension_numbers = #tpu.dot_dimension_numbers<[1], [0], [0], [1], [0, 0, 1, 1], [], []>} : vector<1x128xf32>, vector<128x256xf32>, vector<1x256xf32> -> vector<1x256xf32>
    %cst_11 = arith.constant 7.812500e-03 : f32
    %11 = vector.broadcast %cst_11 : f32 to vector<1x256xf32>
    %12 = arith.mulf %8, %11 : vector<1x256xf32>
    %cst_12 = arith.constant 7.812500e-03 : f32
    %13 = vector.broadcast %cst_12 : f32 to vector<1x256xf32>
    %14 = arith.mulf %10, %13 : vector<1x256xf32>
    %15 = arith.mulf %12, %12 : vector<1x256xf32>
    %16 = arith.subf %14, %15 : vector<1x256xf32>
    %cst_13 = arith.constant 0.000000e+00 : f32
    %17 = vector.broadcast %cst_13 : f32 to vector<1x256xf32>
    %18 = arith.maximumf %16, %17 : vector<1x256xf32>
    %19 = vector.broadcast %12 : vector<1x256xf32> to vector<128x256xf32>
    %20 = arith.subf %5, %19 : vector<128x256xf32>
    %cst_14 = arith.constant 9.99999974E-6 : f32
    %21 = vector.broadcast %cst_14 : f32 to vector<1x256xf32>
    %22 = arith.addf %18, %21 : vector<1x256xf32>
    %23 = math.rsqrt %22 : vector<1x256xf32>
    %24 = vector.broadcast %23 : vector<1x256xf32> to vector<128x256xf32>
    %25 = arith.mulf %20, %24 : vector<128x256xf32>
    %26 = vector.broadcast %6 : vector<1x256xf32> to vector<128x256xf32>
    %27 = arith.mulf %25, %26 : vector<128x256xf32>
    %28 = vector.broadcast %7 : vector<1x256xf32> to vector<128x256xf32>
    %29 = arith.addf %27, %28 : vector<128x256xf32>
    %cst_15 = arith.constant 0.000000e+00 : f32
    %30 = vector.broadcast %cst_15 : f32 to vector<128x256xf32>
    %31 = arith.maximumf %29, %30 : vector<128x256xf32>
    %32 = arith.truncf %31 : vector<128x256xf32> to vector<128x256xbf16>
    %c0_16 = arith.constant 0 : index
    %c0_17 = arith.constant 0 : index
    %33 = vector.load %arg5[%c0_16, %c0_17] : memref<256x256xbf16, #tpu.memory_space<vmem>>, vector<256x256xbf16>
    %cst_18 = arith.constant dense<0.000000e+00> : vector<128x256xf32>
    %34 = tpu.matmul %32, %33, %cst_18 {dimension_numbers = #tpu.dot_dimension_numbers<[1], [0], [0], [1], [0, 0, 1, 1], [], []>} : vector<128x256xbf16>, vector<256x256xbf16>, vector<128x256xf32> -> vector<128x256xf32>
    %c0_19 = arith.constant 0 : index
    %c0_20 = arith.constant 0 : index
    %35 = vector.load %arg6[%c0_19, %c0_20] : memref<1x256xf32, #tpu.memory_space<vmem>>, vector<1x256xf32>
    %c0_21 = arith.constant 0 : index
    %c0_22 = arith.constant 0 : index
    %36 = vector.load %arg7[%c0_21, %c0_22] : memref<1x256xf32, #tpu.memory_space<vmem>>, vector<1x256xf32>
    %cst_23 = arith.constant dense<0.000000e+00> : vector<1x256xf32>
    %37 = tpu.matmul %2, %34, %cst_23 {dimension_numbers = #tpu.dot_dimension_numbers<[1], [0], [0], [1], [0, 0, 1, 1], [], []>} : vector<1x128xf32>, vector<128x256xf32>, vector<1x256xf32> -> vector<1x256xf32>
    %38 = arith.mulf %34, %34 : vector<128x256xf32>
    %cst_24 = arith.constant dense<0.000000e+00> : vector<1x256xf32>
    %39 = tpu.matmul %2, %38, %cst_24 {dimension_numbers = #tpu.dot_dimension_numbers<[1], [0], [0], [1], [0, 0, 1, 1], [], []>} : vector<1x128xf32>, vector<128x256xf32>, vector<1x256xf32> -> vector<1x256xf32>
    %cst_25 = arith.constant 7.812500e-03 : f32
    %40 = vector.broadcast %cst_25 : f32 to vector<1x256xf32>
    %41 = arith.mulf %37, %40 : vector<1x256xf32>
    %cst_26 = arith.constant 7.812500e-03 : f32
    %42 = vector.broadcast %cst_26 : f32 to vector<1x256xf32>
    %43 = arith.mulf %39, %42 : vector<1x256xf32>
    %44 = arith.mulf %41, %41 : vector<1x256xf32>
    %45 = arith.subf %43, %44 : vector<1x256xf32>
    %cst_27 = arith.constant 0.000000e+00 : f32
    %46 = vector.broadcast %cst_27 : f32 to vector<1x256xf32>
    %47 = arith.maximumf %45, %46 : vector<1x256xf32>
    %48 = vector.broadcast %41 : vector<1x256xf32> to vector<128x256xf32>
    %49 = arith.subf %34, %48 : vector<128x256xf32>
    %cst_28 = arith.constant 9.99999974E-6 : f32
    %50 = vector.broadcast %cst_28 : f32 to vector<1x256xf32>
    %51 = arith.addf %47, %50 : vector<1x256xf32>
    %52 = math.rsqrt %51 : vector<1x256xf32>
    %53 = vector.broadcast %52 : vector<1x256xf32> to vector<128x256xf32>
    %54 = arith.mulf %49, %53 : vector<128x256xf32>
    %55 = vector.broadcast %35 : vector<1x256xf32> to vector<128x256xf32>
    %56 = arith.mulf %54, %55 : vector<128x256xf32>
    %57 = vector.broadcast %36 : vector<1x256xf32> to vector<128x256xf32>
    %58 = arith.addf %56, %57 : vector<128x256xf32>
    %cst_29 = arith.constant 0.000000e+00 : f32
    %59 = vector.broadcast %cst_29 : f32 to vector<128x256xf32>
    %60 = arith.maximumf %58, %59 : vector<128x256xf32>
    %61 = arith.truncf %60 : vector<128x256xf32> to vector<128x256xbf16>
    %c0_30 = arith.constant 0 : index
    %c0_31 = arith.constant 0 : index
    %62 = vector.load %arg8[%c0_30, %c0_31] : memref<256x256xbf16, #tpu.memory_space<vmem>>, vector<256x256xbf16>
    %cst_32 = arith.constant dense<0.000000e+00> : vector<128x256xf32>
    %63 = tpu.matmul %61, %62, %cst_32 {dimension_numbers = #tpu.dot_dimension_numbers<[1], [0], [0], [1], [0, 0, 1, 1], [], []>} : vector<128x256xbf16>, vector<256x256xbf16>, vector<128x256xf32> -> vector<128x256xf32>
    %cst_33 = arith.constant dense<0.000000e+00> : vector<1x256xf32>
    %64 = tpu.matmul %2, %63, %cst_33 {dimension_numbers = #tpu.dot_dimension_numbers<[1], [0], [0], [1], [0, 0, 1, 1], [], []>} : vector<1x128xf32>, vector<128x256xf32>, vector<1x256xf32> -> vector<1x256xf32>
    %65 = arith.mulf %63, %63 : vector<128x256xf32>
    %cst_34 = arith.constant dense<0.000000e+00> : vector<1x256xf32>
    %66 = tpu.matmul %2, %65, %cst_34 {dimension_numbers = #tpu.dot_dimension_numbers<[1], [0], [0], [1], [0, 0, 1, 1], [], []>} : vector<1x128xf32>, vector<128x256xf32>, vector<1x256xf32> -> vector<1x256xf32>
    %cst_35 = arith.constant 7.812500e-03 : f32
    %67 = vector.broadcast %cst_35 : f32 to vector<1x256xf32>
    %68 = arith.mulf %64, %67 : vector<1x256xf32>
    %cst_36 = arith.constant 7.812500e-03 : f32
    %69 = vector.broadcast %cst_36 : f32 to vector<1x256xf32>
    %70 = arith.mulf %66, %69 : vector<1x256xf32>
    %71 = arith.mulf %68, %68 : vector<1x256xf32>
    %72 = arith.subf %70, %71 : vector<1x256xf32>
    %cst_37 = arith.constant 0.000000e+00 : f32
    %73 = vector.broadcast %cst_37 : f32 to vector<1x256xf32>
    %74 = arith.maximumf %72, %73 : vector<1x256xf32>
    %75 = vector.broadcast %68 : vector<1x256xf32> to vector<128x256xf32>
    %76 = arith.subf %63, %75 : vector<128x256xf32>
    %cst_38 = arith.constant 9.99999974E-6 : f32
    %77 = vector.broadcast %cst_38 : f32 to vector<1x256xf32>
    %78 = arith.addf %74, %77 : vector<1x256xf32>
    %79 = math.rsqrt %78 : vector<1x256xf32>
    %80 = vector.broadcast %79 : vector<1x256xf32> to vector<128x256xf32>
    %81 = arith.mulf %76, %80 : vector<128x256xf32>
    %82 = arith.truncf %81 : vector<128x256xf32> to vector<128x256xbf16>
    %c0_39 = arith.constant 0 : index
    %c0_40 = arith.constant 0 : index
    %83 = vector.load %arg9[%c0_39, %c0_40] : memref<256x128xbf16, #tpu.memory_space<vmem>>, vector<256x128xbf16>
    %cst_41 = arith.constant dense<0.000000e+00> : vector<128x128xf32>
    %84 = tpu.matmul %82, %83, %cst_41 {dimension_numbers = #tpu.dot_dimension_numbers<[1], [0], [0], [1], [0, 0, 1, 1], [], []>} : vector<128x256xbf16>, vector<256x128xbf16>, vector<128x128xf32> -> vector<128x128xf32>
    %c0_42 = arith.constant 0 : index
    %c0_43 = arith.constant 0 : index
    %85 = vector.load %arg10[%c0_42, %c0_43] : memref<1x128xf32, #tpu.memory_space<vmem>>, vector<1x128xf32>
    %c0_44 = arith.constant 0 : index
    %c0_45 = arith.constant 0 : index
    %86 = vector.load %arg11[%c0_44, %c0_45] : memref<1x128xf32, #tpu.memory_space<vmem>>, vector<1x128xf32>
    %cst_46 = arith.constant dense<0.000000e+00> : vector<1x128xf32>
    %87 = tpu.matmul %2, %84, %cst_46 {dimension_numbers = #tpu.dot_dimension_numbers<[1], [0], [0], [1], [0, 0, 1, 1], [], []>} : vector<1x128xf32>, vector<128x128xf32>, vector<1x128xf32> -> vector<1x128xf32>
    %88 = arith.mulf %84, %84 : vector<128x128xf32>
    %cst_47 = arith.constant dense<0.000000e+00> : vector<1x128xf32>
    %89 = tpu.matmul %2, %88, %cst_47 {dimension_numbers = #tpu.dot_dimension_numbers<[1], [0], [0], [1], [0, 0, 1, 1], [], []>} : vector<1x128xf32>, vector<128x128xf32>, vector<1x128xf32> -> vector<1x128xf32>
    %cst_48 = arith.constant 7.812500e-03 : f32
    %90 = vector.broadcast %cst_48 : f32 to vector<1x128xf32>
    %91 = arith.mulf %87, %90 : vector<1x128xf32>
    %cst_49 = arith.constant 7.812500e-03 : f32
    %92 = vector.broadcast %cst_49 : f32 to vector<1x128xf32>
    %93 = arith.mulf %89, %92 : vector<1x128xf32>
    %94 = arith.mulf %91, %91 : vector<1x128xf32>
    %95 = arith.subf %93, %94 : vector<1x128xf32>
    %cst_50 = arith.constant 0.000000e+00 : f32
    %96 = vector.broadcast %cst_50 : f32 to vector<1x128xf32>
    %97 = arith.maximumf %95, %96 : vector<1x128xf32>
    %98 = vector.broadcast %91 : vector<1x128xf32> to vector<128x128xf32>
    %99 = arith.subf %84, %98 : vector<128x128xf32>
    %cst_51 = arith.constant 9.99999974E-6 : f32
    %100 = vector.broadcast %cst_51 : f32 to vector<1x128xf32>
    %101 = arith.addf %97, %100 : vector<1x128xf32>
    %102 = math.rsqrt %101 : vector<1x128xf32>
    %103 = vector.broadcast %102 : vector<1x128xf32> to vector<128x128xf32>
    %104 = arith.mulf %99, %103 : vector<128x128xf32>
    %105 = vector.broadcast %85 : vector<1x128xf32> to vector<128x128xf32>
    %106 = arith.mulf %104, %105 : vector<128x128xf32>
    %107 = vector.broadcast %86 : vector<1x128xf32> to vector<128x128xf32>
    %108 = arith.addf %106, %107 : vector<128x128xf32>
    %cst_52 = arith.constant 0.000000e+00 : f32
    %109 = vector.broadcast %cst_52 : f32 to vector<128x128xf32>
    %110 = arith.maximumf %108, %109 : vector<128x128xf32>
    %111 = arith.truncf %110 : vector<128x128xf32> to vector<128x128xbf16>
    %c0_53 = arith.constant 0 : index
    %c0_54 = arith.constant 0 : index
    %112 = vector.load %arg12[%c0_53, %c0_54] : memref<128x256xbf16, #tpu.memory_space<vmem>>, vector<128x256xbf16>
    %cst_55 = arith.constant dense<0.000000e+00> : vector<128x256xf32>
    %113 = tpu.matmul %111, %112, %cst_55 {dimension_numbers = #tpu.dot_dimension_numbers<[1], [0], [0], [1], [0, 0, 1, 1], [], []>} : vector<128x128xbf16>, vector<128x256xbf16>, vector<128x256xf32> -> vector<128x256xf32>
    %c0_56 = arith.constant 0 : index
    %c0_57 = arith.constant 0 : index
    %114 = vector.load %arg13[%c0_56, %c0_57] : memref<1x256xf32, #tpu.memory_space<vmem>>, vector<1x256xf32>
    %115 = vector.broadcast %114 : vector<1x256xf32> to vector<128x256xf32>
    %116 = arith.addf %113, %115 : vector<128x256xf32>
    %c0_58 = arith.constant 0 : index
    %c0_59 = arith.constant 0 : index
    %c0_60 = arith.constant 0 : index
    %117 = vector.load %arg14[%c0_58, %c0_59, %c0_60] : memref<1x128x256xf32, #tpu.memory_space<vmem>>, vector<1x128x256xf32>
    %118 = vector.shape_cast %117 : vector<1x128x256xf32> to vector<128x256xf32>
    %119 = vector.shape_cast %116 : vector<128x256xf32> to vector<1x128x256xf32>
    tpu.vector_store %arg14[%c0_58, %c0_59, %c0_60], %119 {strides = array<i32>} : memref<1x128x256xf32, #tpu.memory_space<vmem>>, vector<1x128x256xf32>,
    %c0_61 = arith.constant 0 : index
    %c0_62 = arith.constant 0 : index
    %c0_63 = arith.constant 0 : index
    %120 = vector.load %arg15[%c0_61, %c0_62, %c0_63] : memref<1x128x256xf32, #tpu.memory_space<vmem>>, vector<1x128x256xf32>
    %121 = vector.shape_cast %120 : vector<1x128x256xf32> to vector<128x256xf32>
    %122 = vector.shape_cast %81 : vector<128x256xf32> to vector<1x128x256xf32>
    tpu.vector_store %arg15[%c0_61, %c0_62, %c0_63], %122 {strides = array<i32>} : memref<1x128x256xf32, #tpu.memory_space<vmem>>, vector<1x128x256xf32>,
    return
  }
  func.func @transform_0(%arg0: i32) -> (i32, i32, i32) {
    %c0_i32 = arith.constant 0 : i32
    %c0_i32_0 = arith.constant 0 : i32
    %c0_i32_1 = arith.constant 0 : i32
    return %arg0, %c0_i32, %c0_i32_0 : i32, i32, i32
  }
  func.func @transform_1(%arg0: i32) -> (i32, i32) {
    %c0_i32 = arith.constant 0 : i32
    %c0_i32_0 = arith.constant 0 : i32
    %c0_i32_1 = arith.constant 0 : i32
    return %c0_i32, %c0_i32_0 : i32, i32
  }
  func.func @transform_2(%arg0: i32) -> (i32, i32) {
    %c0_i32 = arith.constant 0 : i32
    %c0_i32_0 = arith.constant 0 : i32
    %c0_i32_1 = arith.constant 0 : i32
    return %c0_i32, %c0_i32_0 : i32, i32
  }
  func.func @transform_3(%arg0: i32) -> (i32, i32) {
    %c0_i32 = arith.constant 0 : i32
    %c0_i32_0 = arith.constant 0 : i32
    %c0_i32_1 = arith.constant 0 : i32
    return %c0_i32, %c0_i32_0 : i32, i32
  }
  func.func @transform_4(%arg0: i32) -> (i32, i32) {
    %c0_i32 = arith.constant 0 : i32
    %c0_i32_0 = arith.constant 0 : i32
    %c0_i32_1 = arith.constant 0 : i32
    return %c0_i32, %c0_i32_0 : i32, i32
  }
  func.func @transform_5(%arg0: i32) -> (i32, i32) {
    %c0_i32 = arith.constant 0 : i32
    %c0_i32_0 = arith.constant 0 : i32
    %c0_i32_1 = arith.constant 0 : i32
    return %c0_i32, %c0_i32_0 : i32, i32
  }
  func.func @transform_6(%arg0: i32) -> (i32, i32) {
    %c0_i32 = arith.constant 0 : i32
    %c0_i32_0 = arith.constant 0 : i32
    %c0_i32_1 = arith.constant 0 : i32
    return %c0_i32, %c0_i32_0 : i32, i32
  }
  func.func @transform_7(%arg0: i32) -> (i32, i32) {
    %c0_i32 = arith.constant 0 : i32
    %c0_i32_0 = arith.constant 0 : i32
    %c0_i32_1 = arith.constant 0 : i32
    return %c0_i32, %c0_i32_0 : i32, i32
  }
  func.func @transform_8(%arg0: i32) -> (i32, i32) {
    %c0_i32 = arith.constant 0 : i32
    %c0_i32_0 = arith.constant 0 : i32
    %c0_i32_1 = arith.constant 0 : i32
    return %c0_i32, %c0_i32_0 : i32, i32
  }
  func.func @transform_9(%arg0: i32) -> (i32, i32) {
    %c0_i32 = arith.constant 0 : i32
    %c0_i32_0 = arith.constant 0 : i32
    %c0_i32_1 = arith.constant 0 : i32
    return %c0_i32, %c0_i32_0 : i32, i32
  }
  func.func @transform_10(%arg0: i32) -> (i32, i32) {
    %c0_i32 = arith.constant 0 : i32
    %c0_i32_0 = arith.constant 0 : i32
    %c0_i32_1 = arith.constant 0 : i32
    return %c0_i32, %c0_i32_0 : i32, i32
  }
  func.func @transform_11(%arg0: i32) -> (i32, i32) {
    %c0_i32 = arith.constant 0 : i32
    %c0_i32_0 = arith.constant 0 : i32
    %c0_i32_1 = arith.constant 0 : i32
    return %c0_i32, %c0_i32_0 : i32, i32
  }
  func.func @transform_12(%arg0: i32) -> (i32, i32) {
    %c0_i32 = arith.constant 0 : i32
    %c0_i32_0 = arith.constant 0 : i32
    %c0_i32_1 = arith.constant 0 : i32
    return %c0_i32, %c0_i32_0 : i32, i32
  }
  func.func @transform_13(%arg0: i32) -> (i32, i32, i32) {
    %c0_i32 = arith.constant 0 : i32
    %c0_i32_0 = arith.constant 0 : i32
    %c0_i32_1 = arith.constant 0 : i32
    return %arg0, %c0_i32, %c0_i32_0 : i32, i32, i32
  }
  func.func @transform_14(%arg0: i32) -> (i32, i32, i32) {
    %c0_i32 = arith.constant 0 : i32
    %c0_i32_0 = arith.constant 0 : i32
    %c0_i32_1 = arith.constant 0 : i32
    return %arg0, %c0_i32, %c0_i32_0 : i32, i32, i32
  }
}

</mosaic_0001>

<llo_original>
// kernel: simsiam_forward.1
$region0: #{simsiam_forward.1}
  #allocation0 [shape = 'u32[]', space=smem, size = 0x4, offset = 0x4, fixed_abs, tag = 'smem constant byte address 0x4 - core index']
  #allocation1 [shape = 'u32[72,128]{1,0:T(1,128)}', space=vmem, size = 0x9000, scoped, tag = 'internal scratch']
  %s0 = inlined_call_operand.vmem [shape: f32[2,128,256], index: 0, kind: input, shape index: {}]
  %s1 = inlined_call_operand.vmem [shape: bf16[256,256], index: 1, kind: input, shape index: {}]
  %s2 = inlined_call_operand.vmem [shape: f32[1,256], index: 2, kind: input, shape index: {}]
  %s3 = inlined_call_operand.vmem [shape: f32[1,256], index: 3, kind: input, shape index: {}]
  %s4 = inlined_call_operand.vmem [shape: bf16[256,256], index: 4, kind: input, shape index: {}]
  %s5 = inlined_call_operand.vmem [shape: f32[1,256], index: 5, kind: input, shape index: {}]
  %s6 = inlined_call_operand.vmem [shape: f32[1,256], index: 6, kind: input, shape index: {}]
  %s7 = inlined_call_operand.vmem [shape: bf16[256,256], index: 7, kind: input, shape index: {}]
  %s8 = inlined_call_operand.vmem [shape: bf16[256,128], index: 8, kind: input, shape index: {}]
  %s9 = inlined_call_operand.vmem [shape: f32[1,128], index: 9, kind: input, shape index: {}]
  %s10 = inlined_call_operand.vmem [shape: f32[1,128], index: 10, kind: input, shape index: {}]
  %s11 = inlined_call_operand.vmem [shape: bf16[128,256], index: 11, kind: input, shape index: {}]
  %s12 = inlined_call_operand.vmem [shape: f32[1,256], index: 12, kind: input, shape index: {}]
  %s13 = inlined_call_operand.vmem [shape: f32[2,128,256], index: 13, kind: output, shape index: {0}]
  %s14 = inlined_call_operand.vmem [shape: f32[2,128,256], index: 14, kind: output, shape index: {1}]
  %15 = xla_tuple %s13, %s14
  %s16 = sld [smem:[#allocation0]]
  $region93: #{simsiam_forward.1} parent=0
    _
  %s18 = ssub.s32 1, %s16
  %s19 = scalar_select 0, %s18, %s16
  loop: start=0, step=1, limit=4
  $region2: #{simsiam_forward.1} parent=0 // loop_pre_header
    _
  $region3: #{simsiam_forward.1} parent=0 // loop_header
    %s21 = sphi 0, %s25
    %p22 = scmp.ge.s32.totalorder %s21, 4
    %s31 = sphi 0, %s33
    %s34 = sphi 0, %s31
    %s35 = sphi 0, %s34
    %s51 = sphi 0, %s35
    %s55 = sphi 0, %s55
    %s57 = sphi 0, %s55
    %s58 = sphi 0, %s57
    %s72 = sphi 0, %s58
    %s76 = sphi 0, %s76
    %s78 = sphi 0, %s76
    %s79 = sphi 0, %s78
    %s93 = sphi 0, %s79
    %s97 = sphi 0, %s97
    %s99 = sphi 0, %s97
    %s100 = sphi 0, %s99
    %s114 = sphi 0, %s100
    %s118 = sphi 0, %s118
    %s120 = sphi 0, %s118
    %s121 = sphi 0, %s120
    %s135 = sphi 0, %s121
    %s139 = sphi 0, %s139
    %s141 = sphi 0, %s139
    %s142 = sphi 0, %s141
    %s156 = sphi 0, %s142
    %s160 = sphi 0, %s160
    %s162 = sphi 0, %s160
    %s163 = sphi 0, %s162
    %s177 = sphi 0, %s163
    %s181 = sphi 0, %s181
    %s183 = sphi 0, %s181
    %s184 = sphi 0, %s183
    %s198 = sphi 0, %s184
    %s202 = sphi 0, %s202
    %s204 = sphi 0, %s202
    %s205 = sphi 0, %s204
    %s219 = sphi 0, %s205
    %s223 = sphi 0, %s223
    %s225 = sphi 0, %s223
    %s226 = sphi 0, %s225
    %s240 = sphi 0, %s226
    %s244 = sphi 0, %s244
    %s246 = sphi 0, %s244
    %s247 = sphi 0, %s246
    %s261 = sphi 0, %s247
    %s265 = sphi 0, %s265
    %s267 = sphi 0, %s265
    %s268 = sphi 0, %s267
    %s282 = sphi 0, %s268
    %s286 = sphi 0, %s286
    %s288 = sphi 0, %s286
    %s289 = sphi 0, %s288
    %s303 = sphi 0, %s289
    %s309 = sphi 0, %s311
    %s312 = sphi 0, %s309
    %s313 = sphi 0, %s312
    %s329 = sphi 0, %s313
    %s335 = sphi 0, %s337
    %s338 = sphi 0, %s335
    %s339 = sphi 0, %s338
    %s355 = sphi 0, %s339
  $region4: #{simsiam_forward.1} parent=0 // loop_header_branch
    %24 = sbr.rel (%p22) target = $region8
  $region5: #{simsiam_forward.1} parent=0 // loop_body
    %s26 = ssub.s32 %s21, 1
    %s27 = ssub.s32 %s21, 2
    %s28 = sadd.s32 %s21, 1
    %s29 = ssub.s32 %s21, %s28
    %p30 = scmp.eq.s32.totalorder %s29, 0
    %s32 = sadd.s32 %s31, 1
    %s33 = scalar_select %p30, %s31, %s32
    %p36 = pneg %p30
    %p37 = scmp.eq.s32.totalorder %s21, 1
    %p38 = por %p36, %p37
    %p39 = scmp.ne.s32.totalorder %s31, %s34
    %p40 = scmp.eq.s32.totalorder %s21, 0
    %p41 = por %p39, %p40
    %p42 = scmp.ne.s32.totalorder %s31, %s34
    %p43 = scmp.eq.s32.totalorder %s26, 1
    %p44 = por %p42, %p43
    %p45 = scmp.ne.s32.totalorder %s34, %s35
    %p46 = scmp.eq.s32.totalorder %s26, 0
    %p47 = por %p45, %p46
    %p48 = scmp.ne.s32.totalorder %s34, %s35
    %p49 = scmp.eq.s32.totalorder %s27, 1
    %p50 = por %p48, %p49
    %p52 = scmp.ne.s32.totalorder %s35, %s51
    %p53 = scmp.eq.s32.totalorder %s27, 0
    %p54 = por %p52, %p53
    %s56 = sadd.s32 %s55, 1
    %p59 = scmp.eq.s32.totalorder %s21, 1
    %p60 = scmp.ne.s32.totalorder %s55, %s57
    %p61 = scmp.eq.s32.totalorder %s21, 0
    %p62 = por %p60, %p61
    %p63 = scmp.ne.s32.totalorder %s55, %s57
    %p64 = scmp.eq.s32.totalorder %s26, 1
    %p65 = por %p63, %p64
    %p66 = scmp.ne.s32.totalorder %s57, %s58
    %p67 = scmp.eq.s32.totalorder %s26, 0
    %p68 = por %p66, %p67
    %p69 = scmp.ne.s32.totalorder %s57, %s58
    %p70 = scmp.eq.s32.totalorder %s27, 1
    %p71 = por %p69, %p70
    %p73 = scmp.ne.s32.totalorder %s58, %s72
    %p74 = scmp.eq.s32.totalorder %s27, 0
    %p75 = por %p73, %p74
    %s77 = sadd.s32 %s76, 1
    %p80 = scmp.eq.s32.totalorder %s21, 1
    %p81 = scmp.ne.s32.totalorder %s76, %s78
    %p82 = scmp.eq.s32.totalorder %s21, 0
    %p83 = por %p81, %p82
    %p84 = scmp.ne.s32.totalorder %s76, %s78
    %p85 = scmp.eq.s32.totalorder %s26, 1
    %p86 = por %p84, %p85
    %p87 = scmp.ne.s32.totalorder %s78, %s79
    %p88 = scmp.eq.s32.totalorder %s26, 0
    %p89 = por %p87, %p88
    %p90 = scmp.ne.s32.totalorder %s78, %s79
    %p91 = scmp.eq.s32.totalorder %s27, 1
    %p92 = por %p90, %p91
    %p94 = scmp.ne.s32.totalorder %s79, %s93
    %p95 = scmp.eq.s32.totalorder %s27, 0
    %p96 = por %p94, %p95
    %s98 = sadd.s32 %s97, 1
    %p101 = scmp.eq.s32.totalorder %s21, 1
    %p102 = scmp.ne.s32.totalorder %s97, %s99
    %p103 = scmp.eq.s32.totalorder %s21, 0
    %p104 = por %p102, %p103
    %p105 = scmp.ne.s32.totalorder %s97, %s99
    %p106 = scmp.eq.s32.totalorder %s26, 1
    %p107 = por %p105, %p106
    %p108 = scmp.ne.s32.totalorder %s99, %s100
    %p109 = scmp.eq.s32.totalorder %s26, 0
    %p110 = por %p108, %p109
    %p111 = scmp.ne.s32.totalorder %s99, %s100
    %p112 = scmp.eq.s32.totalorder %s27, 1
    %p113 = por %p111, %p112
    %p115 = scmp.ne.s32.totalorder %s100, %s114
    %p116 = scmp.eq.s32.totalorder %s27, 0
    %p117 = por %p115, %p116
    %s119 = sadd.s32 %s118, 1
    %p122 = scmp.eq.s32.totalorder %s21, 1
    %p123 = scmp.ne.s32.totalorder %s118, %s120
    %p124 = scmp.eq.s32.totalorder %s21, 0
    %p125 = por %p123, %p124
    %p126 = scmp.ne.s32.totalorder %s118, %s120
    %p127 = scmp.eq.s32.totalorder %s26, 1
    %p128 = por %p126, %p127
    %p129 = scmp.ne.s32.totalorder %s120, %s121
    %p130 = scmp.eq.s32.totalorder %s26, 0
    %p131 = por %p129, %p130
    %p132 = scmp.ne.s32.totalorder %s120, %s121
    %p133 = scmp.eq.s32.totalorder %s27, 1
    %p134 = por %p132, %p133
    %p136 = scmp.ne.s32.totalorder %s121, %s135
    %p137 = scmp.eq.s32.totalorder %s27, 0
    %p138 = por %p136, %p137
    %s140 = sadd.s32 %s139, 1
    %p143 = scmp.eq.s32.totalorder %s21, 1
    %p144 = scmp.ne.s32.totalorder %s139, %s141
    %p145 = scmp.eq.s32.totalorder %s21, 0
    %p146 = por %p144, %p145
    %p147 = scmp.ne.s32.totalorder %s139, %s141
    %p148 = scmp.eq.s32.totalorder %s26, 1
    %p149 = por %p147, %p148
    %p150 = scmp.ne.s32.totalorder %s141, %s142
    %p151 = scmp.eq.s32.totalorder %s26, 0
    %p152 = por %p150, %p151
    %p153 = scmp.ne.s32.totalorder %s141, %s142
    %p154 = scmp.eq.s32.totalorder %s27, 1
    %p155 = por %p153, %p154
    %p157 = scmp.ne.s32.totalorder %s142, %s156
    %p158 = scmp.eq.s32.totalorder %s27, 0
    %p159 = por %p157, %p158
    %s161 = sadd.s32 %s160, 1
    %p164 = scmp.eq.s32.totalorder %s21, 1
    %p165 = scmp.ne.s32.totalorder %s160, %s162
    %p166 = scmp.eq.s32.totalorder %s21, 0
    %p167 = por %p165, %p166
    %p168 = scmp.ne.s32.totalorder %s160, %s162
    %p169 = scmp.eq.s32.totalorder %s26, 1
    %p170 = por %p168, %p169
    %p171 = scmp.ne.s32.totalorder %s162, %s163
    %p172 = scmp.eq.s32.totalorder %s26, 0
    %p173 = por %p171, %p172
    %p174 = scmp.ne.s32.totalorder %s162, %s163
    %p175 = scmp.eq.s32.totalorder %s27, 1
    %p176 = por %p174, %p175
    %p178 = scmp.ne.s32.totalorder %s163, %s177
    %p179 = scmp.eq.s32.totalorder %s27, 0
    %p180 = por %p178, %p179
    %s182 = sadd.s32 %s181, 1
    %p185 = scmp.eq.s32.totalorder %s21, 1
    %p186 = scmp.ne.s32.totalorder %s181, %s183
    %p187 = scmp.eq.s32.totalorder %s21, 0
    %p188 = por %p186, %p187
    %p189 = scmp.ne.s32.totalorder %s181, %s183
    %p190 = scmp.eq.s32.totalorder %s26, 1
    %p191 = por %p189, %p190
    %p192 = scmp.ne.s32.totalorder %s183, %s184
    %p193 = scmp.eq.s32.totalorder %s26, 0
    %p194 = por %p192, %p193
    %p195 = scmp.ne.s32.totalorder %s183, %s184
    %p196 = scmp.eq.s32.totalorder %s27, 1
    %p197 = por %p195, %p196
    %p199 = scmp.ne.s32.totalorder %s184, %s198
    %p200 = scmp.eq.s32.totalorder %s27, 0
    %p201 = por %p199, %p200
    %s203 = sadd.s32 %s202, 1
    %p206 = scmp.eq.s32.totalorder %s21, 1
    %p207 = scmp.ne.s32.totalorder %s202, %s204
    %p208 = scmp.eq.s32.totalorder %s21, 0
    %p209 = por %p207, %p208
    %p210 = scmp.ne.s32.totalorder %s202, %s204
    %p211 = scmp.eq.s32.totalorder %s26, 1
    %p212 = por %p210, %p211
    %p213 = scmp.ne.s32.totalorder %s204, %s205
    %p214 = scmp.eq.s32.totalorder %s26, 0
    %p215 = por %p213, %p214
    %p216 = scmp.ne.s32.totalorder %s204, %s205
    %p217 = scmp.eq.s32.totalorder %s27, 1
    %p218 = por %p216, %p217
    %p220 = scmp.ne.s32.totalorder %s205, %s219
    %p221 = scmp.eq.s32.totalorder %s27, 0
    %p222 = por %p220, %p221
    %s224 = sadd.s32 %s223, 1
    %p227 = scmp.eq.s32.totalorder %s21, 1
    %p228 = scmp.ne.s32.totalorder %s223, %s225
    %p229 = scmp.eq.s32.totalorder %s21, 0
    %p230 = por %p228, %p229
    %p231 = scmp.ne.s32.totalorder %s223, %s225
    %p232 = scmp.eq.s32.totalorder %s26, 1
    %p233 = por %p231, %p232
    %p234 = scmp.ne.s32.totalorder %s225, %s226
    %p235 = scmp.eq.s32.totalorder %s26, 0
    %p236 = por %p234, %p235
    %p237 = scmp.ne.s32.totalorder %s225, %s226
    %p238 = scmp.eq.s32.totalorder %s27, 1
    %p239 = por %p237, %p238
    %p241 = scmp.ne.s32.totalorder %s226, %s240
    %p242 = scmp.eq.s32.totalorder %s27, 0
    %p243 = por %p241, %p242
    %s245 = sadd.s32 %s244, 1
    %p248 = scmp.eq.s32.totalorder %s21, 1
    %p249 = scmp.ne.s32.totalorder %s244, %s246
    %p250 = scmp.eq.s32.totalorder %s21, 0
    %p251 = por %p249, %p250
    %p252 = scmp.ne.s32.totalorder %s244, %s246
    %p253 = scmp.eq.s32.totalorder %s26, 1
    %p254 = por %p252, %p253
    %p255 = scmp.ne.s32.totalorder %s246, %s247
    %p256 = scmp.eq.s32.totalorder %s26, 0
    %p257 = por %p255, %p256
    %p258 = scmp.ne.s32.totalorder %s246, %s247
    %p259 = scmp.eq.s32.totalorder %s27, 1
    %p260 = por %p258, %p259
    %p262 = scmp.ne.s32.totalorder %s247, %s261
    %p263 = scmp.eq.s32.totalorder %s27, 0
    %p264 = por %p262, %p263
    %s266 = sadd.s32 %s265, 1
    %p269 = scmp.eq.s32.totalorder %s21, 1
    %p270 = scmp.ne.s32.totalorder %s265, %s267
    %p271 = scmp.eq.s32.totalorder %s21, 0
    %p272 = por %p270, %p271
    %p273 = scmp.ne.s32.totalorder %s265, %s267
    %p274 = scmp.eq.s32.totalorder %s26, 1
    %p275 = por %p273, %p274
    %p276 = scmp.ne.s32.totalorder %s267, %s268
    %p277 = scmp.eq.s32.totalorder %s26, 0
    %p278 = por %p276, %p277
    %p279 = scmp.ne.s32.totalorder %s267, %s268
    %p280 = scmp.eq.s32.totalorder %s27, 1
    %p281 = por %p279, %p280
    %p283 = scmp.ne.s32.totalorder %s268, %s282
    %p284 = scmp.eq.s32.totalorder %s27, 0
    %p285 = por %p283, %p284
    %s287 = sadd.s32 %s286, 1
    %p290 = scmp.eq.s32.totalorder %s21, 1
    %p291 = scmp.ne.s32.totalorder %s286, %s288
    %p292 = scmp.eq.s32.totalorder %s21, 0
    %p293 = por %p291, %p292
    %p294 = scmp.ne.s32.totalorder %s286, %s288
    %p295 = scmp.eq.s32.totalorder %s26, 1
    %p296 = por %p294, %p295
    %p297 = scmp.ne.s32.totalorder %s288, %s289
    %p298 = scmp.eq.s32.totalorder %s26, 0
    %p299 = por %p297, %p298
    %p300 = scmp.ne.s32.totalorder %s288, %s289
    %p301 = scmp.eq.s32.totalorder %s27, 1
    %p302 = por %p300, %p301
    %p304 = scmp.ne.s32.totalorder %s289, %s303
    %p305 = scmp.eq.s32.totalorder %s27, 0
    %p306 = por %p304, %p305
    %s307 = ssub.s32 %s21, %s28
    %p308 = scmp.eq.s32.totalorder %s307, 0
    %s310 = sadd.s32 %s309, 1
    %s311 = scalar_select %p308, %s309, %s310
    %p314 = pneg %p308
    %p315 = scmp.eq.s32.totalorder %s21, 1
    %p316 = por %p314, %p315
    %p317 = scmp.ne.s32.totalorder %s309, %s312
    %p318 = scmp.eq.s32.totalorder %s21, 0
    %p319 = por %p317, %p318
    %p320 = scmp.ne.s32.totalorder %s309, %s312
    %p321 = scmp.eq.s32.totalorder %s26, 1
    %p322 = por %p320, %p321
    %p323 = scmp.ne.s32.totalorder %s312, %s313
    %p324 = scmp.eq.s32.totalorder %s26, 0
    %p325 = por %p323, %p324
    %p326 = scmp.ne.s32.totalorder %s312, %s313
    %p327 = scmp.eq.s32.totalorder %s27, 1
    %p328 = por %p326, %p327
    %p330 = scmp.ne.s32.totalorder %s313, %s329
    %p331 = scmp.eq.s32.totalorder %s27, 0
    %p332 = por %p330, %p331
    %s333 = ssub.s32 %s21, %s28
    %p334 = scmp.eq.s32.totalorder %s333, 0
    %s336 = sadd.s32 %s335, 1
    %s337 = scalar_select %p334, %s335, %s336
    %p340 = pneg %p334
    %p341 = scmp.eq.s32.totalorder %s21, 1
    %p342 = por %p340, %p341
    %p343 = scmp.ne.s32.totalorder %s335, %s338
    %p344 = scmp.eq.s32.totalorder %s21, 0
    %p345 = por %p343, %p344
    %p346 = scmp.ne.s32.totalorder %s335, %s338
    %p347 = scmp.eq.s32.totalorder %s26, 1
    %p348 = por %p346, %p347
    %p349 = scmp.ne.s32.totalorder %s338, %s339
    %p350 = scmp.eq.s32.totalorder %s26, 0
    %p351 = por %p349, %p350
    %p352 = scmp.ne.s32.totalorder %s338, %s339
    %p353 = scmp.eq.s32.totalorder %s27, 1
    %p354 = por %p352, %p353
    %p356 = scmp.ne.s32.totalorder %s339, %s355
    %p357 = scmp.eq.s32.totalorder %s27, 0
    %p358 = por %p356, %p357
    %p359 = scmp.le.s32.totalorder 1, %s21
    %p360 = scmp.lt.s32.totalorder %s21, 3
    %p361 = pnand %p359, %p360
    %p362 = pneg %p361
    // Predicated region
    $region9: #{simsiam_forward.1} parent=5 // pred_check
      _
    $region10: #{simsiam_forward.1} parent=5 // pred_check_branch
      %364 = sbr.rel (%p361) target = $region12
    $region11: #{simsiam_forward.1} parent=5 // pred_region
      %s365 = ssub.s32 %s21, 1
      // Predicated region
      $region13: #{simsiam_forward.1} parent=11 // pred_check
        %p366 = pneg %p68
      $region14: #{simsiam_forward.1} parent=11 // pred_check_branch
        %368 = sbr.rel (%p366) target = $region16
      $region15: #{simsiam_forward.1} parent=11 // pred_region
        _
      $region16: #{simsiam_forward.1} parent=11 // pred_fallthru
        _
      // Predicated region
      $region17: #{simsiam_forward.1} parent=11 // pred_check
        %p369 = pneg %p89
      $region18: #{simsiam_forward.1} parent=11 // pred_check_branch
        %371 = sbr.rel (%p369) target = $region20
      $region19: #{simsiam_forward.1} parent=11 // pred_region
        _
      $region20: #{simsiam_forward.1} parent=11 // pred_fallthru
        _
      // Predicated region
      $region21: #{simsiam_forward.1} parent=11 // pred_check
        %p372 = pneg %p110
      $region22: #{simsiam_forward.1} parent=11 // pred_check_branch
        %374 = sbr.rel (%p372) target = $region24
      $region23: #{simsiam_forward.1} parent=11 // pred_region
        _
      $region24: #{simsiam_forward.1} parent=11 // pred_fallthru
        _
      // Predicated region
      $region25: #{simsiam_forward.1} parent=11 // pred_check
        %p375 = pneg %p131
      $region26: #{simsiam_forward.1} parent=11 // pred_check_branch
        %377 = sbr.rel (%p375) target = $region28
      $region27: #{simsiam_forward.1} parent=11 // pred_region
        _
      $region28: #{simsiam_forward.1} parent=11 // pred_fallthru
        _
      // Predicated region
      $region29: #{simsiam_forward.1} parent=11 // pred_check
        %p378 = pneg %p152
      $region30: #{simsiam_forward.1} parent=11 // pred_check_branch
        %380 = sbr.rel (%p378) target = $region32
      $region31: #{simsiam_forward.1} parent=11 // pred_region
        _
      $region32: #{simsiam_forward.1} parent=11 // pred_fallthru
        _
      // Predicated region
      $region33: #{simsiam_forward.1} parent=11 // pred_check
        %p381 = pneg %p173
      $region34: #{simsiam_forward.1} parent=11 // pred_check_branch
        %383 = sbr.rel (%p381) target = $region36
      $region35: #{simsiam_forward.1} parent=11 // pred_region
        _
      $region36: #{simsiam_forward.1} parent=11 // pred_fallthru
        _
      // Predicated region
      $region37: #{simsiam_forward.1} parent=11 // pred_check
        %p384 = pneg %p194
      $region38: #{simsiam_forward.1} parent=11 // pred_check_branch
        %386 = sbr.rel (%p384) target = $region40
      $region39: #{simsiam_forward.1} parent=11 // pred_region
        _
      $region40: #{simsiam_forward.1} parent=11 // pred_fallthru
        _
      // Predicated region
      $region41: #{simsiam_forward.1} parent=11 // pred_check
        %p387 = pneg %p215
      $region42: #{simsiam_forward.1} parent=11 // pred_check_branch
        %389 = sbr.rel (%p387) target = $region44
      $region43: #{simsiam_forward.1} parent=11 // pred_region
        _
      $region44: #{simsiam_forward.1} parent=11 // pred_fallthru
        _
      // Predicated region
      $region45: #{simsiam_forward.1} parent=11 // pred_check
        %p390 = pneg %p236
      $region46: #{simsiam_forward.1} parent=11 // pred_check_branch
        %392 = sbr.rel (%p390) target = $region48
      $region47: #{simsiam_forward.1} parent=11 // pred_region
        _
      $region48: #{simsiam_forward.1} parent=11 // pred_fallthru
        _
      // Predicated region
      $region49: #{simsiam_forward.1} parent=11 // pred_check
        %p393 = pneg %p257
      $region50: #{simsiam_forward.1} parent=11 // pred_check_branch
        %395 = sbr.rel (%p393) target = $region52
      $region51: #{simsiam_forward.1} parent=11 // pred_region
        _
      $region52: #{simsiam_forward.1} parent=11 // pred_fallthru
        _
      // Predicated region
      $region53: #{simsiam_forward.1} parent=11 // pred_check
        %p396 = pneg %p278
      $region54: #{simsiam_forward.1} parent=11 // pred_check_branch
        %398 = sbr.rel (%p396) target = $region56
      $region55: #{simsiam_forward.1} parent=11 // pred_region
        _
      $region56: #{simsiam_forward.1} parent=11 // pred_fallthru
        _
      // Predicated region
      $region57: #{simsiam_forward.1} parent=11 // pred_check
        %p399 = pneg %p299
      $region58: #{simsiam_forward.1} parent=11 // pred_check_branch
        %401 = sbr.rel (%p399) target = $region60
      $region59: #{simsiam_forward.1} parent=11 // pred_region
        _
      $region60: #{simsiam_forward.1} parent=11 // pred_fallthru
        _
    $region12: #{simsiam_forward.1} parent=5 // pred_fallthru
      _
    %p402 = scmp.lt.s32.totalorder %s21, 2
    // Predicated region
    $region61: #{simsiam_forward.1} parent=5 // pred_check
      %p403 = pneg %p402
    $region62: #{simsiam_forward.1} parent=5 // pred_check_branch
      %405 = sbr.rel (%p403) target = $region64
    $region63: #{simsiam_forward.1} parent=5 // pred_region
      // Predicated region
      $region65: #{simsiam_forward.1} parent=63 // pred_check
        %p406 = pneg %p41
      $region66: #{simsiam_forward.1} parent=63 // pred_check_branch
        %408 = sbr.rel (%p406) target = $region68
      $region67: #{simsiam_forward.1} parent=63 // pred_region
        %p409 = scmp.lt.s32.totalorder %s21, 1
        %s410 = scalar_select %p409, %s21, 1
        %s411 = smul.addr %s410, 32
        %s412 = smul.addr %s411, 8
        %s413 = scalar_lea.vmem %s0, %s412
      $region68: #{simsiam_forward.1} parent=63 // pred_fallthru
        _
    $region64: #{simsiam_forward.1} parent=5 // pred_fallthru
      _
    %p414 = scmp.le.s32.totalorder 1, %s21
    %p415 = scmp.lt.s32.totalorder %s21, 3
    %p416 = pnand %p414, %p415
    %p417 = pneg %p416
    // Predicated region
    $region69: #{simsiam_forward.1} parent=5 // pred_check
      _
    $region70: #{simsiam_forward.1} parent=5 // pred_check_branch
      %419 = sbr.rel (%p416) target = $region72
    $region71: #{simsiam_forward.1} parent=5 // pred_region
      %s420 = ssub.s32 %s21, 1
      %p421 = scmp.lt.s32.totalorder %s26, 1
      %s422 = scalar_select %p421, %s26, 1
      %s423 = smul.addr %s422, 32
      %s424 = smul.addr %s423, 8
      %s425 = scalar_lea.vmem %s0, %s424
      %p426 = pneg %p47
      %p427 = pneg %p44
      %p428 = pneg %p68
      %p429 = pneg %p65
      %p430 = pneg %p89
      %p431 = pneg %p86
      %p432 = pneg %p110
      %p433 = pneg %p107
      %p434 = pneg %p131
      %p435 = pneg %p128
      %p436 = pneg %p152
      %p437 = pneg %p149
      %p438 = pneg %p173
      %p439 = pneg %p170
      %p440 = pneg %p194
      %p441 = pneg %p191
      %p442 = pneg %p215
      %p443 = pneg %p212
      %p444 = pneg %p236
      %p445 = pneg %p233
      %p446 = pneg %p257
      %p447 = pneg %p254
      %p448 = pneg %p278
      %p449 = pneg %p275
      %p450 = pneg %p299
      %p451 = pneg %p296
      %p452 = pneg %p325
      %p453 = pneg %p322
      %p454 = scmp.lt.s32.totalorder %s26, 1
      %s455 = scalar_select %p454, %s26, 1
      %s456 = smul.addr %s455, 32
      %s457 = smul.addr %s456, 8
      %s458 = scalar_lea.vmem %s13, %s457
      %p459 = pneg %p351
      %p460 = pneg %p348
      %p461 = scmp.lt.s32.totalorder %s26, 1
      %s462 = scalar_select %p461, %s26, 1
      %s463 = smul.addr %s462, 32
      %s464 = smul.addr %s463, 8
      %s465 = scalar_lea.vmem %s14, %s464
      %p466 = scmp.lt.s32.totalorder %s26, 1
      %s467 = scalar_select %p466, %s26, 1
      %s468 = smul.addr %s467, 32
      %s469 = smul.addr %s468, 8
      %s470 = scalar_lea.vmem %s0, %s469
      %p471 = scmp.lt.s32.totalorder %s26, 1
      %s472 = scalar_select %p471, %s26, 1
      %s473 = smul.addr %s472, 32
      %s474 = smul.addr %s473, 8
      %s475 = scalar_lea.vmem %s13, %s474
      %p476 = scmp.lt.s32.totalorder %s26, 1
      %s477 = scalar_select %p476, %s26, 1
      %s478 = smul.addr %s477, 32
      %s479 = smul.addr %s478, 8
      %s480 = scalar_lea.vmem %s14, %s479
      %v481 = vld [vmem:[%s470] sm:$0xff]
      %v482 = vld [vmem:[%s470 + $0x8] sm:$0xff]
      %v483 = vld [vmem:[%s470 + $0x10] sm:$0xff]
      %v484 = vld [vmem:[%s470 + $0x18] sm:$0xff]
      %v485 = vld [vmem:[%s470 + $0x20] sm:$0xff]
      %v486 = vld [vmem:[%s470 + $0x28] sm:$0xff]
      %v487 = vld [vmem:[%s470 + $0x30] sm:$0xff]
      %v488 = vld [vmem:[%s470 + $0x38] sm:$0xff]
      %v489 = vld [vmem:[%s470 + $0x40] sm:$0xff]
      %v490 = vld [vmem:[%s470 + $0x48] sm:$0xff]
      %v491 = vld [vmem:[%s470 + $0x50] sm:$0xff]
      %v492 = vld [vmem:[%s470 + $0x58] sm:$0xff]
      %v493 = vld [vmem:[%s470 + $0x60] sm:$0xff]
      %v494 = vld [vmem:[%s470 + $0x68] sm:$0xff]
      %v495 = vld [vmem:[%s470 + $0x70] sm:$0xff]
      %v496 = vld [vmem:[%s470 + $0x78] sm:$0xff]
      %v497 = vld [vmem:[%s470 + $0x80] sm:$0xff]
      %v498 = vld [vmem:[%s470 + $0x88] sm:$0xff]
      %v499 = vld [vmem:[%s470 + $0x90] sm:$0xff]
      %v500 = vld [vmem:[%s470 + $0x98] sm:$0xff]
      %v501 = vld [vmem:[%s470 + $0xa0] sm:$0xff]
      %v502 = vld [vmem:[%s470 + $0xa8] sm:$0xff]
      %v503 = vld [vmem:[%s470 + $0xb0] sm:$0xff]
      %v504 = vld [vmem:[%s470 + $0xb8] sm:$0xff]
      %v505 = vld [vmem:[%s470 + $0xc0] sm:$0xff]
      %v506 = vld [vmem:[%s470 + $0xc8] sm:$0xff]
      %v507 = vld [vmem:[%s470 + $0xd0] sm:$0xff]
      %v508 = vld [vmem:[%s470 + $0xd8] sm:$0xff]
      %v509 = vld [vmem:[%s470 + $0xe0] sm:$0xff]
      %v510 = vld [vmem:[%s470 + $0xe8] sm:$0xff]
      %v511 = vld [vmem:[%s470 + $0xf0] sm:$0xff]
      %v512 = vld [vmem:[%s470 + $0xf8] sm:$0xff]
      %v513 = vpack.c.bf16 %v483, %v481
      %v514 = vpack.c.bf16 %v484, %v482
      %v515 = vpack.c.bf16 %v487, %v485
      %v516 = vpack.c.bf16 %v488, %v486
      %v517 = vpack.c.bf16 %v491, %v489
      %v518 = vpack.c.bf16 %v492, %v490
      %v519 = vpack.c.bf16 %v495, %v493
      %v520 = vpack.c.bf16 %v496, %v494
      %v521 = vpack.c.bf16 %v499, %v497
      %v522 = vpack.c.bf16 %v500, %v498
      %v523 = vpack.c.bf16 %v503, %v501
      %v524 = vpack.c.bf16 %v504, %v502
      %v525 = vpack.c.bf16 %v507, %v505
      %v526 = vpack.c.bf16 %v508, %v506
      %v527 = vpack.c.bf16 %v511, %v509
      %v528 = vpack.c.bf16 %v512, %v510
      %v529 = vld [vmem:[%s1] sm:$0xff]
      %v530 = vld [vmem:[%s1 + $0x8] sm:$0xff]
      %v531 = vld [vmem:[%s1 + $0x10] sm:$0xff]
      %v532 = vld [vmem:[%s1 + $0x18] sm:$0xff]
      %v533 = vld [vmem:[%s1 + $0x20] sm:$0xff]
      %v534 = vld [vmem:[%s1 + $0x28] sm:$0xff]
      %v535 = vld [vmem:[%s1 + $0x30] sm:$0xff]
      %v536 = vld [vmem:[%s1 + $0x38] sm:$0xff]
      %v537 = vld [vmem:[%s1 + $0x40] sm:$0xff]
      %v538 = vld [vmem:[%s1 + $0x48] sm:$0xff]
      %v539 = vld [vmem:[%s1 + $0x50] sm:$0xff]
      %v540 = vld [vmem:[%s1 + $0x58] sm:$0xff]
      %v541 = vld [vmem:[%s1 + $0x60] sm:$0xff]
      %v542 = vld [vmem:[%s1 + $0x68] sm:$0xff]
      %v543 = vld [vmem:[%s1 + $0x70] sm:$0xff]
      %v544 = vld [vmem:[%s1 + $0x78] sm:$0xff]
      %v545 = vld [vmem:[%s1 + $0x80] sm:$0xff]
      %v546 = vld [vmem:[%s1 + $0x88] sm:$0xff]
      %v547 = vld [vmem:[%s1 + $0x90] sm:$0xff]
      %v548 = vld [vmem:[%s1 + $0x98] sm:$0xff]
      %v549 = vld [vmem:[%s1 + $0xa0] sm:$0xff]
      %v550 = vld [vmem:[%s1 + $0xa8] sm:$0xff]
      %v551 = vld [vmem:[%s1 + $0xb0] sm:$0xff]
      %v552 = vld [vmem:[%s1 + $0xb8] sm:$0xff]
      %v553 = vld [vmem:[%s1 + $0xc0] sm:$0xff]
      %v554 = vld [vmem:[%s1 + $0xc8] sm:$0xff]
      %v555 = vld [vmem:[%s1 + $0xd0] sm:$0xff]
      %v556 = vld [vmem:[%s1 + $0xd8] sm:$0xff]
      %v557 = vld [vmem:[%s1 + $0xe0] sm:$0xff]
      %v558 = vld [vmem:[%s1 + $0xe8] sm:$0xff]
      %v559 = vld [vmem:[%s1 + $0xf0] sm:$0xff]
      %v560 = vld [vmem:[%s1 + $0xf8] sm:$0xff]
      %v593 = vunpack.c.l.b16 %v529
      %v594 = vunpack.c.h.b16 %v529
      %v595 = vunpack.c.l.b16 %v530
      %v596 = vunpack.c.h.b16 %v530
      %v597 = vunpack.c.l.b16 %v531
      %v598 = vunpack.c.h.b16 %v531
      %v599 = vunpack.c.l.b16 %v532
      %v600 = vunpack.c.h.b16 %v532
      %v601 = vunpack.c.l.b16 %v533
      %v602 = vunpack.c.h.b16 %v533
      %v603 = vunpack.c.l.b16 %v534
      %v604 = vunpack.c.h.b16 %v534
      %v605 = vunpack.c.l.b16 %v535
      %v606 = vunpack.c.h.b16 %v535
      %v607 = vunpack.c.l.b16 %v536
      %v608 = vunpack.c.h.b16 %v536
      %v609 = vunpack.c.l.b16 %v537
      %v610 = vunpack.c.h.b16 %v537
      %v611 = vunpack.c.l.b16 %v538
      %v612 = vunpack.c.h.b16 %v538
      %v613 = vunpack.c.l.b16 %v539
      %v614 = vunpack.c.h.b16 %v539
      %v615 = vunpack.c.l.b16 %v540
      %v616 = vunpack.c.h.b16 %v540
      %v617 = vunpack.c.l.b16 %v541
      %v618 = vunpack.c.h.b16 %v541
      %v619 = vunpack.c.l.b16 %v542
      %v620 = vunpack.c.h.b16 %v542
      %v621 = vunpack.c.l.b16 %v543
      %v622 = vunpack.c.h.b16 %v543
      %v623 = vunpack.c.l.b16 %v544
      %v624 = vunpack.c.h.b16 %v544
      %v625 = vunpack.c.l.b16 %v545
      %v626 = vunpack.c.h.b16 %v545
      %v627 = vunpack.c.l.b16 %v546
      %v628 = vunpack.c.h.b16 %v546
      %v629 = vunpack.c.l.b16 %v547
      %v630 = vunpack.c.h.b16 %v547
      %v631 = vunpack.c.l.b16 %v548
      %v632 = vunpack.c.h.b16 %v548
      %v633 = vunpack.c.l.b16 %v549
      %v634 = vunpack.c.h.b16 %v549
      %v635 = vunpack.c.l.b16 %v550
      %v636 = vunpack.c.h.b16 %v550
      %v637 = vunpack.c.l.b16 %v551
      %v638 = vunpack.c.h.b16 %v551
      %v639 = vunpack.c.l.b16 %v552
      %v640 = vunpack.c.h.b16 %v552
      %v641 = vunpack.c.l.b16 %v553
      %v642 = vunpack.c.h.b16 %v553
      %v643 = vunpack.c.l.b16 %v554
      %v644 = vunpack.c.h.b16 %v554
      %v645 = vunpack.c.l.b16 %v555
      %v646 = vunpack.c.h.b16 %v555
      %v647 = vunpack.c.l.b16 %v556
      %v648 = vunpack.c.h.b16 %v556
      %v649 = vunpack.c.l.b16 %v557
      %v650 = vunpack.c.h.b16 %v557
      %v651 = vunpack.c.l.b16 %v558
      %v652 = vunpack.c.h.b16 %v558
      %v653 = vunpack.c.l.b16 %v559
      %v654 = vunpack.c.h.b16 %v559
      %v655 = vunpack.c.l.b16 %v560
      %v656 = vunpack.c.h.b16 %v560
      %v657 = vpack.c.b16 %v595, %v593
      %v658 = vpack.c.b16 %v596, %v594
      %v659 = vpack.c.b16 %v599, %v597
      %v660 = vpack.c.b16 %v600, %v598
      %v661 = vpack.c.b16 %v603, %v601
      %v662 = vpack.c.b16 %v604, %v602
      %v663 = vpack.c.b16 %v607, %v605
      %v664 = vpack.c.b16 %v608, %v606
      %v665 = vpack.c.b16 %v611, %v609
      %v666 = vpack.c.b16 %v612, %v610
      %v667 = vpack.c.b16 %v615, %v613
      %v668 = vpack.c.b16 %v616, %v614
      %v669 = vpack.c.b16 %v619, %v617
      %v670 = vpack.c.b16 %v620, %v618
      %v671 = vpack.c.b16 %v623, %v621
      %v672 = vpack.c.b16 %v624, %v622
      %v673 = vpack.c.b16 %v627, %v625
      %v674 = vpack.c.b16 %v628, %v626
      %v675 = vpack.c.b16 %v631, %v629
      %v676 = vpack.c.b16 %v632, %v630
      %v677 = vpack.c.b16 %v635, %v633
      %v678 = vpack.c.b16 %v636, %v634
      %v679 = vpack.c.b16 %v639, %v637
      %v680 = vpack.c.b16 %v640, %v638
      %v681 = vpack.c.b16 %v643, %v641
      %v682 = vpack.c.b16 %v644, %v642
      %v683 = vpack.c.b16 %v647, %v645
      %v684 = vpack.c.b16 %v648, %v646
      %v685 = vpack.c.b16 %v651, %v649
      %v686 = vpack.c.b16 %v652, %v650
      %v687 = vpack.c.b16 %v655, %v653
      %v688 = vpack.c.b16 %v656, %v654
      %721 = vmatpush.bf16.msra.mxu0 %v671
      %722 = vmatpush.bf16.msra.mxu0 %v669
      %723 = vmatpush.bf16.msra.mxu0 %v667
      %724 = vmatpush.bf16.msra.mxu0 %v665
      %725 = vmatpush.bf16.msra.mxu0 %v663
      %726 = vmatpush.bf16.msra.mxu0 %v661
      %727 = vmatpush.bf16.msra.mxu0 %v659
      %728 = vmatpush.bf16.msra.mxu0 %v657
      %729 = vmatmul.bf16.gmra.mxu0 %v513
      %v730 = vpop.f32.mrf.mxu0
      %v731 = vadd.f32 0.0, %v730
      %v732 = vpop.f32.mrf.mxu0
      %v733 = vadd.f32 0.0, %v732
      %734 = vmatmul.bf16.gmra.mxu0 %v515
      %v735 = vpop.f32.mrf.mxu0
      %v736 = vadd.f32 0.0, %v735
      %v737 = vpop.f32.mrf.mxu0
      %v738 = vadd.f32 0.0, %v737
      %739 = vmatmul.bf16.gmra.mxu0 %v517
      %v740 = vpop.f32.mrf.mxu0
      %v741 = vadd.f32 0.0, %v740
      %v742 = vpop.f32.mrf.mxu0
      %v743 = vadd.f32 0.0, %v742
      %744 = vmatmul.bf16.gmra.mxu0 %v519
      %v745 = vpop.f32.mrf.mxu0
      %v746 = vadd.f32 0.0, %v745
      %v747 = vpop.f32.mrf.mxu0
      %v748 = vadd.f32 0.0, %v747
      %749 = vmatmul.bf16.gmra.mxu0 %v521
      %v750 = vpop.f32.mrf.mxu0
      %v751 = vadd.f32 0.0, %v750
      %v752 = vpop.f32.mrf.mxu0
      %v753 = vadd.f32 0.0, %v752
      %754 = vmatmul.bf16.gmra.mxu0 %v523
      %v755 = vpop.f32.mrf.mxu0
      %v756 = vadd.f32 0.0, %v755
      %v757 = vpop.f32.mrf.mxu0
      %v758 = vadd.f32 0.0, %v757
      %759 = vmatmul.bf16.gmra.mxu0 %v525
      %v760 = vpop.f32.mrf.mxu0
      %v761 = vadd.f32 0.0, %v760
      %v762 = vpop.f32.mrf.mxu0
      %v763 = vadd.f32 0.0, %v762
      %764 = vmatmul.bf16.gmra.mxu0 %v527
      %v765 = vpop.f32.mrf.mxu0
      %v766 = vadd.f32 0.0, %v765
      %v767 = vpop.f32.mrf.mxu0
      %v768 = vadd.f32 0.0, %v767
      %769 = vdwg.mxu0
      %770 = vmatpush.bf16.msra.mxu0 %v687
      %771 = vmatpush.bf16.msra.mxu0 %v685
      %772 = vmatpush.bf16.msra.mxu0 %v683
      %773 = vmatpush.bf16.msra.mxu0 %v681
      %774 = vmatpush.bf16.msra.mxu0 %v679
      %775 = vmatpush.bf16.msra.mxu0 %v677
      %776 = vmatpush.bf16.msra.mxu0 %v675
      %777 = vmatpush.bf16.msra.mxu0 %v673
      %778 = vmatmul.bf16.gmra.mxu0 %v514
      %v779 = vpop.f32.mrf.mxu0
      %v780 = vadd.f32 %v731, %v779
      %v781 = vpop.f32.mrf.mxu0
      %v782 = vadd.f32 %v733, %v781
      %783 = vmatmul.bf16.gmra.mxu0 %v516
      %v784 = vpop.f32.mrf.mxu0
      %v785 = vadd.f32 %v736, %v784
      %v786 = vpop.f32.mrf.mxu0
      %v787 = vadd.f32 %v738, %v786
      %788 = vmatmul.bf16.gmra.mxu0 %v518
      %v789 = vpop.f32.mrf.mxu0
      %v790 = vadd.f32 %v741, %v789
      %v791 = vpop.f32.mrf.mxu0
      %v792 = vadd.f32 %v743, %v791
      %793 = vmatmul.bf16.gmra.mxu0 %v520
      %v794 = vpop.f32.mrf.mxu0
      %v795 = vadd.f32 %v746, %v794
      %v796 = vpop.f32.mrf.mxu0
      %v797 = vadd.f32 %v748, %v796
      %798 = vmatmul.bf16.gmra.mxu0 %v522
      %v799 = vpop.f32.mrf.mxu0
      %v800 = vadd.f32 %v751, %v799
      %v801 = vpop.f32.mrf.mxu0
      %v802 = vadd.f32 %v753, %v801
      %803 = vmatmul.bf16.gmra.mxu0 %v524
      %v804 = vpop.f32.mrf.mxu0
      %v805 = vadd.f32 %v756, %v804
      %v806 = vpop.f32.mrf.mxu0
      %v807 = vadd.f32 %v758, %v806
      %808 = vmatmul.bf16.gmra.mxu0 %v526
      %v809 = vpop.f32.mrf.mxu0
      %v810 = vadd.f32 %v761, %v809
      %v811 = vpop.f32.mrf.mxu0
      %v812 = vadd.f32 %v763, %v811
      %813 = vmatmul.bf16.gmra.mxu0 %v528
      %v814 = vpop.f32.mrf.mxu0
      %v815 = vadd.f32 %v766, %v814
      %v816 = vpop.f32.mrf.mxu0
      %v817 = vadd.f32 %v768, %v816
      %818 = vdwg.mxu0
      %819 = vmatpush.bf16.msra.mxu0 %v672
      %820 = vmatpush.bf16.msra.mxu0 %v670
      %821 = vmatpush.bf16.msra.mxu0 %v668
      %822 = vmatpush.bf16.msra.mxu0 %v666
      %823 = vmatpush.bf16.msra.mxu0 %v664
      %824 = vmatpush.bf16.msra.mxu0 %v662
      %825 = vmatpush.bf16.msra.mxu0 %v660
      %826 = vmatpush.bf16.msra.mxu0 %v658
      %827 = vmatmul.bf16.gmra.mxu0 %v513
      %v828 = vpop.f32.mrf.mxu0
      %v829 = vadd.f32 0.0, %v828
      %v830 = vpop.f32.mrf.mxu0
      %v831 = vadd.f32 0.0, %v830
      %832 = vmatmul.bf16.gmra.mxu0 %v515
      %v833 = vpop.f32.mrf.mxu0
      %v834 = vadd.f32 0.0, %v833
      %v835 = vpop.f32.mrf.mxu0
      %v836 = vadd.f32 0.0, %v835
      %837 = vmatmul.bf16.gmra.mxu0 %v517
      %v838 = vpop.f32.mrf.mxu0
      %v839 = vadd.f32 0.0, %v838
      %v840 = vpop.f32.mrf.mxu0
      %v841 = vadd.f32 0.0, %v840
      %842 = vmatmul.bf16.gmra.mxu0 %v519
      %v843 = vpop.f32.mrf.mxu0
      %v844 = vadd.f32 0.0, %v843
      %v845 = vpop.f32.mrf.mxu0
      %v846 = vadd.f32 0.0, %v845
      %847 = vmatmul.bf16.gmra.mxu0 %v521
      %v848 = vpop.f32.mrf.mxu0
      %v849 = vadd.f32 0.0, %v848
      %v850 = vpop.f32.mrf.mxu0
      %v851 = vadd.f32 0.0, %v850
      %852 = vmatmul.bf16.gmra.mxu0 %v523
      %v853 = vpop.f32.mrf.mxu0
      %v854 = vadd.f32 0.0, %v853
      %v855 = vpop.f32.mrf.mxu0
      %v856 = vadd.f32 0.0, %v855
      %857 = vmatmul.bf16.gmra.mxu0 %v525
      %v858 = vpop.f32.mrf.mxu0
      %v859 = vadd.f32 0.0, %v858
      %v860 = vpop.f32.mrf.mxu0
      %v861 = vadd.f32 0.0, %v860
      %862 = vmatmul.bf16.gmra.mxu0 %v527
      %v863 = vpop.f32.mrf.mxu0
      %v864 = vadd.f32 0.0, %v863
      %v865 = vpop.f32.mrf.mxu0
      %v866 = vadd.f32 0.0, %v865
      %867 = vdwg.mxu0
      %868 = vmatpush.bf16.msra.mxu0 %v688
      %869 = vmatpush.bf16.msra.mxu0 %v686
      %870 = vmatpush.bf16.msra.mxu0 %v684
      %871 = vmatpush.bf16.msra.mxu0 %v682
      %872 = vmatpush.bf16.msra.mxu0 %v680
      %873 = vmatpush.bf16.msra.mxu0 %v678
      %874 = vmatpush.bf16.msra.mxu0 %v676
      %875 = vmatpush.bf16.msra.mxu0 %v674
      %876 = vmatmul.bf16.gmra.mxu0 %v514
      %v877 = vpop.f32.mrf.mxu0
      %v878 = vadd.f32 %v829, %v877
      %v879 = vpop.f32.mrf.mxu0
      %v880 = vadd.f32 %v831, %v879
      %881 = vmatmul.bf16.gmra.mxu0 %v516
      %v882 = vpop.f32.mrf.mxu0
      %v883 = vadd.f32 %v834, %v882
      %v884 = vpop.f32.mrf.mxu0
      %v885 = vadd.f32 %v836, %v884
      %886 = vmatmul.bf16.gmra.mxu0 %v518
      %v887 = vpop.f32.mrf.mxu0
      %v888 = vadd.f32 %v839, %v887
      %v889 = vpop.f32.mrf.mxu0
      %v890 = vadd.f32 %v841, %v889
      %891 = vmatmul.bf16.gmra.mxu0 %v520
      %v892 = vpop.f32.mrf.mxu0
      %v893 = vadd.f32 %v844, %v892
      %v894 = vpop.f32.mrf.mxu0
      %v895 = vadd.f32 %v846, %v894
      %896 = vmatmul.bf16.gmra.mxu0 %v522
      %v897 = vpop.f32.mrf.mxu0
      %v898 = vadd.f32 %v849, %v897
      %v899 = vpop.f32.mrf.mxu0
      %v900 = vadd.f32 %v851, %v899
      %901 = vmatmul.bf16.gmra.mxu0 %v524
      %v902 = vpop.f32.mrf.mxu0
      %v903 = vadd.f32 %v854, %v902
      %v904 = vpop.f32.mrf.mxu0
      %v905 = vadd.f32 %v856, %v904
      %906 = vmatmul.bf16.gmra.mxu0 %v526
      %v907 = vpop.f32.mrf.mxu0
      %v908 = vadd.f32 %v859, %v907
      %v909 = vpop.f32.mrf.mxu0
      %v910 = vadd.f32 %v861, %v909
      %911 = vmatmul.bf16.gmra.mxu0 %v528
      %v912 = vpop.f32.mrf.mxu0
      %v913 = vadd.f32 %v864, %v912
      %v914 = vpop.f32.mrf.mxu0
      %v915 = vadd.f32 %v866, %v914
      %916 = vdwg.mxu0
      %v917 = vld [vmem:[%s2] sm:$0x3]
      %v918 = vld [vmem:[%s3] sm:$0x3]
      %919 = vmatpush.msra.mxu0 %v817
      %920 = vmatpush.msra.mxu0 %v815
      %921 = vmatpush.msra.mxu0 %v812
      %922 = vmatpush.msra.mxu0 %v810
      %923 = vmatpush.msra.mxu0 %v807
      %924 = vmatpush.msra.mxu0 %v805
      %925 = vmatpush.msra.mxu0 %v802
      %926 = vmatpush.msra.mxu0 %v800
      %927 = vmatpush.msra.mxu0 %v797
      %928 = vmatpush.msra.mxu0 %v795
      %929 = vmatpush.msra.mxu0 %v792
      %930 = vmatpush.msra.mxu0 %v790
      %931 = vmatpush.msra.mxu0 %v787
      %932 = vmatpush.msra.mxu0 %v785
      %933 = vmatpush.msra.mxu0 %v782
      %934 = vmatpush.msra.mxu0 %v780
      %935 = vmatmul.f32.gmra.mxu0 1.0
      %v936 = vpop.f32.mrf.mxu0
      %v937 = vadd.f32 0.0, %v936
      %938 = vdwg.mxu0
      %939 = vmatpush.msra.mxu0 %v915
      %940 = vmatpush.msra.mxu0 %v913
      %941 = vmatpush.msra.mxu0 %v910
      %942 = vmatpush.msra.mxu0 %v908
      %943 = vmatpush.msra.mxu0 %v905
      %944 = vmatpush.msra.mxu0 %v903
      %945 = vmatpush.msra.mxu0 %v900
      %946 = vmatpush.msra.mxu0 %v898
      %947 = vmatpush.msra.mxu0 %v895
      %948 = vmatpush.msra.mxu0 %v893
      %949 = vmatpush.msra.mxu0 %v890
      %950 = vmatpush.msra.mxu0 %v888
      %951 = vmatpush.msra.mxu0 %v885
      %952 = vmatpush.msra.mxu0 %v883
      %953 = vmatpush.msra.mxu0 %v880
      %954 = vmatpush.msra.mxu0 %v878
      %955 = vmatmul.f32.gmra.mxu0 1.0
      %v956 = vpop.f32.mrf.mxu0
      %v957 = vadd.f32 0.0, %v956
      %958 = vdwg.mxu0
      %v959 = vmul.f32 %v780, %v780
      %v960 = vmul.f32 %v878, %v878
      %v961 = vmul.f32 %v782, %v782
      %v962 = vmul.f32 %v880, %v880
      %v963 = vmul.f32 %v785, %v785
      %v964 = vmul.f32 %v883, %v883
      %v965 = vmul.f32 %v787, %v787
      %v966 = vmul.f32 %v885, %v885
      %v967 = vmul.f32 %v790, %v790
      %v968 = vmul.f32 %v888, %v888
      %v969 = vmul.f32 %v792, %v792
      %v970 = vmul.f32 %v890, %v890
      %v971 = vmul.f32 %v795, %v795
      %v972 = vmul.f32 %v893, %v893
      %v973 = vmul.f32 %v797, %v797
      %v974 = vmul.f32 %v895, %v895
      %v975 = vmul.f32 %v800, %v800
      %v976 = vmul.f32 %v898, %v898
      %v977 = vmul.f32 %v802, %v802
      %v978 = vmul.f32 %v900, %v900
      %v979 = vmul.f32 %v805, %v805
      %v980 = vmul.f32 %v903, %v903
      %v981 = vmul.f32 %v807, %v807
      %v982 = vmul.f32 %v905, %v905
      %v983 = vmul.f32 %v810, %v810
      %v984 = vmul.f32 %v908, %v908
      %v985 = vmul.f32 %v812, %v812
      %v986 = vmul.f32 %v910, %v910
      %v987 = vmul.f32 %v815, %v815
      %v988 = vmul.f32 %v913, %v913
      %v989 = vmul.f32 %v817, %v817
      %v990 = vmul.f32 %v915, %v915
      %991 = vmatpush.msra.mxu0 %v989
      %992 = vmatpush.msra.mxu0 %v987
      %993 = vmatpush.msra.mxu0 %v985
      %994 = vmatpush.msra.mxu0 %v983
      %995 = vmatpush.msra.mxu0 %v981
      %996 = vmatpush.msra.mxu0 %v979
      %997 = vmatpush.msra.mxu0 %v977
      %998 = vmatpush.msra.mxu0 %v975
      %999 = vmatpush.msra.mxu0 %v973
      %1000 = vmatpush.msra.mxu0 %v971
      %1001 = vmatpush.msra.mxu0 %v969
      %1002 = vmatpush.msra.mxu0 %v967
      %1003 = vmatpush.msra.mxu0 %v965
      %1004 = vmatpush.msra.mxu0 %v963
      %1005 = vmatpush.msra.mxu0 %v961
      %1006 = vmatpush.msra.mxu0 %v959
      %1007 = vmatmul.f32.gmra.mxu0 1.0
      %v1008 = vpop.f32.mrf.mxu0
      %v1009 = vadd.f32 0.0, %v1008
      %1010 = vdwg.mxu0
      %1011 = vmatpush.msra.mxu0 %v990
      %1012 = vmatpush.msra.mxu0 %v988
      %1013 = vmatpush.msra.mxu0 %v986
      %1014 = vmatpush.msra.mxu0 %v984
      %1015 = vmatpush.msra.mxu0 %v982
      %1016 = vmatpush.msra.mxu0 %v980
      %1017 = vmatpush.msra.mxu0 %v978
      %1018 = vmatpush.msra.mxu0 %v976
      %1019 = vmatpush.msra.mxu0 %v974
      %1020 = vmatpush.msra.mxu0 %v972
      %1021 = vmatpush.msra.mxu0 %v970
      %1022 = vmatpush.msra.mxu0 %v968
      %1023 = vmatpush.msra.mxu0 %v966
      %1024 = vmatpush.msra.mxu0 %v964
      %1025 = vmatpush.msra.mxu0 %v962
      %1026 = vmatpush.msra.mxu0 %v960
      %1027 = vmatmul.f32.gmra.mxu0 1.0
      %v1028 = vpop.f32.mrf.mxu0
      %v1029 = vadd.f32 0.0, %v1028
      %1030 = vdwg.mxu0
      %v1031 = vmul.f32 %v937, 0.0078125
      %v1032 = vmul.f32 %v957, 0.0078125
      %v1033 = vmul.f32 %v1009, 0.0078125
      %v1034 = vmul.f32 %v1029, 0.0078125
      %v1035 = vmul.f32 %v1031, %v1031
      %v1036 = vmul.f32 %v1032, %v1032
      %v1037 = vsub.f32 %v1033, %v1035
      %v1038 = vsub.f32 %v1034, %v1036
      %v1039 = vmax.f32 %v1037, 0.0
      %v1040 = vmax.f32 %v1038, 0.0
      %v1041 = vperm.slane %v1031, 0
      %v1042 = vperm.slane %v1032, 0
      %v1043 = vsub.f32 %v780, %v1041
      %v1044 = vsub.f32 %v878, %v1042
      %v1045 = vsub.f32 %v782, %v1041
      %v1046 = vsub.f32 %v880, %v1042
      %v1047 = vsub.f32 %v785, %v1041
      %v1048 = vsub.f32 %v883, %v1042
      %v1049 = vsub.f32 %v787, %v1041
      %v1050 = vsub.f32 %v885, %v1042
      %v1051 = vsub.f32 %v790, %v1041
      %v1052 = vsub.f32 %v888, %v1042
      %v1053 = vsub.f32 %v792, %v1041
      %v1054 = vsub.f32 %v890, %v1042
      %v1055 = vsub.f32 %v795, %v1041
      %v1056 = vsub.f32 %v893, %v1042
      %v1057 = vsub.f32 %v797, %v1041
      %v1058 = vsub.f32 %v895, %v1042
      %v1059 = vsub.f32 %v800, %v1041
      %v1060 = vsub.f32 %v898, %v1042
      %v1061 = vsub.f32 %v802, %v1041
      %v1062 = vsub.f32 %v900, %v1042
      %v1063 = vsub.f32 %v805, %v1041
      %v1064 = vsub.f32 %v903, %v1042
      %v1065 = vsub.f32 %v807, %v1041
      %v1066 = vsub.f32 %v905, %v1042
      %v1067 = vsub.f32 %v810, %v1041
      %v1068 = vsub.f32 %v908, %v1042
      %v1069 = vsub.f32 %v812, %v1041
      %v1070 = vsub.f32 %v910, %v1042
      %v1071 = vsub.f32 %v815, %v1041
      %v1072 = vsub.f32 %v913, %v1042
      %v1073 = vsub.f32 %v817, %v1041
      %v1074 = vsub.f32 %v915, %v1042
      %v1075 = vadd.f32 %v1039, 1e-05
      %v1076 = vadd.f32 %v1040, 1e-05
      %v1077 = vrsqrt.pop %v1075
      %v1078 = vmul.f32 %v1077, %v1075
      %v1079 = vmul.f32 %v1078, %v1077
      %v1080 = vmul.f32 0.5, %v1079
      %v1081 = vsub.f32 1.5, %v1080
      %v1082 = vmul.f32 %v1077, %v1081
      %vm1083 = vweird.f32 %v1075
      %vm1084 = vweird.f32 %v1077
      %vm1085 = vmor %vm1083, %vm1084
      %v1086 = vsel %vm1085, %v1077, %v1082
      %v1087 = vrsqrt.pop %v1076
      %v1088 = vmul.f32 %v1087, %v1076
      %v1089 = vmul.f32 %v1088, %v1087
      %v1090 = vmul.f32 0.5, %v1089
      %v1091 = vsub.f32 1.5, %v1090
      %v1092 = vmul.f32 %v1087, %v1091
      %vm1093 = vweird.f32 %v1076
      %vm1094 = vweird.f32 %v1087
      %vm1095 = vmor %vm1093, %vm1094
      %v1096 = vsel %vm1095, %v1087, %v1092
      %v1097 = vperm.slane %v1086, 0
      %v1098 = vperm.slane %v1096, 0
      %v1099 = vmul.f32 %v1043, %v1097
      %v1100 = vmul.f32 %v1044, %v1098
      %v1101 = vmul.f32 %v1045, %v1097
      %v1102 = vmul.f32 %v1046, %v1098
      %v1103 = vmul.f32 %v1047, %v1097
      %v1104 = vmul.f32 %v1048, %v1098
      %v1105 = vmul.f32 %v1049, %v1097
      %v1106 = vmul.f32 %v1050, %v1098
      %v1107 = vmul.f32 %v1051, %v1097
      %v1108 = vmul.f32 %v1052, %v1098
      %v1109 = vmul.f32 %v1053, %v1097
      %v1110 = vmul.f32 %v1054, %v1098
      %v1111 = vmul.f32 %v1055, %v1097
      %v1112 = vmul.f32 %v1056, %v1098
      %v1113 = vmul.f32 %v1057, %v1097
      %v1114 = vmul.f32 %v1058, %v1098
      %v1115 = vmul.f32 %v1059, %v1097
      %v1116 = vmul.f32 %v1060, %v1098
      %v1117 = vmul.f32 %v1061, %v1097
      %v1118 = vmul.f32 %v1062, %v1098
      %v1119 = vmul.f32 %v1063, %v1097
      %v1120 = vmul.f32 %v1064, %v1098
      %v1121 = vmul.f32 %v1065, %v1097
      %v1122 = vmul.f32 %v1066, %v1098
      %v1123 = vmul.f32 %v1067, %v1097
      %v1124 = vmul.f32 %v1068, %v1098
      %v1125 = vmul.f32 %v1069, %v1097
      %v1126 = vmul.f32 %v1070, %v1098
      %v1127 = vmul.f32 %v1071, %v1097
      %v1128 = vmul.f32 %v1072, %v1098
      %v1129 = vmul.f32 %v1073, %v1097
      %v1130 = vmul.f32 %v1074, %v1098
      %v1132 = vperm.slane %v917, 0
      %v1133 = vperm.slane %v917, 1
      %v1136 = vmul.f32 %v1099, %v1132
      %v1137 = vmul.f32 %v1100, %v1133
      %v1138 = vmul.f32 %v1101, %v1132
      %v1139 = vmul.f32 %v1102, %v1133
      %v1140 = vmul.f32 %v1103, %v1132
      %v1141 = vmul.f32 %v1104, %v1133
      %v1142 = vmul.f32 %v1105, %v1132
      %v1143 = vmul.f32 %v1106, %v1133
      %v1144 = vmul.f32 %v1107, %v1132
      %v1145 = vmul.f32 %v1108, %v1133
      %v1146 = vmul.f32 %v1109, %v1132
      %v1147 = vmul.f32 %v1110, %v1133
      %v1148 = vmul.f32 %v1111, %v1132
      %v1149 = vmul.f32 %v1112, %v1133
      %v1150 = vmul.f32 %v1113, %v1132
      %v1151 = vmul.f32 %v1114, %v1133
      %v1152 = vmul.f32 %v1115, %v1132
      %v1153 = vmul.f32 %v1116, %v1133
      %v1154 = vmul.f32 %v1117, %v1132
      %v1155 = vmul.f32 %v1118, %v1133
      %v1156 = vmul.f32 %v1119, %v1132
      %v1157 = vmul.f32 %v1120, %v1133
      %v1158 = vmul.f32 %v1121, %v1132
      %v1159 = vmul.f32 %v1122, %v1133
      %v1160 = vmul.f32 %v1123, %v1132
      %v1161 = vmul.f32 %v1124, %v1133
      %v1162 = vmul.f32 %v1125, %v1132
      %v1163 = vmul.f32 %v1126, %v1133
      %v1164 = vmul.f32 %v1127, %v1132
      %v1165 = vmul.f32 %v1128, %v1133
      %v1166 = vmul.f32 %v1129, %v1132
      %v1167 = vmul.f32 %v1130, %v1133
      %v1169 = vperm.slane %v918, 0
      %v1170 = vperm.slane %v918, 1
      %v1173 = vadd.f32 %v1136, %v1169
      %v1174 = vadd.f32 %v1137, %v1170
      %v1175 = vadd.f32 %v1138, %v1169
      %v1176 = vadd.f32 %v1139, %v1170
      %v1177 = vadd.f32 %v1140, %v1169
      %v1178 = vadd.f32 %v1141, %v1170
      %v1179 = vadd.f32 %v1142, %v1169
      %v1180 = vadd.f32 %v1143, %v1170
      %v1181 = vadd.f32 %v1144, %v1169
      %v1182 = vadd.f32 %v1145, %v1170
      %v1183 = vadd.f32 %v1146, %v1169
      %v1184 = vadd.f32 %v1147, %v1170
      %v1185 = vadd.f32 %v1148, %v1169
      %v1186 = vadd.f32 %v1149, %v1170
      %v1187 = vadd.f32 %v1150, %v1169
      %v1188 = vadd.f32 %v1151, %v1170
      %v1189 = vadd.f32 %v1152, %v1169
      %v1190 = vadd.f32 %v1153, %v1170
      %v1191 = vadd.f32 %v1154, %v1169
      %v1192 = vadd.f32 %v1155, %v1170
      %v1193 = vadd.f32 %v1156, %v1169
      %v1194 = vadd.f32 %v1157, %v1170
      %v1195 = vadd.f32 %v1158, %v1169
      %v1196 = vadd.f32 %v1159, %v1170
      %v1197 = vadd.f32 %v1160, %v1169
      %v1198 = vadd.f32 %v1161, %v1170
      %v1199 = vadd.f32 %v1162, %v1169
      %v1200 = vadd.f32 %v1163, %v1170
      %v1201 = vadd.f32 %v1164, %v1169
      %v1202 = vadd.f32 %v1165, %v1170
      %v1203 = vadd.f32 %v1166, %v1169
      %v1204 = vadd.f32 %v1167, %v1170
      %v1205 = vmax.f32 %v1173, 0.0
      %v1206 = vmax.f32 %v1174, 0.0
      %v1207 = vmax.f32 %v1175, 0.0
      %v1208 = vmax.f32 %v1176, 0.0
      %v1209 = vmax.f32 %v1177, 0.0
      %v1210 = vmax.f32 %v1178, 0.0
      %v1211 = vmax.f32 %v1179, 0.0
      %v1212 = vmax.f32 %v1180, 0.0
      %v1213 = vmax.f32 %v1181, 0.0
      %v1214 = vmax.f32 %v1182, 0.0
      %v1215 = vmax.f32 %v1183, 0.0
      %v1216 = vmax.f32 %v1184, 0.0
      %v1217 = vmax.f32 %v1185, 0.0
      %v1218 = vmax.f32 %v1186, 0.0
      %v1219 = vmax.f32 %v1187, 0.0
      %v1220 = vmax.f32 %v1188, 0.0
      %v1221 = vmax.f32 %v1189, 0.0
      %v1222 = vmax.f32 %v1190, 0.0
      %v1223 = vmax.f32 %v1191, 0.0
      %v1224 = vmax.f32 %v1192, 0.0
      %v1225 = vmax.f32 %v1193, 0.0
      %v1226 = vmax.f32 %v1194, 0.0
      %v1227 = vmax.f32 %v1195, 0.0
      %v1228 = vmax.f32 %v1196, 0.0
      %v1229 = vmax.f32 %v1197, 0.0
      %v1230 = vmax.f32 %v1198, 0.0
      %v1231 = vmax.f32 %v1199, 0.0
      %v1232 = vmax.f32 %v1200, 0.0
      %v1233 = vmax.f32 %v1201, 0.0
      %v1234 = vmax.f32 %v1202, 0.0
      %v1235 = vmax.f32 %v1203, 0.0
      %v1236 = vmax.f32 %v1204, 0.0
      %v1237 = vpack.c.bf16 %v1207, %v1205
      %v1238 = vpack.c.bf16 %v1208, %v1206
      %v1239 = vpack.c.bf16 %v1211, %v1209
      %v1240 = vpack.c.bf16 %v1212, %v1210
      %v1241 = vpack.c.bf16 %v1215, %v1213
      %v1242 = vpack.c.bf16 %v1216, %v1214
      %v1243 = vpack.c.bf16 %v1219, %v1217
      %v1244 = vpack.c.bf16 %v1220, %v1218
      %v1245 = vpack.c.bf16 %v1223, %v1221
      %v1246 = vpack.c.bf16 %v1224, %v1222
      %v1247 = vpack.c.bf16 %v1227, %v1225
      %v1248 = vpack.c.bf16 %v1228, %v1226
      %v1249 = vpack.c.bf16 %v1231, %v1229
      %v1250 = vpack.c.bf16 %v1232, %v1230
      %v1251 = vpack.c.bf16 %v1235, %v1233
      %v1252 = vpack.c.bf16 %v1236, %v1234
      %v1253 = vld [vmem:[%s4] sm:$0xff]
      %v1254 = vld [vmem:[%s4 + $0x8] sm:$0xff]
      %v1255 = vld [vmem:[%s4 + $0x10] sm:$0xff]
      %v1256 = vld [vmem:[%s4 + $0x18] sm:$0xff]
      %v1257 = vld [vmem:[%s4 + $0x20] sm:$0xff]
      %v1258 = vld [vmem:[%s4 + $0x28] sm:$0xff]
      %v1259 = vld [vmem:[%s4 + $0x30] sm:$0xff]
      %v1260 = vld [vmem:[%s4 + $0x38] sm:$0xff]
      %v1261 = vld [vmem:[%s4 + $0x40] sm:$0xff]
      %v1262 = vld [vmem:[%s4 + $0x48] sm:$0xff]
      %v1263 = vld [vmem:[%s4 + $0x50] sm:$0xff]
      %v1264 = vld [vmem:[%s4 + $0x58] sm:$0xff]
      %v1265 = vld [vmem:[%s4 + $0x60] sm:$0xff]
      %v1266 = vld [vmem:[%s4 + $0x68] sm:$0xff]
      %v1267 = vld [vmem:[%s4 + $0x70] sm:$0xff]
      %v1268 = vld [vmem:[%s4 + $0x78] sm:$0xff]
      %v1269 = vld [vmem:[%s4 + $0x80] sm:$0xff]
      %v1270 = vld [vmem:[%s4 + $0x88] sm:$0xff]
      %v1271 = vld [vmem:[%s4 + $0x90] sm:$0xff]
      %v1272 = vld [vmem:[%s4 + $0x98] sm:$0xff]
      %v1273 = vld [vmem:[%s4 + $0xa0] sm:$0xff]
      %v1274 = vld [vmem:[%s4 + $0xa8] sm:$0xff]
      %v1275 = vld [vmem:[%s4 + $0xb0] sm:$0xff]
      %v1276 = vld [vmem:[%s4 + $0xb8] sm:$0xff]
      %v1277 = vld [vmem:[%s4 + $0xc0] sm:$0xff]
      %v1278 = vld [vmem:[%s4 + $0xc8] sm:$0xff]
      %v1279 = vld [vmem:[%s4 + $0xd0] sm:$0xff]
      %v1280 = vld [vmem:[%s4 + $0xd8] sm:$0xff]
      %v1281 = vld [vmem:[%s4 + $0xe0] sm:$0xff]
      %v1282 = vld [vmem:[%s4 + $0xe8] sm:$0xff]
      %v1283 = vld [vmem:[%s4 + $0xf0] sm:$0xff]
      %v1284 = vld [vmem:[%s4 + $0xf8] sm:$0xff]
      %v1317 = vunpack.c.l.b16 %v1253
      %v1318 = vunpack.c.h.b16 %v1253
      %v1319 = vunpack.c.l.b16 %v1254
      %v1320 = vunpack.c.h.b16 %v1254
      %v1321 = vunpack.c.l.b16 %v1255
      %v1322 = vunpack.c.h.b16 %v1255
      %v1323 = vunpack.c.l.b16 %v1256
      %v1324 = vunpack.c.h.b16 %v1256
      %v1325 = vunpack.c.l.b16 %v1257
      %v1326 = vunpack.c.h.b16 %v1257
      %v1327 = vunpack.c.l.b16 %v1258
      %v1328 = vunpack.c.h.b16 %v1258
      %v1329 = vunpack.c.l.b16 %v1259
      %v1330 = vunpack.c.h.b16 %v1259
      %v1331 = vunpack.c.l.b16 %v1260
      %v1332 = vunpack.c.h.b16 %v1260
      %v1333 = vunpack.c.l.b16 %v1261
      %v1334 = vunpack.c.h.b16 %v1261
      %v1335 = vunpack.c.l.b16 %v1262
      %v1336 = vunpack.c.h.b16 %v1262
      %v1337 = vunpack.c.l.b16 %v1263
      %v1338 = vunpack.c.h.b16 %v1263
      %v1339 = vunpack.c.l.b16 %v1264
      %v1340 = vunpack.c.h.b16 %v1264
      %v1341 = vunpack.c.l.b16 %v1265
      %v1342 = vunpack.c.h.b16 %v1265
      %v1343 = vunpack.c.l.b16 %v1266
      %v1344 = vunpack.c.h.b16 %v1266
      %v1345 = vunpack.c.l.b16 %v1267
      %v1346 = vunpack.c.h.b16 %v1267
      %v1347 = vunpack.c.l.b16 %v1268
      %v1348 = vunpack.c.h.b16 %v1268
      %v1349 = vunpack.c.l.b16 %v1269
      %v1350 = vunpack.c.h.b16 %v1269
      %v1351 = vunpack.c.l.b16 %v1270
      %v1352 = vunpack.c.h.b16 %v1270
      %v1353 = vunpack.c.l.b16 %v1271
      %v1354 = vunpack.c.h.b16 %v1271
      %v1355 = vunpack.c.l.b16 %v1272
      %v1356 = vunpack.c.h.b16 %v1272
      %v1357 = vunpack.c.l.b16 %v1273
      %v1358 = vunpack.c.h.b16 %v1273
      %v1359 = vunpack.c.l.b16 %v1274
      %v1360 = vunpack.c.h.b16 %v1274
      %v1361 = vunpack.c.l.b16 %v1275
      %v1362 = vunpack.c.h.b16 %v1275
      %v1363 = vunpack.c.l.b16 %v1276
      %v1364 = vunpack.c.h.b16 %v1276
      %v1365 = vunpack.c.l.b16 %v1277
      %v1366 = vunpack.c.h.b16 %v1277
      %v1367 = vunpack.c.l.b16 %v1278
      %v1368 = vunpack.c.h.b16 %v1278
      %v1369 = vunpack.c.l.b16 %v1279
      %v1370 = vunpack.c.h.b16 %v1279
      %v1371 = vunpack.c.l.b16 %v1280
      %v1372 = vunpack.c.h.b16 %v1280
      %v1373 = vunpack.c.l.b16 %v1281
      %v1374 = vunpack.c.h.b16 %v1281
      %v1375 = vunpack.c.l.b16 %v1282
      %v1376 = vunpack.c.h.b16 %v1282
      %v1377 = vunpack.c.l.b16 %v1283
      %v1378 = vunpack.c.h.b16 %v1283
      %v1379 = vunpack.c.l.b16 %v1284
      %v1380 = vunpack.c.h.b16 %v1284
      %v1381 = vpack.c.b16 %v1319, %v1317
      %v1382 = vpack.c.b16 %v1320, %v1318
      %v1383 = vpack.c.b16 %v1323, %v1321
      %v1384 = vpack.c.b16 %v1324, %v1322
      %v1385 = vpack.c.b16 %v1327, %v1325
      %v1386 = vpack.c.b16 %v1328, %v1326
      %v1387 = vpack.c.b16 %v1331, %v1329
      %v1388 = vpack.c.b16 %v1332, %v1330
      %v1389 = vpack.c.b16 %v1335, %v1333
      %v1390 = vpack.c.b16 %v1336, %v1334
      %v1391 = vpack.c.b16 %v1339, %v1337
      %v1392 = vpack.c.b16 %v1340, %v1338
      %v1393 = vpack.c.b16 %v1343, %v1341
      %v1394 = vpack.c.b16 %v1344, %v1342
      %v1395 = vpack.c.b16 %v1347, %v1345
      %v1396 = vpack.c.b16 %v1348, %v1346
      %v1397 = vpack.c.b16 %v1351, %v1349
      %v1398 = vpack.c.b16 %v1352, %v1350
      %v1399 = vpack.c.b16 %v1355, %v1353
      %v1400 = vpack.c.b16 %v1356, %v1354
      %v1401 = vpack.c.b16 %v1359, %v1357
      %v1402 = vpack.c.b16 %v1360, %v1358
      %v1403 = vpack.c.b16 %v1363, %v1361
      %v1404 = vpack.c.b16 %v1364, %v1362
      %v1405 = vpack.c.b16 %v1367, %v1365
      %v1406 = vpack.c.b16 %v1368, %v1366
      %v1407 = vpack.c.b16 %v1371, %v1369
      %v1408 = vpack.c.b16 %v1372, %v1370
      %v1409 = vpack.c.b16 %v1375, %v1373
      %v1410 = vpack.c.b16 %v1376, %v1374
      %v1411 = vpack.c.b16 %v1379, %v1377
      %v1412 = vpack.c.b16 %v1380, %v1378
      %1445 = vmatpush.bf16.msra.mxu0 %v1395
      %1446 = vmatpush.bf16.msra.mxu0 %v1393
      %1447 = vmatpush.bf16.msra.mxu0 %v1391
      %1448 = vmatpush.bf16.msra.mxu0 %v1389
      %1449 = vmatpush.bf16.msra.mxu0 %v1387
      %1450 = vmatpush.bf16.msra.mxu0 %v1385
      %1451 = vmatpush.bf16.msra.mxu0 %v1383
      %1452 = vmatpush.bf16.msra.mxu0 %v1381
      %1453 = vmatmul.bf16.gmra.mxu0 %v1237
      %v1454 = vpop.f32.mrf.mxu0
      %v1455 = vadd.f32 0.0, %v1454
      %v1456 = vpop.f32.mrf.mxu0
      %v1457 = vadd.f32 0.0, %v1456
      %1458 = vmatmul.bf16.gmra.mxu0 %v1239
      %v1459 = vpop.f32.mrf.mxu0
      %v1460 = vadd.f32 0.0, %v1459
      %v1461 = vpop.f32.mrf.mxu0
      %v1462 = vadd.f32 0.0, %v1461
      %1463 = vmatmul.bf16.gmra.mxu0 %v1241
      %v1464 = vpop.f32.mrf.mxu0
      %v1465 = vadd.f32 0.0, %v1464
      %v1466 = vpop.f32.mrf.mxu0
      %v1467 = vadd.f32 0.0, %v1466
      %1468 = vmatmul.bf16.gmra.mxu0 %v1243
      %v1469 = vpop.f32.mrf.mxu0
      %v1470 = vadd.f32 0.0, %v1469
      %v1471 = vpop.f32.mrf.mxu0
      %v1472 = vadd.f32 0.0, %v1471
      %1473 = vmatmul.bf16.gmra.mxu0 %v1245
      %v1474 = vpop.f32.mrf.mxu0
      %v1475 = vadd.f32 0.0, %v1474
      %v1476 = vpop.f32.mrf.mxu0
      %v1477 = vadd.f32 0.0, %v1476
      %1478 = vmatmul.bf16.gmra.mxu0 %v1247
      %v1479 = vpop.f32.mrf.mxu0
      %v1480 = vadd.f32 0.0, %v1479
      %v1481 = vpop.f32.mrf.mxu0
      %v1482 = vadd.f32 0.0, %v1481
      %1483 = vmatmul.bf16.gmra.mxu0 %v1249
      %v1484 = vpop.f32.mrf.mxu0
      %v1485 = vadd.f32 0.0, %v1484
      %v1486 = vpop.f32.mrf.mxu0
      %v1487 = vadd.f32 0.0, %v1486
      %1488 = vmatmul.bf16.gmra.mxu0 %v1251
      %v1489 = vpop.f32.mrf.mxu0
      %v1490 = vadd.f32 0.0, %v1489
      %v1491 = vpop.f32.mrf.mxu0
      %v1492 = vadd.f32 0.0, %v1491
      %1493 = vdwg.mxu0
      %1494 = vmatpush.bf16.msra.mxu0 %v1411
      %1495 = vmatpush.bf16.msra.mxu0 %v1409
      %1496 = vmatpush.bf16.msra.mxu0 %v1407
      %1497 = vmatpush.bf16.msra.mxu0 %v1405
      %1498 = vmatpush.bf16.msra.mxu0 %v1403
      %1499 = vmatpush.bf16.msra.mxu0 %v1401
      %1500 = vmatpush.bf16.msra.mxu0 %v1399
      %1501 = vmatpush.bf16.msra.mxu0 %v1397
      %1502 = vmatmul.bf16.gmra.mxu0 %v1238
      %v1503 = vpop.f32.mrf.mxu0
      %v1504 = vadd.f32 %v1455, %v1503
      %v1505 = vpop.f32.mrf.mxu0
      %v1506 = vadd.f32 %v1457, %v1505
      %1507 = vmatmul.bf16.gmra.mxu0 %v1240
      %v1508 = vpop.f32.mrf.mxu0
      %v1509 = vadd.f32 %v1460, %v1508
      %v1510 = vpop.f32.mrf.mxu0
      %v1511 = vadd.f32 %v1462, %v1510
      %1512 = vmatmul.bf16.gmra.mxu0 %v1242
      %v1513 = vpop.f32.mrf.mxu0
      %v1514 = vadd.f32 %v1465, %v1513
      %v1515 = vpop.f32.mrf.mxu0
      %v1516 = vadd.f32 %v1467, %v1515
      %1517 = vmatmul.bf16.gmra.mxu0 %v1244
      %v1518 = vpop.f32.mrf.mxu0
      %v1519 = vadd.f32 %v1470, %v1518
      %v1520 = vpop.f32.mrf.mxu0
      %v1521 = vadd.f32 %v1472, %v1520
      %1522 = vmatmul.bf16.gmra.mxu0 %v1246
      %v1523 = vpop.f32.mrf.mxu0
      %v1524 = vadd.f32 %v1475, %v1523
      %v1525 = vpop.f32.mrf.mxu0
      %v1526 = vadd.f32 %v1477, %v1525
      %1527 = vmatmul.bf16.gmra.mxu0 %v1248
      %v1528 = vpop.f32.mrf.mxu0
      %v1529 = vadd.f32 %v1480, %v1528
      %v1530 = vpop.f32.mrf.mxu0
      %v1531 = vadd.f32 %v1482, %v1530
      %1532 = vmatmul.bf16.gmra.mxu0 %v1250
      %v1533 = vpop.f32.mrf.mxu0
      %v1534 = vadd.f32 %v1485, %v1533
      %v1535 = vpop.f32.mrf.mxu0
      %v1536 = vadd.f32 %v1487, %v1535
      %1537 = vmatmul.bf16.gmra.mxu0 %v1252
      %v1538 = vpop.f32.mrf.mxu0
      %v1539 = vadd.f32 %v1490, %v1538
      %v1540 = vpop.f32.mrf.mxu0
      %v1541 = vadd.f32 %v1492, %v1540
      %1542 = vdwg.mxu0
      %1543 = vmatpush.bf16.msra.mxu0 %v1396
      %1544 = vmatpush.bf16.msra.mxu0 %v1394
      %1545 = vmatpush.bf16.msra.mxu0 %v1392
      %1546 = vmatpush.bf16.msra.mxu0 %v1390
      %1547 = vmatpush.bf16.msra.mxu0 %v1388
      %1548 = vmatpush.bf16.msra.mxu0 %v1386
      %1549 = vmatpush.bf16.msra.mxu0 %v1384
      %1550 = vmatpush.bf16.msra.mxu0 %v1382
      %1551 = vmatmul.bf16.gmra.mxu0 %v1237
      %v1552 = vpop.f32.mrf.mxu0
      %v1553 = vadd.f32 0.0, %v1552
      %v1554 = vpop.f32.mrf.mxu0
      %v1555 = vadd.f32 0.0, %v1554
      %1556 = vmatmul.bf16.gmra.mxu0 %v1239
      %v1557 = vpop.f32.mrf.mxu0
      %v1558 = vadd.f32 0.0, %v1557
      %v1559 = vpop.f32.mrf.mxu0
      %v1560 = vadd.f32 0.0, %v1559
      %1561 = vmatmul.bf16.gmra.mxu0 %v1241
      %v1562 = vpop.f32.mrf.mxu0
      %v1563 = vadd.f32 0.0, %v1562
      %v1564 = vpop.f32.mrf.mxu0
      %v1565 = vadd.f32 0.0, %v1564
      %1566 = vmatmul.bf16.gmra.mxu0 %v1243
      %v1567 = vpop.f32.mrf.mxu0
      %v1568 = vadd.f32 0.0, %v1567
      %v1569 = vpop.f32.mrf.mxu0
      %v1570 = vadd.f32 0.0, %v1569
      %1571 = vmatmul.bf16.gmra.mxu0 %v1245
      %v1572 = vpop.f32.mrf.mxu0
      %v1573 = vadd.f32 0.0, %v1572
      %v1574 = vpop.f32.mrf.mxu0
      %v1575 = vadd.f32 0.0, %v1574
      %1576 = vmatmul.bf16.gmra.mxu0 %v1247
      %v1577 = vpop.f32.mrf.mxu0
      %v1578 = vadd.f32 0.0, %v1577
      %v1579 = vpop.f32.mrf.mxu0
      %v1580 = vadd.f32 0.0, %v1579
      %1581 = vmatmul.bf16.gmra.mxu0 %v1249
      %v1582 = vpop.f32.mrf.mxu0
      %v1583 = vadd.f32 0.0, %v1582
      %v1584 = vpop.f32.mrf.mxu0
      %v1585 = vadd.f32 0.0, %v1584
      %1586 = vmatmul.bf16.gmra.mxu0 %v1251
      %v1587 = vpop.f32.mrf.mxu0
      %v1588 = vadd.f32 0.0, %v1587
      %v1589 = vpop.f32.mrf.mxu0
      %v1590 = vadd.f32 0.0, %v1589
      %1591 = vdwg.mxu0
      %1592 = vmatpush.bf16.msra.mxu0 %v1412
      %1593 = vmatpush.bf16.msra.mxu0 %v1410
      %1594 = vmatpush.bf16.msra.mxu0 %v1408
      %1595 = vmatpush.bf16.msra.mxu0 %v1406
      %1596 = vmatpush.bf16.msra.mxu0 %v1404
      %1597 = vmatpush.bf16.msra.mxu0 %v1402
      %1598 = vmatpush.bf16.msra.mxu0 %v1400
      %1599 = vmatpush.bf16.msra.mxu0 %v1398
      %1600 = vmatmul.bf16.gmra.mxu0 %v1238
      %v1601 = vpop.f32.mrf.mxu0
      %v1602 = vadd.f32 %v1553, %v1601
      %v1603 = vpop.f32.mrf.mxu0
      %v1604 = vadd.f32 %v1555, %v1603
      %1605 = vmatmul.bf16.gmra.mxu0 %v1240
      %v1606 = vpop.f32.mrf.mxu0
      %v1607 = vadd.f32 %v1558, %v1606
      %v1608 = vpop.f32.mrf.mxu0
      %v1609 = vadd.f32 %v1560, %v1608
      %1610 = vmatmul.bf16.gmra.mxu0 %v1242
      %v1611 = vpop.f32.mrf.mxu0
      %v1612 = vadd.f32 %v1563, %v1611
      %v1613 = vpop.f32.mrf.mxu0
      %v1614 = vadd.f32 %v1565, %v1613
      %1615 = vmatmul.bf16.gmra.mxu0 %v1244
      %v1616 = vpop.f32.mrf.mxu0
      %v1617 = vadd.f32 %v1568, %v1616
      %v1618 = vpop.f32.mrf.mxu0
      %v1619 = vadd.f32 %v1570, %v1618
      %1620 = vmatmul.bf16.gmra.mxu0 %v1246
      %v1621 = vpop.f32.mrf.mxu0
      %v1622 = vadd.f32 %v1573, %v1621
      %v1623 = vpop.f32.mrf.mxu0
      %v1624 = vadd.f32 %v1575, %v1623
      %1625 = vmatmul.bf16.gmra.mxu0 %v1248
      %v1626 = vpop.f32.mrf.mxu0
      %v1627 = vadd.f32 %v1578, %v1626
      %v1628 = vpop.f32.mrf.mxu0
      %v1629 = vadd.f32 %v1580, %v1628
      %1630 = vmatmul.bf16.gmra.mxu0 %v1250
      %v1631 = vpop.f32.mrf.mxu0
      %v1632 = vadd.f32 %v1583, %v1631
      %v1633 = vpop.f32.mrf.mxu0
      %v1634 = vadd.f32 %v1585, %v1633
      %1635 = vmatmul.bf16.gmra.mxu0 %v1252
      %v1636 = vpop.f32.mrf.mxu0
      %v1637 = vadd.f32 %v1588, %v1636
      %v1638 = vpop.f32.mrf.mxu0
      %v1639 = vadd.f32 %v1590, %v1638
      %1640 = vdwg.mxu0
      %v1641 = vld [vmem:[%s5] sm:$0x3]
      %v1642 = vld [vmem:[%s6] sm:$0x3]
      %1643 = vmatpush.msra.mxu0 %v1541
      %1644 = vmatpush.msra.mxu0 %v1539
      %1645 = vmatpush.msra.mxu0 %v1536
      %1646 = vmatpush.msra.mxu0 %v1534
      %1647 = vmatpush.msra.mxu0 %v1531
      %1648 = vmatpush.msra.mxu0 %v1529
      %1649 = vmatpush.msra.mxu0 %v1526
      %1650 = vmatpush.msra.mxu0 %v1524
      %1651 = vmatpush.msra.mxu0 %v1521
      %1652 = vmatpush.msra.mxu0 %v1519
      %1653 = vmatpush.msra.mxu0 %v1516
      %1654 = vmatpush.msra.mxu0 %v1514
      %1655 = vmatpush.msra.mxu0 %v1511
      %1656 = vmatpush.msra.mxu0 %v1509
      %1657 = vmatpush.msra.mxu0 %v1506
      %1658 = vmatpush.msra.mxu0 %v1504
      %1659 = vmatmul.f32.gmra.mxu0 1.0
      %v1660 = vpop.f32.mrf.mxu0
      %v1661 = vadd.f32 0.0, %v1660
      %1662 = vdwg.mxu0
      %1663 = vmatpush.msra.mxu0 %v1639
      %1664 = vmatpush.msra.mxu0 %v1637
      %1665 = vmatpush.msra.mxu0 %v1634
      %1666 = vmatpush.msra.mxu0 %v1632
      %1667 = vmatpush.msra.mxu0 %v1629
      %1668 = vmatpush.msra.mxu0 %v1627
      %1669 = vmatpush.msra.mxu0 %v1624
      %1670 = vmatpush.msra.mxu0 %v1622
      %1671 = vmatpush.msra.mxu0 %v1619
      %1672 = vmatpush.msra.mxu0 %v1617
      %1673 = vmatpush.msra.mxu0 %v1614
      %1674 = vmatpush.msra.mxu0 %v1612
      %1675 = vmatpush.msra.mxu0 %v1609
      %1676 = vmatpush.msra.mxu0 %v1607
      %1677 = vmatpush.msra.mxu0 %v1604
      %1678 = vmatpush.msra.mxu0 %v1602
      %1679 = vmatmul.f32.gmra.mxu0 1.0
      %v1680 = vpop.f32.mrf.mxu0
      %v1681 = vadd.f32 0.0, %v1680
      %1682 = vdwg.mxu0
      %v1683 = vmul.f32 %v1504, %v1504
      %v1684 = vmul.f32 %v1602, %v1602
      %v1685 = vmul.f32 %v1506, %v1506
      %v1686 = vmul.f32 %v1604, %v1604
      %v1687 = vmul.f32 %v1509, %v1509
      %v1688 = vmul.f32 %v1607, %v1607
      %v1689 = vmul.f32 %v1511, %v1511
      %v1690 = vmul.f32 %v1609, %v1609
      %v1691 = vmul.f32 %v1514, %v1514
      %v1692 = vmul.f32 %v1612, %v1612
      %v1693 = vmul.f32 %v1516, %v1516
      %v1694 = vmul.f32 %v1614, %v1614
      %v1695 = vmul.f32 %v1519, %v1519
      %v1696 = vmul.f32 %v1617, %v1617
      %v1697 = vmul.f32 %v1521, %v1521
      %v1698 = vmul.f32 %v1619, %v1619
      %v1699 = vmul.f32 %v1524, %v1524
      %v1700 = vmul.f32 %v1622, %v1622
      %v1701 = vmul.f32 %v1526, %v1526
      %v1702 = vmul.f32 %v1624, %v1624
      %v1703 = vmul.f32 %v1529, %v1529
      %v1704 = vmul.f32 %v1627, %v1627
      %v1705 = vmul.f32 %v1531, %v1531
      %v1706 = vmul.f32 %v1629, %v1629
      %v1707 = vmul.f32 %v1534, %v1534
      %v1708 = vmul.f32 %v1632, %v1632
      %v1709 = vmul.f32 %v1536, %v1536
      %v1710 = vmul.f32 %v1634, %v1634
      %v1711 = vmul.f32 %v1539, %v1539
      %v1712 = vmul.f32 %v1637, %v1637
      %v1713 = vmul.f32 %v1541, %v1541
      %v1714 = vmul.f32 %v1639, %v1639
      %1715 = vmatpush.msra.mxu0 %v1713
      %1716 = vmatpush.msra.mxu0 %v1711
      %1717 = vmatpush.msra.mxu0 %v1709
      %1718 = vmatpush.msra.mxu0 %v1707
      %1719 = vmatpush.msra.mxu0 %v1705
      %1720 = vmatpush.msra.mxu0 %v1703
      %1721 = vmatpush.msra.mxu0 %v1701
      %1722 = vmatpush.msra.mxu0 %v1699
      %1723 = vmatpush.msra.mxu0 %v1697
      %1724 = vmatpush.msra.mxu0 %v1695
      %1725 = vmatpush.msra.mxu0 %v1693
      %1726 = vmatpush.msra.mxu0 %v1691
      %1727 = vmatpush.msra.mxu0 %v1689
      %1728 = vmatpush.msra.mxu0 %v1687
      %1729 = vmatpush.msra.mxu0 %v1685
      %1730 = vmatpush.msra.mxu0 %v1683
      %1731 = vmatmul.f32.gmra.mxu0 1.0
      %v1732 = vpop.f32.mrf.mxu0
      %v1733 = vadd.f32 0.0, %v1732
      %1734 = vdwg.mxu0
      %1735 = vmatpush.msra.mxu0 %v1714
      %1736 = vmatpush.msra.mxu0 %v1712
      %1737 = vmatpush.msra.mxu0 %v1710
      %1738 = vmatpush.msra.mxu0 %v1708
      %1739 = vmatpush.msra.mxu0 %v1706
      %1740 = vmatpush.msra.mxu0 %v1704
      %1741 = vmatpush.msra.mxu0 %v1702
      %1742 = vmatpush.msra.mxu0 %v1700
      %1743 = vmatpush.msra.mxu0 %v1698
      %1744 = vmatpush.msra.mxu0 %v1696
      %1745 = vmatpush.msra.mxu0 %v1694
      %1746 = vmatpush.msra.mxu0 %v1692
      %1747 = vmatpush.msra.mxu0 %v1690
      %1748 = vmatpush.msra.mxu0 %v1688
      %1749 = vmatpush.msra.mxu0 %v1686
      %1750 = vmatpush.msra.mxu0 %v1684
      %1751 = vmatmul.f32.gmra.mxu0 1.0
      %v1752 = vpop.f32.mrf.mxu0
      %v1753 = vadd.f32 0.0, %v1752
      %1754 = vdwg.mxu0
      %v1755 = vmul.f32 %v1661, 0.0078125
      %v1756 = vmul.f32 %v1681, 0.0078125
      %v1757 = vmul.f32 %v1733, 0.0078125
      %v1758 = vmul.f32 %v1753, 0.0078125
      %v1759 = vmul.f32 %v1755, %v1755
      %v1760 = vmul.f32 %v1756, %v1756
      %v1761 = vsub.f32 %v1757, %v1759
      %v1762 = vsub.f32 %v1758, %v1760
      %v1763 = vmax.f32 %v1761, 0.0
      %v1764 = vmax.f32 %v1762, 0.0
      %v1765 = vperm.slane %v1755, 0
      %v1766 = vperm.slane %v1756, 0
      %v1767 = vsub.f32 %v1504, %v1765
      %v1768 = vsub.f32 %v1602, %v1766
      %v1769 = vsub.f32 %v1506, %v1765
      %v1770 = vsub.f32 %v1604, %v1766
      %v1771 = vsub.f32 %v1509, %v1765
      %v1772 = vsub.f32 %v1607, %v1766
      %v1773 = vsub.f32 %v1511, %v1765
      %v1774 = vsub.f32 %v1609, %v1766
      %v1775 = vsub.f32 %v1514, %v1765
      %v1776 = vsub.f32 %v1612, %v1766
      %v1777 = vsub.f32 %v1516, %v1765
      %v1778 = vsub.f32 %v1614, %v1766
      %v1779 = vsub.f32 %v1519, %v1765
      %v1780 = vsub.f32 %v1617, %v1766
      %v1781 = vsub.f32 %v1521, %v1765
      %v1782 = vsub.f32 %v1619, %v1766
      %v1783 = vsub.f32 %v1524, %v1765
      %v1784 = vsub.f32 %v1622, %v1766
      %v1785 = vsub.f32 %v1526, %v1765
      %v1786 = vsub.f32 %v1624, %v1766
      %v1787 = vsub.f32 %v1529, %v1765
      %v1788 = vsub.f32 %v1627, %v1766
      %v1789 = vsub.f32 %v1531, %v1765
      %v1790 = vsub.f32 %v1629, %v1766
      %v1791 = vsub.f32 %v1534, %v1765
      %v1792 = vsub.f32 %v1632, %v1766
      %v1793 = vsub.f32 %v1536, %v1765
      %v1794 = vsub.f32 %v1634, %v1766
      %v1795 = vsub.f32 %v1539, %v1765
      %v1796 = vsub.f32 %v1637, %v1766
      %v1797 = vsub.f32 %v1541, %v1765
      %v1798 = vsub.f32 %v1639, %v1766
      %v1799 = vadd.f32 %v1763, 1e-05
      %v1800 = vadd.f32 %v1764, 1e-05
      %v1801 = vrsqrt.pop %v1799
      %v1802 = vmul.f32 %v1801, %v1799
      %v1803 = vmul.f32 %v1802, %v1801
      %v1804 = vmul.f32 0.5, %v1803
      %v1805 = vsub.f32 1.5, %v1804
      %v1806 = vmul.f32 %v1801, %v1805
      %vm1807 = vweird.f32 %v1799
      %vm1808 = vweird.f32 %v1801
      %vm1809 = vmor %vm1807, %vm1808
      %v1810 = vsel %vm1809, %v1801, %v1806
      %v1811 = vrsqrt.pop %v1800
      %v1812 = vmul.f32 %v1811, %v1800
      %v1813 = vmul.f32 %v1812, %v1811
      %v1814 = vmul.f32 0.5, %v1813
      %v1815 = vsub.f32 1.5, %v1814
      %v1816 = vmul.f32 %v1811, %v1815
      %vm1817 = vweird.f32 %v1800
      %vm1818 = vweird.f32 %v1811
      %vm1819 = vmor %vm1817, %vm1818
      %v1820 = vsel %vm1819, %v1811, %v1816
      %v1821 = vperm.slane %v1810, 0
      %v1822 = vperm.slane %v1820, 0
      %v1823 = vmul.f32 %v1767, %v1821
      %v1824 = vmul.f32 %v1768, %v1822
      %v1825 = vmul.f32 %v1769, %v1821
      %v1826 = vmul.f32 %v1770, %v1822
      %v1827 = vmul.f32 %v1771, %v1821
      %v1828 = vmul.f32 %v1772, %v1822
      %v1829 = vmul.f32 %v1773, %v1821
      %v1830 = vmul.f32 %v1774, %v1822
      %v1831 = vmul.f32 %v1775, %v1821
      %v1832 = vmul.f32 %v1776, %v1822
      %v1833 = vmul.f32 %v1777, %v1821
      %v1834 = vmul.f32 %v1778, %v1822
      %v1835 = vmul.f32 %v1779, %v1821
      %v1836 = vmul.f32 %v1780, %v1822
      %v1837 = vmul.f32 %v1781, %v1821
      %v1838 = vmul.f32 %v1782, %v1822
      %v1839 = vmul.f32 %v1783, %v1821
      %v1840 = vmul.f32 %v1784, %v1822
      %v1841 = vmul.f32 %v1785, %v1821
      %v1842 = vmul.f32 %v1786, %v1822
      %v1843 = vmul.f32 %v1787, %v1821
      %v1844 = vmul.f32 %v1788, %v1822
      %v1845 = vmul.f32 %v1789, %v1821
      %v1846 = vmul.f32 %v1790, %v1822
      %v1847 = vmul.f32 %v1791, %v1821
      %v1848 = vmul.f32 %v1792, %v1822
      %v1849 = vmul.f32 %v1793, %v1821
      %v1850 = vmul.f32 %v1794, %v1822
      %v1851 = vmul.f32 %v1795, %v1821
      %v1852 = vmul.f32 %v1796, %v1822
      %v1853 = vmul.f32 %v1797, %v1821
      %v1854 = vmul.f32 %v1798, %v1822
      %v1856 = vperm.slane %v1641, 0
      %v1857 = vperm.slane %v1641, 1
      %v1860 = vmul.f32 %v1823, %v1856
      %v1861 = vmul.f32 %v1824, %v1857
      %v1862 = vmul.f32 %v1825, %v1856
      %v1863 = vmul.f32 %v1826, %v1857
      %v1864 = vmul.f32 %v1827, %v1856
      %v1865 = vmul.f32 %v1828, %v1857
      %v1866 = vmul.f32 %v1829, %v1856
      %v1867 = vmul.f32 %v1830, %v1857
      %v1868 = vmul.f32 %v1831, %v1856
      %v1869 = vmul.f32 %v1832, %v1857
      %v1870 = vmul.f32 %v1833, %v1856
      %v1871 = vmul.f32 %v1834, %v1857
      %v1872 = vmul.f32 %v1835, %v1856
      %v1873 = vmul.f32 %v1836, %v1857
      %v1874 = vmul.f32 %v1837, %v1856
      %v1875 = vmul.f32 %v1838, %v1857
      %v1876 = vmul.f32 %v1839, %v1856
      %v1877 = vmul.f32 %v1840, %v1857
      %v1878 = vmul.f32 %v1841, %v1856
      %v1879 = vmul.f32 %v1842, %v1857
      %v1880 = vmul.f32 %v1843, %v1856
      %v1881 = vmul.f32 %v1844, %v1857
      %v1882 = vmul.f32 %v1845, %v1856
      %v1883 = vmul.f32 %v1846, %v1857
      %v1884 = vmul.f32 %v1847, %v1856
      %v1885 = vmul.f32 %v1848, %v1857
      %v1886 = vmul.f32 %v1849, %v1856
      %v1887 = vmul.f32 %v1850, %v1857
      %v1888 = vmul.f32 %v1851, %v1856
      %v1889 = vmul.f32 %v1852, %v1857
      %v1890 = vmul.f32 %v1853, %v1856
      %v1891 = vmul.f32 %v1854, %v1857
      %v1893 = vperm.slane %v1642, 0
      %v1894 = vperm.slane %v1642, 1
      %v1897 = vadd.f32 %v1860, %v1893
      %v1898 = vadd.f32 %v1861, %v1894
      %v1899 = vadd.f32 %v1862, %v1893
      %v1900 = vadd.f32 %v1863, %v1894
      %v1901 = vadd.f32 %v1864, %v1893
      %v1902 = vadd.f32 %v1865, %v1894
      %v1903 = vadd.f32 %v1866, %v1893
      %v1904 = vadd.f32 %v1867, %v1894
      %v1905 = vadd.f32 %v1868, %v1893
      %v1906 = vadd.f32 %v1869, %v1894
      %v1907 = vadd.f32 %v1870, %v1893
      %v1908 = vadd.f32 %v1871, %v1894
      %v1909 = vadd.f32 %v1872, %v1893
      %v1910 = vadd.f32 %v1873, %v1894
      %v1911 = vadd.f32 %v1874, %v1893
      %v1912 = vadd.f32 %v1875, %v1894
      %v1913 = vadd.f32 %v1876, %v1893
      %v1914 = vadd.f32 %v1877, %v1894
      %v1915 = vadd.f32 %v1878, %v1893
      %v1916 = vadd.f32 %v1879, %v1894
      %v1917 = vadd.f32 %v1880, %v1893
      %v1918 = vadd.f32 %v1881, %v1894
      %v1919 = vadd.f32 %v1882, %v1893
      %v1920 = vadd.f32 %v1883, %v1894
      %v1921 = vadd.f32 %v1884, %v1893
      %v1922 = vadd.f32 %v1885, %v1894
      %v1923 = vadd.f32 %v1886, %v1893
      %v1924 = vadd.f32 %v1887, %v1894
      %v1925 = vadd.f32 %v1888, %v1893
      %v1926 = vadd.f32 %v1889, %v1894
      %v1927 = vadd.f32 %v1890, %v1893
      %v1928 = vadd.f32 %v1891, %v1894
      %v1929 = vmax.f32 %v1897, 0.0
      %v1930 = vmax.f32 %v1898, 0.0
      %v1931 = vmax.f32 %v1899, 0.0
      %v1932 = vmax.f32 %v1900, 0.0
      %v1933 = vmax.f32 %v1901, 0.0
      %v1934 = vmax.f32 %v1902, 0.0
      %v1935 = vmax.f32 %v1903, 0.0
      %v1936 = vmax.f32 %v1904, 0.0
      %v1937 = vmax.f32 %v1905, 0.0
      %v1938 = vmax.f32 %v1906, 0.0
      %v1939 = vmax.f32 %v1907, 0.0
      %v1940 = vmax.f32 %v1908, 0.0
      %v1941 = vmax.f32 %v1909, 0.0
      %v1942 = vmax.f32 %v1910, 0.0
      %v1943 = vmax.f32 %v1911, 0.0
      %v1944 = vmax.f32 %v1912, 0.0
      %v1945 = vmax.f32 %v1913, 0.0
      %v1946 = vmax.f32 %v1914, 0.0
      %v1947 = vmax.f32 %v1915, 0.0
      %v1948 = vmax.f32 %v1916, 0.0
      %v1949 = vmax.f32 %v1917, 0.0
      %v1950 = vmax.f32 %v1918, 0.0
      %v1951 = vmax.f32 %v1919, 0.0
      %v1952 = vmax.f32 %v1920, 0.0
      %v1953 = vmax.f32 %v1921, 0.0
      %v1954 = vmax.f32 %v1922, 0.0
      %v1955 = vmax.f32 %v1923, 0.0
      %v1956 = vmax.f32 %v1924, 0.0
      %v1957 = vmax.f32 %v1925, 0.0
      %v1958 = vmax.f32 %v1926, 0.0
      %v1959 = vmax.f32 %v1927, 0.0
      %v1960 = vmax.f32 %v1928, 0.0
      %v1961 = vpack.c.bf16 %v1931, %v1929
      %v1962 = vpack.c.bf16 %v1932, %v1930
      %v1963 = vpack.c.bf16 %v1935, %v1933
      %v1964 = vpack.c.bf16 %v1936, %v1934
      %v1965 = vpack.c.bf16 %v1939, %v1937
      %v1966 = vpack.c.bf16 %v1940, %v1938
      %v1967 = vpack.c.bf16 %v1943, %v1941
      %v1968 = vpack.c.bf16 %v1944, %v1942
      %v1969 = vpack.c.bf16 %v1947, %v1945
      %v1970 = vpack.c.bf16 %v1948, %v1946
      %v1971 = vpack.c.bf16 %v1951, %v1949
      %v1972 = vpack.c.bf16 %v1952, %v1950
      %v1973 = vpack.c.bf16 %v1955, %v1953
      %v1974 = vpack.c.bf16 %v1956, %v1954
      %v1975 = vpack.c.bf16 %v1959, %v1957
      %v1976 = vpack.c.bf16 %v1960, %v1958
      %v1977 = vld [vmem:[%s7] sm:$0xff]
      %v1978 = vld [vmem:[%s7 + $0x8] sm:$0xff]
      %v1979 = vld [vmem:[%s7 + $0x10] sm:$0xff]
      %v1980 = vld [vmem:[%s7 + $0x18] sm:$0xff]
      %v1981 = vld [vmem:[%s7 + $0x20] sm:$0xff]
      %v1982 = vld [vmem:[%s7 + $0x28] sm:$0xff]
      %v1983 = vld [vmem:[%s7 + $0x30] sm:$0xff]
      %v1984 = vld [vmem:[%s7 + $0x38] sm:$0xff]
      %v1985 = vld [vmem:[%s7 + $0x40] sm:$0xff]
      %v1986 = vld [vmem:[%s7 + $0x48] sm:$0xff]
      %v1987 = vld [vmem:[%s7 + $0x50] sm:$0xff]
      %v1988 = vld [vmem:[%s7 + $0x58] sm:$0xff]
      %v1989 = vld [vmem:[%s7 + $0x60] sm:$0xff]
      %v1990 = vld [vmem:[%s7 + $0x68] sm:$0xff]
      %v1991 = vld [vmem:[%s7 + $0x70] sm:$0xff]
      %v1992 = vld [vmem:[%s7 + $0x78] sm:$0xff]
      %v1993 = vld [vmem:[%s7 + $0x80] sm:$0xff]
      %v1994 = vld [vmem:[%s7 + $0x88] sm:$0xff]
      %v1995 = vld [vmem:[%s7 + $0x90] sm:$0xff]
      %v1996 = vld [vmem:[%s7 + $0x98] sm:$0xff]
      %v1997 = vld [vmem:[%s7 + $0xa0] sm:$0xff]
      %v1998 = vld [vmem:[%s7 + $0xa8] sm:$0xff]
      %v1999 = vld [vmem:[%s7 + $0xb0] sm:$0xff]
      %v2000 = vld [vmem:[%s7 + $0xb8] sm:$0xff]
      %v2001 = vld [vmem:[%s7 + $0xc0] sm:$0xff]
      %v2002 = vld [vmem:[%s7 + $0xc8] sm:$0xff]
      %v2003 = vld [vmem:[%s7 + $0xd0] sm:$0xff]
      %v2004 = vld [vmem:[%s7 + $0xd8] sm:$0xff]
      %v2005 = vld [vmem:[%s7 + $0xe0] sm:$0xff]
      %v2006 = vld [vmem:[%s7 + $0xe8] sm:$0xff]
      %v2007 = vld [vmem:[%s7 + $0xf0] sm:$0xff]
      %v2008 = vld [vmem:[%s7 + $0xf8] sm:$0xff]
      %v2041 = vunpack.c.l.b16 %v1977
      %v2042 = vunpack.c.h.b16 %v1977
      %v2043 = vunpack.c.l.b16 %v1978
      %v2044 = vunpack.c.h.b16 %v1978
      %v2045 = vunpack.c.l.b16 %v1979
      %v2046 = vunpack.c.h.b16 %v1979
      %v2047 = vunpack.c.l.b16 %v1980
      %v2048 = vunpack.c.h.b16 %v1980
      %v2049 = vunpack.c.l.b16 %v1981
      %v2050 = vunpack.c.h.b16 %v1981
      %v2051 = vunpack.c.l.b16 %v1982
      %v2052 = vunpack.c.h.b16 %v1982
      %v2053 = vunpack.c.l.b16 %v1983
      %v2054 = vunpack.c.h.b16 %v1983
      %v2055 = vunpack.c.l.b16 %v1984
      %v2056 = vunpack.c.h.b16 %v1984
      %v2057 = vunpack.c.l.b16 %v1985
      %v2058 = vunpack.c.h.b16 %v1985
      %v2059 = vunpack.c.l.b16 %v1986
      %v2060 = vunpack.c.h.b16 %v1986
      %v2061 = vunpack.c.l.b16 %v1987
      %v2062 = vunpack.c.h.b16 %v1987
      %v2063 = vunpack.c.l.b16 %v1988
      %v2064 = vunpack.c.h.b16 %v1988
      %v2065 = vunpack.c.l.b16 %v1989
      %v2066 = vunpack.c.h.b16 %v1989
      %v2067 = vunpack.c.l.b16 %v1990
      %v2068 = vunpack.c.h.b16 %v1990
      %v2069 = vunpack.c.l.b16 %v1991
      %v2070 = vunpack.c.h.b16 %v1991
      %v2071 = vunpack.c.l.b16 %v1992
      %v2072 = vunpack.c.h.b16 %v1992
      %v2073 = vunpack.c.l.b16 %v1993
      %v2074 = vunpack.c.h.b16 %v1993
      %v2075 = vunpack.c.l.b16 %v1994
      %v2076 = vunpack.c.h.b16 %v1994
      %v2077 = vunpack.c.l.b16 %v1995
      %v2078 = vunpack.c.h.b16 %v1995
      %v2079 = vunpack.c.l.b16 %v1996
      %v2080 = vunpack.c.h.b16 %v1996
      %v2081 = vunpack.c.l.b16 %v1997
      %v2082 = vunpack.c.h.b16 %v1997
      %v2083 = vunpack.c.l.b16 %v1998
      %v2084 = vunpack.c.h.b16 %v1998
      %v2085 = vunpack.c.l.b16 %v1999
      %v2086 = vunpack.c.h.b16 %v1999
      %v2087 = vunpack.c.l.b16 %v2000
      %v2088 = vunpack.c.h.b16 %v2000
      %v2089 = vunpack.c.l.b16 %v2001
      %v2090 = vunpack.c.h.b16 %v2001
      %v2091 = vunpack.c.l.b16 %v2002
      %v2092 = vunpack.c.h.b16 %v2002
      %v2093 = vunpack.c.l.b16 %v2003
      %v2094 = vunpack.c.h.b16 %v2003
      %v2095 = vunpack.c.l.b16 %v2004
      %v2096 = vunpack.c.h.b16 %v2004
      %v2097 = vunpack.c.l.b16 %v2005
      %v2098 = vunpack.c.h.b16 %v2005
      %v2099 = vunpack.c.l.b16 %v2006
      %v2100 = vunpack.c.h.b16 %v2006
      %v2101 = vunpack.c.l.b16 %v2007
      %v2102 = vunpack.c.h.b16 %v2007
      %v2103 = vunpack.c.l.b16 %v2008
      %v2104 = vunpack.c.h.b16 %v2008
      %v2105 = vpack.c.b16 %v2043, %v2041
      %v2106 = vpack.c.b16 %v2044, %v2042
      %v2107 = vpack.c.b16 %v2047, %v2045
      %v2108 = vpack.c.b16 %v2048, %v2046
      %v2109 = vpack.c.b16 %v2051, %v2049
      %v2110 = vpack.c.b16 %v2052, %v2050
      %v2111 = vpack.c.b16 %v2055, %v2053
      %v2112 = vpack.c.b16 %v2056, %v2054
      %v2113 = vpack.c.b16 %v2059, %v2057
      %v2114 = vpack.c.b16 %v2060, %v2058
      %v2115 = vpack.c.b16 %v2063, %v2061
      %v2116 = vpack.c.b16 %v2064, %v2062
      %v2117 = vpack.c.b16 %v2067, %v2065
      %v2118 = vpack.c.b16 %v2068, %v2066
      %v2119 = vpack.c.b16 %v2071, %v2069
      %v2120 = vpack.c.b16 %v2072, %v2070
      %v2121 = vpack.c.b16 %v2075, %v2073
      %v2122 = vpack.c.b16 %v2076, %v2074
      %v2123 = vpack.c.b16 %v2079, %v2077
      %v2124 = vpack.c.b16 %v2080, %v2078
      %v2125 = vpack.c.b16 %v2083, %v2081
      %v2126 = vpack.c.b16 %v2084, %v2082
      %v2127 = vpack.c.b16 %v2087, %v2085
      %v2128 = vpack.c.b16 %v2088, %v2086
      %v2129 = vpack.c.b16 %v2091, %v2089
      %v2130 = vpack.c.b16 %v2092, %v2090
      %v2131 = vpack.c.b16 %v2095, %v2093
      %v2132 = vpack.c.b16 %v2096, %v2094
      %v2133 = vpack.c.b16 %v2099, %v2097
      %v2134 = vpack.c.b16 %v2100, %v2098
      %v2135 = vpack.c.b16 %v2103, %v2101
      %v2136 = vpack.c.b16 %v2104, %v2102
      %2169 = vmatpush.bf16.msra.mxu0 %v2119
      %2170 = vmatpush.bf16.msra.mxu0 %v2117
      %2171 = vmatpush.bf16.msra.mxu0 %v2115
      %2172 = vmatpush.bf16.msra.mxu0 %v2113
      %2173 = vmatpush.bf16.msra.mxu0 %v2111
      %2174 = vmatpush.bf16.msra.mxu0 %v2109
      %2175 = vmatpush.bf16.msra.mxu0 %v2107
      %2176 = vmatpush.bf16.msra.mxu0 %v2105
      %2177 = vmatmul.bf16.gmra.mxu0 %v1961
      %v2178 = vpop.f32.mrf.mxu0
      %v2179 = vadd.f32 0.0, %v2178
      %v2180 = vpop.f32.mrf.mxu0
      %v2181 = vadd.f32 0.0, %v2180
      %2182 = vmatmul.bf16.gmra.mxu0 %v1963
      %v2183 = vpop.f32.mrf.mxu0
      %v2184 = vadd.f32 0.0, %v2183
      %v2185 = vpop.f32.mrf.mxu0
      %v2186 = vadd.f32 0.0, %v2185
      %2187 = vmatmul.bf16.gmra.mxu0 %v1965
      %v2188 = vpop.f32.mrf.mxu0
      %v2189 = vadd.f32 0.0, %v2188
      %v2190 = vpop.f32.mrf.mxu0
      %v2191 = vadd.f32 0.0, %v2190
      %2192 = vmatmul.bf16.gmra.mxu0 %v1967
      %v2193 = vpop.f32.mrf.mxu0
      %v2194 = vadd.f32 0.0, %v2193
      %v2195 = vpop.f32.mrf.mxu0
      %v2196 = vadd.f32 0.0, %v2195
      %2197 = vmatmul.bf16.gmra.mxu0 %v1969
      %v2198 = vpop.f32.mrf.mxu0
      %v2199 = vadd.f32 0.0, %v2198
      %v2200 = vpop.f32.mrf.mxu0
      %v2201 = vadd.f32 0.0, %v2200
      %2202 = vmatmul.bf16.gmra.mxu0 %v1971
      %v2203 = vpop.f32.mrf.mxu0
      %v2204 = vadd.f32 0.0, %v2203
      %v2205 = vpop.f32.mrf.mxu0
      %v2206 = vadd.f32 0.0, %v2205
      %2207 = vmatmul.bf16.gmra.mxu0 %v1973
      %v2208 = vpop.f32.mrf.mxu0
      %v2209 = vadd.f32 0.0, %v2208
      %v2210 = vpop.f32.mrf.mxu0
      %v2211 = vadd.f32 0.0, %v2210
      %2212 = vmatmul.bf16.gmra.mxu0 %v1975
      %v2213 = vpop.f32.mrf.mxu0
      %v2214 = vadd.f32 0.0, %v2213
      %v2215 = vpop.f32.mrf.mxu0
      %v2216 = vadd.f32 0.0, %v2215
      %2217 = vdwg.mxu0
      %2218 = vmatpush.bf16.msra.mxu0 %v2135
      %2219 = vmatpush.bf16.msra.mxu0 %v2133
      %2220 = vmatpush.bf16.msra.mxu0 %v2131
      %2221 = vmatpush.bf16.msra.mxu0 %v2129
      %2222 = vmatpush.bf16.msra.mxu0 %v2127
      %2223 = vmatpush.bf16.msra.mxu0 %v2125
      %2224 = vmatpush.bf16.msra.mxu0 %v2123
      %2225 = vmatpush.bf16.msra.mxu0 %v2121
      %2226 = vmatmul.bf16.gmra.mxu0 %v1962
      %v2227 = vpop.f32.mrf.mxu0
      %v2228 = vadd.f32 %v2179, %v2227
      %v2229 = vpop.f32.mrf.mxu0
      %v2230 = vadd.f32 %v2181, %v2229
      %2231 = vmatmul.bf16.gmra.mxu0 %v1964
      %v2232 = vpop.f32.mrf.mxu0
      %v2233 = vadd.f32 %v2184, %v2232
      %v2234 = vpop.f32.mrf.mxu0
      %v2235 = vadd.f32 %v2186, %v2234
      %2236 = vmatmul.bf16.gmra.mxu0 %v1966
      %v2237 = vpop.f32.mrf.mxu0
      %v2238 = vadd.f32 %v2189, %v2237
      %v2239 = vpop.f32.mrf.mxu0
      %v2240 = vadd.f32 %v2191, %v2239
      %2241 = vmatmul.bf16.gmra.mxu0 %v1968
      %v2242 = vpop.f32.mrf.mxu0
      %v2243 = vadd.f32 %v2194, %v2242
      %v2244 = vpop.f32.mrf.mxu0
      %v2245 = vadd.f32 %v2196, %v2244
      %2246 = vmatmul.bf16.gmra.mxu0 %v1970
      %v2247 = vpop.f32.mrf.mxu0
      %v2248 = vadd.f32 %v2199, %v2247
      %v2249 = vpop.f32.mrf.mxu0
      %v2250 = vadd.f32 %v2201, %v2249
      %2251 = vmatmul.bf16.gmra.mxu0 %v1972
      %v2252 = vpop.f32.mrf.mxu0
      %v2253 = vadd.f32 %v2204, %v2252
      %v2254 = vpop.f32.mrf.mxu0
      %v2255 = vadd.f32 %v2206, %v2254
      %2256 = vmatmul.bf16.gmra.mxu0 %v1974
      %v2257 = vpop.f32.mrf.mxu0
      %v2258 = vadd.f32 %v2209, %v2257
      %v2259 = vpop.f32.mrf.mxu0
      %v2260 = vadd.f32 %v2211, %v2259
      %2261 = vmatmul.bf16.gmra.mxu0 %v1976
      %v2262 = vpop.f32.mrf.mxu0
      %v2263 = vadd.f32 %v2214, %v2262
      %v2264 = vpop.f32.mrf.mxu0
      %v2265 = vadd.f32 %v2216, %v2264
      %2266 = vdwg.mxu0
      %2267 = vmatpush.bf16.msra.mxu0 %v2120
      %2268 = vmatpush.bf16.msra.mxu0 %v2118
      %2269 = vmatpush.bf16.msra.mxu0 %v2116
      %2270 = vmatpush.bf16.msra.mxu0 %v2114
      %2271 = vmatpush.bf16.msra.mxu0 %v2112
      %2272 = vmatpush.bf16.msra.mxu0 %v2110
      %2273 = vmatpush.bf16.msra.mxu0 %v2108
      %2274 = vmatpush.bf16.msra.mxu0 %v2106
      %2275 = vmatmul.bf16.gmra.mxu0 %v1961
      %v2276 = vpop.f32.mrf.mxu0
      %v2277 = vadd.f32 0.0, %v2276
      %v2278 = vpop.f32.mrf.mxu0
      %v2279 = vadd.f32 0.0, %v2278
      %2280 = vmatmul.bf16.gmra.mxu0 %v1963
      %v2281 = vpop.f32.mrf.mxu0
      %v2282 = vadd.f32 0.0, %v2281
      %v2283 = vpop.f32.mrf.mxu0
      %v2284 = vadd.f32 0.0, %v2283
      %2285 = vmatmul.bf16.gmra.mxu0 %v1965
      %v2286 = vpop.f32.mrf.mxu0
      %v2287 = vadd.f32 0.0, %v2286
      %v2288 = vpop.f32.mrf.mxu0
      %v2289 = vadd.f32 0.0, %v2288
      %2290 = vmatmul.bf16.gmra.mxu0 %v1967
      %v2291 = vpop.f32.mrf.mxu0
      %v2292 = vadd.f32 0.0, %v2291
      %v2293 = vpop.f32.mrf.mxu0
      %v2294 = vadd.f32 0.0, %v2293
      %2295 = vmatmul.bf16.gmra.mxu0 %v1969
      %v2296 = vpop.f32.mrf.mxu0
      %v2297 = vadd.f32 0.0, %v2296
      %v2298 = vpop.f32.mrf.mxu0
      %v2299 = vadd.f32 0.0, %v2298
      %2300 = vmatmul.bf16.gmra.mxu0 %v1971
      %v2301 = vpop.f32.mrf.mxu0
      %v2302 = vadd.f32 0.0, %v2301
      %v2303 = vpop.f32.mrf.mxu0
      %v2304 = vadd.f32 0.0, %v2303
      %2305 = vmatmul.bf16.gmra.mxu0 %v1973
      %v2306 = vpop.f32.mrf.mxu0
      %v2307 = vadd.f32 0.0, %v2306
      %v2308 = vpop.f32.mrf.mxu0
      %v2309 = vadd.f32 0.0, %v2308
      %2310 = vmatmul.bf16.gmra.mxu0 %v1975
      %v2311 = vpop.f32.mrf.mxu0
      %v2312 = vadd.f32 0.0, %v2311
      %v2313 = vpop.f32.mrf.mxu0
      %v2314 = vadd.f32 0.0, %v2313
      %2315 = vdwg.mxu0
      %2316 = vmatpush.bf16.msra.mxu0 %v2136
      %2317 = vmatpush.bf16.msra.mxu0 %v2134
      %2318 = vmatpush.bf16.msra.mxu0 %v2132
      %2319 = vmatpush.bf16.msra.mxu0 %v2130
      %2320 = vmatpush.bf16.msra.mxu0 %v2128
      %2321 = vmatpush.bf16.msra.mxu0 %v2126
      %2322 = vmatpush.bf16.msra.mxu0 %v2124
      %2323 = vmatpush.bf16.msra.mxu0 %v2122
      %2324 = vmatmul.bf16.gmra.mxu0 %v1962
      %v2325 = vpop.f32.mrf.mxu0
      %v2326 = vadd.f32 %v2277, %v2325
      %v2327 = vpop.f32.mrf.mxu0
      %v2328 = vadd.f32 %v2279, %v2327
      %2329 = vmatmul.bf16.gmra.mxu0 %v1964
      %v2330 = vpop.f32.mrf.mxu0
      %v2331 = vadd.f32 %v2282, %v2330
      %v2332 = vpop.f32.mrf.mxu0
      %v2333 = vadd.f32 %v2284, %v2332
      %2334 = vmatmul.bf16.gmra.mxu0 %v1966
      %v2335 = vpop.f32.mrf.mxu0
      %v2336 = vadd.f32 %v2287, %v2335
      %v2337 = vpop.f32.mrf.mxu0
      %v2338 = vadd.f32 %v2289, %v2337
      %2339 = vmatmul.bf16.gmra.mxu0 %v1968
      %v2340 = vpop.f32.mrf.mxu0
      %v2341 = vadd.f32 %v2292, %v2340
      %v2342 = vpop.f32.mrf.mxu0
      %v2343 = vadd.f32 %v2294, %v2342
      %2344 = vmatmul.bf16.gmra.mxu0 %v1970
      %v2345 = vpop.f32.mrf.mxu0
      %v2346 = vadd.f32 %v2297, %v2345
      %v2347 = vpop.f32.mrf.mxu0
      %v2348 = vadd.f32 %v2299, %v2347
      %2349 = vmatmul.bf16.gmra.mxu0 %v1972
      %v2350 = vpop.f32.mrf.mxu0
      %v2351 = vadd.f32 %v2302, %v2350
      %v2352 = vpop.f32.mrf.mxu0
      %v2353 = vadd.f32 %v2304, %v2352
      %2354 = vmatmul.bf16.gmra.mxu0 %v1974
      %v2355 = vpop.f32.mrf.mxu0
      %v2356 = vadd.f32 %v2307, %v2355
      %v2357 = vpop.f32.mrf.mxu0
      %v2358 = vadd.f32 %v2309, %v2357
      %2359 = vmatmul.bf16.gmra.mxu0 %v1976
      %v2360 = vpop.f32.mrf.mxu0
      %v2361 = vadd.f32 %v2312, %v2360
      %v2362 = vpop.f32.mrf.mxu0
      %v2363 = vadd.f32 %v2314, %v2362
      %2364 = vdwg.mxu0
      %2365 = vmatpush.msra.mxu0 %v2265
      %2366 = vmatpush.msra.mxu0 %v2263
      %2367 = vmatpush.msra.mxu0 %v2260
      %2368 = vmatpush.msra.mxu0 %v2258
      %2369 = vmatpush.msra.mxu0 %v2255
      %2370 = vmatpush.msra.mxu0 %v2253
      %2371 = vmatpush.msra.mxu0 %v2250
      %2372 = vmatpush.msra.mxu0 %v2248
      %2373 = vmatpush.msra.mxu0 %v2245
      %2374 = vmatpush.msra.mxu0 %v2243
      %2375 = vmatpush.msra.mxu0 %v2240
      %2376 = vmatpush.msra.mxu0 %v2238
      %2377 = vmatpush.msra.mxu0 %v2235
      %2378 = vmatpush.msra.mxu0 %v2233
      %2379 = vmatpush.msra.mxu0 %v2230
      %2380 = vmatpush.msra.mxu0 %v2228
      %2381 = vmatmul.f32.gmra.mxu0 1.0
      %v2382 = vpop.f32.mrf.mxu0
      %v2383 = vadd.f32 0.0, %v2382
      %2384 = vdwg.mxu0
      %2385 = vmatpush.msra.mxu0 %v2363
      %2386 = vmatpush.msra.mxu0 %v2361
      %2387 = vmatpush.msra.mxu0 %v2358
      %2388 = vmatpush.msra.mxu0 %v2356
      %2389 = vmatpush.msra.mxu0 %v2353
      %2390 = vmatpush.msra.mxu0 %v2351
      %2391 = vmatpush.msra.mxu0 %v2348
      %2392 = vmatpush.msra.mxu0 %v2346
      %2393 = vmatpush.msra.mxu0 %v2343
      %2394 = vmatpush.msra.mxu0 %v2341
      %2395 = vmatpush.msra.mxu0 %v2338
      %2396 = vmatpush.msra.mxu0 %v2336
      %2397 = vmatpush.msra.mxu0 %v2333
      %2398 = vmatpush.msra.mxu0 %v2331
      %2399 = vmatpush.msra.mxu0 %v2328
      %2400 = vmatpush.msra.mxu0 %v2326
      %2401 = vmatmul.f32.gmra.mxu0 1.0
      %v2402 = vpop.f32.mrf.mxu0
      %v2403 = vadd.f32 0.0, %v2402
      %2404 = vdwg.mxu0
      %v2405 = vmul.f32 %v2228, %v2228
      %v2406 = vmul.f32 %v2326, %v2326
      %v2407 = vmul.f32 %v2230, %v2230
      %v2408 = vmul.f32 %v2328, %v2328
      %v2409 = vmul.f32 %v2233, %v2233
      %v2410 = vmul.f32 %v2331, %v2331
      %v2411 = vmul.f32 %v2235, %v2235
      %v2412 = vmul.f32 %v2333, %v2333
      %v2413 = vmul.f32 %v2238, %v2238
      %v2414 = vmul.f32 %v2336, %v2336
      %v2415 = vmul.f32 %v2240, %v2240
      %v2416 = vmul.f32 %v2338, %v2338
      %v2417 = vmul.f32 %v2243, %v2243
      %v2418 = vmul.f32 %v2341, %v2341
      %v2419 = vmul.f32 %v2245, %v2245
      %v2420 = vmul.f32 %v2343, %v2343
      %v2421 = vmul.f32 %v2248, %v2248
      %v2422 = vmul.f32 %v2346, %v2346
      %v2423 = vmul.f32 %v2250, %v2250
      %v2424 = vmul.f32 %v2348, %v2348
      %v2425 = vmul.f32 %v2253, %v2253
      %v2426 = vmul.f32 %v2351, %v2351
      %v2427 = vmul.f32 %v2255, %v2255
      %v2428 = vmul.f32 %v2353, %v2353
      %v2429 = vmul.f32 %v2258, %v2258
      %v2430 = vmul.f32 %v2356, %v2356
      %v2431 = vmul.f32 %v2260, %v2260
      %v2432 = vmul.f32 %v2358, %v2358
      %v2433 = vmul.f32 %v2263, %v2263
      %v2434 = vmul.f32 %v2361, %v2361
      %v2435 = vmul.f32 %v2265, %v2265
      %v2436 = vmul.f32 %v2363, %v2363
      %2437 = vmatpush.msra.mxu0 %v2435
      %2438 = vmatpush.msra.mxu0 %v2433
      %2439 = vmatpush.msra.mxu0 %v2431
      %2440 = vmatpush.msra.mxu0 %v2429
      %2441 = vmatpush.msra.mxu0 %v2427
      %2442 = vmatpush.msra.mxu0 %v2425
      %2443 = vmatpush.msra.mxu0 %v2423
      %2444 = vmatpush.msra.mxu0 %v2421
      %2445 = vmatpush.msra.mxu0 %v2419
      %2446 = vmatpush.msra.mxu0 %v2417
      %2447 = vmatpush.msra.mxu0 %v2415
      %2448 = vmatpush.msra.mxu0 %v2413
      %2449 = vmatpush.msra.mxu0 %v2411
      %2450 = vmatpush.msra.mxu0 %v2409
      %2451 = vmatpush.msra.mxu0 %v2407
      %2452 = vmatpush.msra.mxu0 %v2405
      %2453 = vmatmul.f32.gmra.mxu0 1.0
      %v2454 = vpop.f32.mrf.mxu0
      %v2455 = vadd.f32 0.0, %v2454
      %2456 = vdwg.mxu0
      %2457 = vmatpush.msra.mxu0 %v2436
      %2458 = vmatpush.msra.mxu0 %v2434
      %2459 = vmatpush.msra.mxu0 %v2432
      %2460 = vmatpush.msra.mxu0 %v2430
      %2461 = vmatpush.msra.mxu0 %v2428
      %2462 = vmatpush.msra.mxu0 %v2426
      %2463 = vmatpush.msra.mxu0 %v2424
      %2464 = vmatpush.msra.mxu0 %v2422
      %2465 = vmatpush.msra.mxu0 %v2420
      %2466 = vmatpush.msra.mxu0 %v2418
      %2467 = vmatpush.msra.mxu0 %v2416
      %2468 = vmatpush.msra.mxu0 %v2414
      %2469 = vmatpush.msra.mxu0 %v2412
      %2470 = vmatpush.msra.mxu0 %v2410
      %2471 = vmatpush.msra.mxu0 %v2408
      %2472 = vmatpush.msra.mxu0 %v2406
      %2473 = vmatmul.f32.gmra.mxu0 1.0
      %v2474 = vpop.f32.mrf.mxu0
      %v2475 = vadd.f32 0.0, %v2474
      %2476 = vdwg.mxu0
      %v2477 = vmul.f32 %v2383, 0.0078125
      %v2478 = vmul.f32 %v2403, 0.0078125
      %v2479 = vmul.f32 %v2455, 0.0078125
      %v2480 = vmul.f32 %v2475, 0.0078125
      %v2481 = vmul.f32 %v2477, %v2477
      %v2482 = vmul.f32 %v2478, %v2478
      %v2483 = vsub.f32 %v2479, %v2481
      %v2484 = vsub.f32 %v2480, %v2482
      %v2485 = vmax.f32 %v2483, 0.0
      %v2486 = vmax.f32 %v2484, 0.0
      %v2487 = vperm.slane %v2477, 0
      %v2488 = vperm.slane %v2478, 0
      %v2489 = vsub.f32 %v2228, %v2487
      %v2490 = vsub.f32 %v2326, %v2488
      %v2491 = vsub.f32 %v2230, %v2487
      %v2492 = vsub.f32 %v2328, %v2488
      %v2493 = vsub.f32 %v2233, %v2487
      %v2494 = vsub.f32 %v2331, %v2488
      %v2495 = vsub.f32 %v2235, %v2487
      %v2496 = vsub.f32 %v2333, %v2488
      %v2497 = vsub.f32 %v2238, %v2487
      %v2498 = vsub.f32 %v2336, %v2488
      %v2499 = vsub.f32 %v2240, %v2487
      %v2500 = vsub.f32 %v2338, %v2488
      %v2501 = vsub.f32 %v2243, %v2487
      %v2502 = vsub.f32 %v2341, %v2488
      %v2503 = vsub.f32 %v2245, %v2487
      %v2504 = vsub.f32 %v2343, %v2488
      %v2505 = vsub.f32 %v2248, %v2487
      %v2506 = vsub.f32 %v2346, %v2488
      %v2507 = vsub.f32 %v2250, %v2487
      %v2508 = vsub.f32 %v2348, %v2488
      %v2509 = vsub.f32 %v2253, %v2487
      %v2510 = vsub.f32 %v2351, %v2488
      %v2511 = vsub.f32 %v2255, %v2487
      %v2512 = vsub.f32 %v2353, %v2488
      %v2513 = vsub.f32 %v2258, %v2487
      %v2514 = vsub.f32 %v2356, %v2488
      %v2515 = vsub.f32 %v2260, %v2487
      %v2516 = vsub.f32 %v2358, %v2488
      %v2517 = vsub.f32 %v2263, %v2487
      %v2518 = vsub.f32 %v2361, %v2488
      %v2519 = vsub.f32 %v2265, %v2487
      %v2520 = vsub.f32 %v2363, %v2488
      %v2521 = vadd.f32 %v2485, 1e-05
      %v2522 = vadd.f32 %v2486, 1e-05
      %v2523 = vrsqrt.pop %v2521
      %v2524 = vmul.f32 %v2523, %v2521
      %v2525 = vmul.f32 %v2524, %v2523
      %v2526 = vmul.f32 0.5, %v2525
      %v2527 = vsub.f32 1.5, %v2526
      %v2528 = vmul.f32 %v2523, %v2527
      %vm2529 = vweird.f32 %v2521
      %vm2530 = vweird.f32 %v2523
      %vm2531 = vmor %vm2529, %vm2530
      %v2532 = vsel %vm2531, %v2523, %v2528
      %v2533 = vrsqrt.pop %v2522
      %v2534 = vmul.f32 %v2533, %v2522
      %v2535 = vmul.f32 %v2534, %v2533
      %v2536 = vmul.f32 0.5, %v2535
      %v2537 = vsub.f32 1.5, %v2536
      %v2538 = vmul.f32 %v2533, %v2537
      %vm2539 = vweird.f32 %v2522
      %vm2540 = vweird.f32 %v2533
      %vm2541 = vmor %vm2539, %vm2540
      %v2542 = vsel %vm2541, %v2533, %v2538
      %v2543 = vperm.slane %v2532, 0
      %v2544 = vperm.slane %v2542, 0
      %v2545 = vmul.f32 %v2489, %v2543
      %v2546 = vmul.f32 %v2490, %v2544
      %v2547 = vmul.f32 %v2491, %v2543
      %v2548 = vmul.f32 %v2492, %v2544
      %v2549 = vmul.f32 %v2493, %v2543
      %v2550 = vmul.f32 %v2494, %v2544
      %v2551 = vmul.f32 %v2495, %v2543
      %v2552 = vmul.f32 %v2496, %v2544
      %v2553 = vmul.f32 %v2497, %v2543
      %v2554 = vmul.f32 %v2498, %v2544
      %v2555 = vmul.f32 %v2499, %v2543
      %v2556 = vmul.f32 %v2500, %v2544
      %v2557 = vmul.f32 %v2501, %v2543
      %v2558 = vmul.f32 %v2502, %v2544
      %v2559 = vmul.f32 %v2503, %v2543
      %v2560 = vmul.f32 %v2504, %v2544
      %v2561 = vmul.f32 %v2505, %v2543
      %v2562 = vmul.f32 %v2506, %v2544
      %v2563 = vmul.f32 %v2507, %v2543
      %v2564 = vmul.f32 %v2508, %v2544
      %v2565 = vmul.f32 %v2509, %v2543
      %v2566 = vmul.f32 %v2510, %v2544
      %v2567 = vmul.f32 %v2511, %v2543
      %v2568 = vmul.f32 %v2512, %v2544
      %v2569 = vmul.f32 %v2513, %v2543
      %v2570 = vmul.f32 %v2514, %v2544
      %v2571 = vmul.f32 %v2515, %v2543
      %v2572 = vmul.f32 %v2516, %v2544
      %v2573 = vmul.f32 %v2517, %v2543
      %v2574 = vmul.f32 %v2518, %v2544
      %v2575 = vmul.f32 %v2519, %v2543
      %v2576 = vmul.f32 %v2520, %v2544
      %v2577 = vpack.c.bf16 %v2547, %v2545
      %v2578 = vpack.c.bf16 %v2548, %v2546
      %v2579 = vpack.c.bf16 %v2551, %v2549
      %v2580 = vpack.c.bf16 %v2552, %v2550
      %v2581 = vpack.c.bf16 %v2555, %v2553
      %v2582 = vpack.c.bf16 %v2556, %v2554
      %v2583 = vpack.c.bf16 %v2559, %v2557
      %v2584 = vpack.c.bf16 %v2560, %v2558
      %v2585 = vpack.c.bf16 %v2563, %v2561
      %v2586 = vpack.c.bf16 %v2564, %v2562
      %v2587 = vpack.c.bf16 %v2567, %v2565
      %v2588 = vpack.c.bf16 %v2568, %v2566
      %v2589 = vpack.c.bf16 %v2571, %v2569
      %v2590 = vpack.c.bf16 %v2572, %v2570
      %v2591 = vpack.c.bf16 %v2575, %v2573
      %v2592 = vpack.c.bf16 %v2576, %v2574
      %v2593 = vld [vmem:[%s8] sm:$0xf]
      %v2594 = vld [vmem:[%s8 + $0x4] sm:$0xf]
      %v2595 = vld [vmem:[%s8 + $0x8] sm:$0xf]
      %v2596 = vld [vmem:[%s8 + $0xc] sm:$0xf]
      %v2597 = vld [vmem:[%s8 + $0x10] sm:$0xf]
      %v2598 = vld [vmem:[%s8 + $0x14] sm:$0xf]
      %v2599 = vld [vmem:[%s8 + $0x18] sm:$0xf]
      %v2600 = vld [vmem:[%s8 + $0x1c] sm:$0xf]
      %v2601 = vld [vmem:[%s8 + $0x20] sm:$0xf]
      %v2602 = vld [vmem:[%s8 + $0x24] sm:$0xf]
      %v2603 = vld [vmem:[%s8 + $0x28] sm:$0xf]
      %v2604 = vld [vmem:[%s8 + $0x2c] sm:$0xf]
      %v2605 = vld [vmem:[%s8 + $0x30] sm:$0xf]
      %v2606 = vld [vmem:[%s8 + $0x34] sm:$0xf]
      %v2607 = vld [vmem:[%s8 + $0x38] sm:$0xf]
      %v2608 = vld [vmem:[%s8 + $0x3c] sm:$0xf]
      %v2609 = vld [vmem:[%s8 + $0x40] sm:$0xf]
      %v2610 = vld [vmem:[%s8 + $0x44] sm:$0xf]
      %v2611 = vld [vmem:[%s8 + $0x48] sm:$0xf]
      %v2612 = vld [vmem:[%s8 + $0x4c] sm:$0xf]
      %v2613 = vld [vmem:[%s8 + $0x50] sm:$0xf]
      %v2614 = vld [vmem:[%s8 + $0x54] sm:$0xf]
      %v2615 = vld [vmem:[%s8 + $0x58] sm:$0xf]
      %v2616 = vld [vmem:[%s8 + $0x5c] sm:$0xf]
      %v2617 = vld [vmem:[%s8 + $0x60] sm:$0xf]
      %v2618 = vld [vmem:[%s8 + $0x64] sm:$0xf]
      %v2619 = vld [vmem:[%s8 + $0x68] sm:$0xf]
      %v2620 = vld [vmem:[%s8 + $0x6c] sm:$0xf]
      %v2621 = vld [vmem:[%s8 + $0x70] sm:$0xf]
      %v2622 = vld [vmem:[%s8 + $0x74] sm:$0xf]
      %v2623 = vld [vmem:[%s8 + $0x78] sm:$0xf]
      %v2624 = vld [vmem:[%s8 + $0x7c] sm:$0xf]
      %v2657 = vunpack.c.l.b16 %v2593
      %v2658 = vunpack.c.l.b16 %v2594
      %v2659 = vunpack.c.l.b16 %v2595
      %v2660 = vunpack.c.l.b16 %v2596
      %v2661 = vunpack.c.l.b16 %v2597
      %v2662 = vunpack.c.l.b16 %v2598
      %v2663 = vunpack.c.l.b16 %v2599
      %v2664 = vunpack.c.l.b16 %v2600
      %v2665 = vunpack.c.l.b16 %v2601
      %v2666 = vunpack.c.l.b16 %v2602
      %v2667 = vunpack.c.l.b16 %v2603
      %v2668 = vunpack.c.l.b16 %v2604
      %v2669 = vunpack.c.l.b16 %v2605
      %v2670 = vunpack.c.l.b16 %v2606
      %v2671 = vunpack.c.l.b16 %v2607
      %v2672 = vunpack.c.l.b16 %v2608
      %v2673 = vunpack.c.l.b16 %v2609
      %v2674 = vunpack.c.l.b16 %v2610
      %v2675 = vunpack.c.l.b16 %v2611
      %v2676 = vunpack.c.l.b16 %v2612
      %v2677 = vunpack.c.l.b16 %v2613
      %v2678 = vunpack.c.l.b16 %v2614
      %v2679 = vunpack.c.l.b16 %v2615
      %v2680 = vunpack.c.l.b16 %v2616
      %v2681 = vunpack.c.l.b16 %v2617
      %v2682 = vunpack.c.l.b16 %v2618
      %v2683 = vunpack.c.l.b16 %v2619
      %v2684 = vunpack.c.l.b16 %v2620
      %v2685 = vunpack.c.l.b16 %v2621
      %v2686 = vunpack.c.l.b16 %v2622
      %v2687 = vunpack.c.l.b16 %v2623
      %v2688 = vunpack.c.l.b16 %v2624
      %v2689 = vpack.c.b16 %v2658, %v2657
      %v2690 = vpack.c.b16 %v2660, %v2659
      %v2691 = vpack.c.b16 %v2662, %v2661
      %v2692 = vpack.c.b16 %v2664, %v2663
      %v2693 = vpack.c.b16 %v2666, %v2665
      %v2694 = vpack.c.b16 %v2668, %v2667
      %v2695 = vpack.c.b16 %v2670, %v2669
      %v2696 = vpack.c.b16 %v2672, %v2671
      %v2697 = vpack.c.b16 %v2674, %v2673
      %v2698 = vpack.c.b16 %v2676, %v2675
      %v2699 = vpack.c.b16 %v2678, %v2677
      %v2700 = vpack.c.b16 %v2680, %v2679
      %v2701 = vpack.c.b16 %v2682, %v2681
      %v2702 = vpack.c.b16 %v2684, %v2683
      %v2703 = vpack.c.b16 %v2686, %v2685
      %v2704 = vpack.c.b16 %v2688, %v2687
      %2721 = vmatpush.bf16.msra.mxu0 %v2696
      %2722 = vmatpush.bf16.msra.mxu0 %v2695
      %2723 = vmatpush.bf16.msra.mxu0 %v2694
      %2724 = vmatpush.bf16.msra.mxu0 %v2693
      %2725 = vmatpush.bf16.msra.mxu0 %v2692
      %2726 = vmatpush.bf16.msra.mxu0 %v2691
      %2727 = vmatpush.bf16.msra.mxu0 %v2690
      %2728 = vmatpush.bf16.msra.mxu0 %v2689
      %2729 = vmatmul.bf16.gmra.mxu0 %v2577
      %v2730 = vpop.f32.mrf.mxu0
      %v2731 = vadd.f32 0.0, %v2730
      %v2732 = vpop.f32.mrf.mxu0
      %v2733 = vadd.f32 0.0, %v2732
      %2734 = vmatmul.bf16.gmra.mxu0 %v2579
      %v2735 = vpop.f32.mrf.mxu0
      %v2736 = vadd.f32 0.0, %v2735
      %v2737 = vpop.f32.mrf.mxu0
      %v2738 = vadd.f32 0.0, %v2737
      %2739 = vmatmul.bf16.gmra.mxu0 %v2581
      %v2740 = vpop.f32.mrf.mxu0
      %v2741 = vadd.f32 0.0, %v2740
      %v2742 = vpop.f32.mrf.mxu0
      %v2743 = vadd.f32 0.0, %v2742
      %2744 = vmatmul.bf16.gmra.mxu0 %v2583
      %v2745 = vpop.f32.mrf.mxu0
      %v2746 = vadd.f32 0.0, %v2745
      %v2747 = vpop.f32.mrf.mxu0
      %v2748 = vadd.f32 0.0, %v2747
      %2749 = vmatmul.bf16.gmra.mxu0 %v2585
      %v2750 = vpop.f32.mrf.mxu0
      %v2751 = vadd.f32 0.0, %v2750
      %v2752 = vpop.f32.mrf.mxu0
      %v2753 = vadd.f32 0.0, %v2752
      %2754 = vmatmul.bf16.gmra.mxu0 %v2587
      %v2755 = vpop.f32.mrf.mxu0
      %v2756 = vadd.f32 0.0, %v2755
      %v2757 = vpop.f32.mrf.mxu0
      %v2758 = vadd.f32 0.0, %v2757
      %2759 = vmatmul.bf16.gmra.mxu0 %v2589
      %v2760 = vpop.f32.mrf.mxu0
      %v2761 = vadd.f32 0.0, %v2760
      %v2762 = vpop.f32.mrf.mxu0
      %v2763 = vadd.f32 0.0, %v2762
      %2764 = vmatmul.bf16.gmra.mxu0 %v2591
      %v2765 = vpop.f32.mrf.mxu0
      %v2766 = vadd.f32 0.0, %v2765
      %v2767 = vpop.f32.mrf.mxu0
      %v2768 = vadd.f32 0.0, %v2767
      %2769 = vdwg.mxu0
      %2770 = vmatpush.bf16.msra.mxu0 %v2704
      %2771 = vmatpush.bf16.msra.mxu0 %v2703
      %2772 = vmatpush.bf16.msra.mxu0 %v2702
      %2773 = vmatpush.bf16.msra.mxu0 %v2701
      %2774 = vmatpush.bf16.msra.mxu0 %v2700
      %2775 = vmatpush.bf16.msra.mxu0 %v2699
      %2776 = vmatpush.bf16.msra.mxu0 %v2698
      %2777 = vmatpush.bf16.msra.mxu0 %v2697
      %2778 = vmatmul.bf16.gmra.mxu0 %v2578
      %v2779 = vpop.f32.mrf.mxu0
      %v2780 = vadd.f32 %v2731, %v2779
      %v2781 = vpop.f32.mrf.mxu0
      %v2782 = vadd.f32 %v2733, %v2781
      %2783 = vmatmul.bf16.gmra.mxu0 %v2580
      %v2784 = vpop.f32.mrf.mxu0
      %v2785 = vadd.f32 %v2736, %v2784
      %v2786 = vpop.f32.mrf.mxu0
      %v2787 = vadd.f32 %v2738, %v2786
      %2788 = vmatmul.bf16.gmra.mxu0 %v2582
      %v2789 = vpop.f32.mrf.mxu0
      %v2790 = vadd.f32 %v2741, %v2789
      %v2791 = vpop.f32.mrf.mxu0
      %v2792 = vadd.f32 %v2743, %v2791
      %2793 = vmatmul.bf16.gmra.mxu0 %v2584
      %v2794 = vpop.f32.mrf.mxu0
      %v2795 = vadd.f32 %v2746, %v2794
      %v2796 = vpop.f32.mrf.mxu0
      %v2797 = vadd.f32 %v2748, %v2796
      %2798 = vmatmul.bf16.gmra.mxu0 %v2586
      %v2799 = vpop.f32.mrf.mxu0
      %v2800 = vadd.f32 %v2751, %v2799
      %v2801 = vpop.f32.mrf.mxu0
      %v2802 = vadd.f32 %v2753, %v2801
      %2803 = vmatmul.bf16.gmra.mxu0 %v2588
      %v2804 = vpop.f32.mrf.mxu0
      %v2805 = vadd.f32 %v2756, %v2804
      %v2806 = vpop.f32.mrf.mxu0
      %v2807 = vadd.f32 %v2758, %v2806
      %2808 = vmatmul.bf16.gmra.mxu0 %v2590
      %v2809 = vpop.f32.mrf.mxu0
      %v2810 = vadd.f32 %v2761, %v2809
      %v2811 = vpop.f32.mrf.mxu0
      %v2812 = vadd.f32 %v2763, %v2811
      %2813 = vmatmul.bf16.gmra.mxu0 %v2592
      %v2814 = vpop.f32.mrf.mxu0
      %v2815 = vadd.f32 %v2766, %v2814
      %v2816 = vpop.f32.mrf.mxu0
      %v2817 = vadd.f32 %v2768, %v2816
      %2818 = vdwg.mxu0
      %v2819 = vld [vmem:[%s9] sm:$0x1]
      %v2820 = vld [vmem:[%s10] sm:$0x1]
      %2821 = vmatpush.msra.mxu0 %v2817
      %2822 = vmatpush.msra.mxu0 %v2815
      %2823 = vmatpush.msra.mxu0 %v2812
      %2824 = vmatpush.msra.mxu0 %v2810
      %2825 = vmatpush.msra.mxu0 %v2807
      %2826 = vmatpush.msra.mxu0 %v2805
      %2827 = vmatpush.msra.mxu0 %v2802
      %2828 = vmatpush.msra.mxu0 %v2800
      %2829 = vmatpush.msra.mxu0 %v2797
      %2830 = vmatpush.msra.mxu0 %v2795
      %2831 = vmatpush.msra.mxu0 %v2792
      %2832 = vmatpush.msra.mxu0 %v2790
      %2833 = vmatpush.msra.mxu0 %v2787
      %2834 = vmatpush.msra.mxu0 %v2785
      %2835 = vmatpush.msra.mxu0 %v2782
      %2836 = vmatpush.msra.mxu0 %v2780
      %2837 = vmatmul.f32.gmra.mxu0 1.0
      %v2838 = vpop.f32.mrf.mxu0
      %v2839 = vadd.f32 0.0, %v2838
      %2840 = vdwg.mxu0
      %v2841 = vmul.f32 %v2780, %v2780
      %v2842 = vmul.f32 %v2782, %v2782
      %v2843 = vmul.f32 %v2785, %v2785
      %v2844 = vmul.f32 %v2787, %v2787
      %v2845 = vmul.f32 %v2790, %v2790
      %v2846 = vmul.f32 %v2792, %v2792
      %v2847 = vmul.f32 %v2795, %v2795
      %v2848 = vmul.f32 %v2797, %v2797
      %v2849 = vmul.f32 %v2800, %v2800
      %v2850 = vmul.f32 %v2802, %v2802
      %v2851 = vmul.f32 %v2805, %v2805
      %v2852 = vmul.f32 %v2807, %v2807
      %v2853 = vmul.f32 %v2810, %v2810
      %v2854 = vmul.f32 %v2812, %v2812
      %v2855 = vmul.f32 %v2815, %v2815
      %v2856 = vmul.f32 %v2817, %v2817
      %2857 = vmatpush.msra.mxu0 %v2856
      %2858 = vmatpush.msra.mxu0 %v2855
      %2859 = vmatpush.msra.mxu0 %v2854
      %2860 = vmatpush.msra.mxu0 %v2853
      %2861 = vmatpush.msra.mxu0 %v2852
      %2862 = vmatpush.msra.mxu0 %v2851
      %2863 = vmatpush.msra.mxu0 %v2850
      %2864 = vmatpush.msra.mxu0 %v2849
      %2865 = vmatpush.msra.mxu0 %v2848
      %2866 = vmatpush.msra.mxu0 %v2847
      %2867 = vmatpush.msra.mxu0 %v2846
      %2868 = vmatpush.msra.mxu0 %v2845
      %2869 = vmatpush.msra.mxu0 %v2844
      %2870 = vmatpush.msra.mxu0 %v2843
      %2871 = vmatpush.msra.mxu0 %v2842
      %2872 = vmatpush.msra.mxu0 %v2841
      %2873 = vmatmul.f32.gmra.mxu0 1.0
      %v2874 = vpop.f32.mrf.mxu0
      %v2875 = vadd.f32 0.0, %v2874
      %2876 = vdwg.mxu0
      %v2877 = vmul.f32 %v2839, 0.0078125
      %v2878 = vmul.f32 %v2875, 0.0078125
      %v2879 = vmul.f32 %v2877, %v2877
      %v2880 = vsub.f32 %v2878, %v2879
      %v2881 = vmax.f32 %v2880, 0.0
      %v2882 = vperm.slane %v2877, 0
      %v2883 = vsub.f32 %v2780, %v2882
      %v2884 = vsub.f32 %v2782, %v2882
      %v2885 = vsub.f32 %v2785, %v2882
      %v2886 = vsub.f32 %v2787, %v2882
      %v2887 = vsub.f32 %v2790, %v2882
      %v2888 = vsub.f32 %v2792, %v2882
      %v2889 = vsub.f32 %v2795, %v2882
      %v2890 = vsub.f32 %v2797, %v2882
      %v2891 = vsub.f32 %v2800, %v2882
      %v2892 = vsub.f32 %v2802, %v2882
      %v2893 = vsub.f32 %v2805, %v2882
      %v2894 = vsub.f32 %v2807, %v2882
      %v2895 = vsub.f32 %v2810, %v2882
      %v2896 = vsub.f32 %v2812, %v2882
      %v2897 = vsub.f32 %v2815, %v2882
      %v2898 = vsub.f32 %v2817, %v2882
      %v2899 = vadd.f32 %v2881, 1e-05
      %v2900 = vrsqrt.pop %v2899
      %v2901 = vmul.f32 %v2900, %v2899
      %v2902 = vmul.f32 %v2901, %v2900
      %v2903 = vmul.f32 0.5, %v2902
      %v2904 = vsub.f32 1.5, %v2903
      %v2905 = vmul.f32 %v2900, %v2904
      %vm2906 = vweird.f32 %v2899
      %vm2907 = vweird.f32 %v2900
      %vm2908 = vmor %vm2906, %vm2907
      %v2909 = vsel %vm2908, %v2900, %v2905
      %v2910 = vperm.slane %v2909, 0
      %v2911 = vmul.f32 %v2883, %v2910
      %v2912 = vmul.f32 %v2884, %v2910
      %v2913 = vmul.f32 %v2885, %v2910
      %v2914 = vmul.f32 %v2886, %v2910
      %v2915 = vmul.f32 %v2887, %v2910
      %v2916 = vmul.f32 %v2888, %v2910
      %v2917 = vmul.f32 %v2889, %v2910
      %v2918 = vmul.f32 %v2890, %v2910
      %v2919 = vmul.f32 %v2891, %v2910
      %v2920 = vmul.f32 %v2892, %v2910
      %v2921 = vmul.f32 %v2893, %v2910
      %v2922 = vmul.f32 %v2894, %v2910
      %v2923 = vmul.f32 %v2895, %v2910
      %v2924 = vmul.f32 %v2896, %v2910
      %v2925 = vmul.f32 %v2897, %v2910
      %v2926 = vmul.f32 %v2898, %v2910
      %v2928 = vperm.slane %v2819, 0
      %v2930 = vmul.f32 %v2911, %v2928
      %v2931 = vmul.f32 %v2912, %v2928
      %v2932 = vmul.f32 %v2913, %v2928
      %v2933 = vmul.f32 %v2914, %v2928
      %v2934 = vmul.f32 %v2915, %v2928
      %v2935 = vmul.f32 %v2916, %v2928
      %v2936 = vmul.f32 %v2917, %v2928
      %v2937 = vmul.f32 %v2918, %v2928
      %v2938 = vmul.f32 %v2919, %v2928
      %v2939 = vmul.f32 %v2920, %v2928
      %v2940 = vmul.f32 %v2921, %v2928
      %v2941 = vmul.f32 %v2922, %v2928
      %v2942 = vmul.f32 %v2923, %v2928
      %v2943 = vmul.f32 %v2924, %v2928
      %v2944 = vmul.f32 %v2925, %v2928
      %v2945 = vmul.f32 %v2926, %v2928
      %v2947 = vperm.slane %v2820, 0
      %v2949 = vadd.f32 %v2930, %v2947
      %v2950 = vadd.f32 %v2931, %v2947
      %v2951 = vadd.f32 %v2932, %v2947
      %v2952 = vadd.f32 %v2933, %v2947
      %v2953 = vadd.f32 %v2934, %v2947
      %v2954 = vadd.f32 %v2935, %v2947
      %v2955 = vadd.f32 %v2936, %v2947
      %v2956 = vadd.f32 %v2937, %v2947
      %v2957 = vadd.f32 %v2938, %v2947
      %v2958 = vadd.f32 %v2939, %v2947
      %v2959 = vadd.f32 %v2940, %v2947
      %v2960 = vadd.f32 %v2941, %v2947
      %v2961 = vadd.f32 %v2942, %v2947
      %v2962 = vadd.f32 %v2943, %v2947
      %v2963 = vadd.f32 %v2944, %v2947
      %v2964 = vadd.f32 %v2945, %v2947
      %v2965 = vmax.f32 %v2949, 0.0
      %v2966 = vmax.f32 %v2950, 0.0
      %v2967 = vmax.f32 %v2951, 0.0
      %v2968 = vmax.f32 %v2952, 0.0
      %v2969 = vmax.f32 %v2953, 0.0
      %v2970 = vmax.f32 %v2954, 0.0
      %v2971 = vmax.f32 %v2955, 0.0
      %v2972 = vmax.f32 %v2956, 0.0
      %v2973 = vmax.f32 %v2957, 0.0
      %v2974 = vmax.f32 %v2958, 0.0
      %v2975 = vmax.f32 %v2959, 0.0
      %v2976 = vmax.f32 %v2960, 0.0
      %v2977 = vmax.f32 %v2961, 0.0
      %v2978 = vmax.f32 %v2962, 0.0
      %v2979 = vmax.f32 %v2963, 0.0
      %v2980 = vmax.f32 %v2964, 0.0
      %v2981 = vpack.c.bf16 %v2966, %v2965
      %v2982 = vpack.c.bf16 %v2968, %v2967
      %v2983 = vpack.c.bf16 %v2970, %v2969
      %v2984 = vpack.c.bf16 %v2972, %v2971
      %v2985 = vpack.c.bf16 %v2974, %v2973
      %v2986 = vpack.c.bf16 %v2976, %v2975
      %v2987 = vpack.c.bf16 %v2978, %v2977
      %v2988 = vpack.c.bf16 %v2980, %v2979
      %v2989 = vld [vmem:[%s11] sm:$0xff]
      %v2990 = vld [vmem:[%s11 + $0x8] sm:$0xff]
      %v2991 = vld [vmem:[%s11 + $0x10] sm:$0xff]
      %v2992 = vld [vmem:[%s11 + $0x18] sm:$0xff]
      %v2993 = vld [vmem:[%s11 + $0x20] sm:$0xff]
      %v2994 = vld [vmem:[%s11 + $0x28] sm:$0xff]
      %v2995 = vld [vmem:[%s11 + $0x30] sm:$0xff]
      %v2996 = vld [vmem:[%s11 + $0x38] sm:$0xff]
      %v2997 = vld [vmem:[%s11 + $0x40] sm:$0xff]
      %v2998 = vld [vmem:[%s11 + $0x48] sm:$0xff]
      %v2999 = vld [vmem:[%s11 + $0x50] sm:$0xff]
      %v3000 = vld [vmem:[%s11 + $0x58] sm:$0xff]
      %v3001 = vld [vmem:[%s11 + $0x60] sm:$0xff]
      %v3002 = vld [vmem:[%s11 + $0x68] sm:$0xff]
      %v3003 = vld [vmem:[%s11 + $0x70] sm:$0xff]
      %v3004 = vld [vmem:[%s11 + $0x78] sm:$0xff]
      %v3005 = vld [vmem:[%s12] sm:$0x3]
      %v3007 = vperm.slane %v3005, 0
      %v3008 = vperm.slane %v3005, 1
      %v3027 = vunpack.c.l.b16 %v2989
      %v3028 = vunpack.c.h.b16 %v2989
      %v3029 = vunpack.c.l.b16 %v2990
      %v3030 = vunpack.c.h.b16 %v2990
      %v3031 = vunpack.c.l.b16 %v2991
      %v3032 = vunpack.c.h.b16 %v2991
      %v3033 = vunpack.c.l.b16 %v2992
      %v3034 = vunpack.c.h.b16 %v2992
      %v3035 = vunpack.c.l.b16 %v2993
      %v3036 = vunpack.c.h.b16 %v2993
      %v3037 = vunpack.c.l.b16 %v2994
      %v3038 = vunpack.c.h.b16 %v2994
      %v3039 = vunpack.c.l.b16 %v2995
      %v3040 = vunpack.c.h.b16 %v2995
      %v3041 = vunpack.c.l.b16 %v2996
      %v3042 = vunpack.c.h.b16 %v2996
      %v3043 = vunpack.c.l.b16 %v2997
      %v3044 = vunpack.c.h.b16 %v2997
      %v3045 = vunpack.c.l.b16 %v2998
      %v3046 = vunpack.c.h.b16 %v2998
      %v3047 = vunpack.c.l.b16 %v2999
      %v3048 = vunpack.c.h.b16 %v2999
      %v3049 = vunpack.c.l.b16 %v3000
      %v3050 = vunpack.c.h.b16 %v3000
      %v3051 = vunpack.c.l.b16 %v3001
      %v3052 = vunpack.c.h.b16 %v3001
      %v3053 = vunpack.c.l.b16 %v3002
      %v3054 = vunpack.c.h.b16 %v3002
      %v3055 = vunpack.c.l.b16 %v3003
      %v3056 = vunpack.c.h.b16 %v3003
      %v3057 = vunpack.c.l.b16 %v3004
      %v3058 = vunpack.c.h.b16 %v3004
      %v3059 = vpack.c.b16 %v3029, %v3027
      %v3060 = vpack.c.b16 %v3030, %v3028
      %v3061 = vpack.c.b16 %v3033, %v3031
      %v3062 = vpack.c.b16 %v3034, %v3032
      %v3063 = vpack.c.b16 %v3037, %v3035
      %v3064 = vpack.c.b16 %v3038, %v3036
      %v3065 = vpack.c.b16 %v3041, %v3039
      %v3066 = vpack.c.b16 %v3042, %v3040
      %v3067 = vpack.c.b16 %v3045, %v3043
      %v3068 = vpack.c.b16 %v3046, %v3044
      %v3069 = vpack.c.b16 %v3049, %v3047
      %v3070 = vpack.c.b16 %v3050, %v3048
      %v3071 = vpack.c.b16 %v3053, %v3051
      %v3072 = vpack.c.b16 %v3054, %v3052
      %v3073 = vpack.c.b16 %v3057, %v3055
      %v3074 = vpack.c.b16 %v3058, %v3056
      %3091 = vmatpush.bf16.msra.mxu0 %v3073
      %3092 = vmatpush.bf16.msra.mxu0 %v3071
      %3093 = vmatpush.bf16.msra.mxu0 %v3069
      %3094 = vmatpush.bf16.msra.mxu0 %v3067
      %3095 = vmatpush.bf16.msra.mxu0 %v3065
      %3096 = vmatpush.bf16.msra.mxu0 %v3063
      %3097 = vmatpush.bf16.msra.mxu0 %v3061
      %3098 = vmatpush.bf16.msra.mxu0 %v3059
      %3099 = vmatmul.bf16.gmra.mxu0 %v2981
      %v3100 = vpop.f32.mrf.mxu0
      %v3101 = vadd.f32 %v3007, %v3100
      %v3102 = vpop.f32.mrf.mxu0
      %v3103 = vadd.f32 %v3007, %v3102
      %3104 = vmatmul.bf16.gmra.mxu0 %v2982
      %v3105 = vpop.f32.mrf.mxu0
      %v3106 = vadd.f32 %v3007, %v3105
      %v3107 = vpop.f32.mrf.mxu0
      %v3108 = vadd.f32 %v3007, %v3107
      %3109 = vmatmul.bf16.gmra.mxu0 %v2983
      %v3110 = vpop.f32.mrf.mxu0
      %v3111 = vadd.f32 %v3007, %v3110
      %v3112 = vpop.f32.mrf.mxu0
      %v3113 = vadd.f32 %v3007, %v3112
      %3114 = vmatmul.bf16.gmra.mxu0 %v2984
      %v3115 = vpop.f32.mrf.mxu0
      %v3116 = vadd.f32 %v3007, %v3115
      %v3117 = vpop.f32.mrf.mxu0
      %v3118 = vadd.f32 %v3007, %v3117
      %3119 = vmatmul.bf16.gmra.mxu0 %v2985
      %v3120 = vpop.f32.mrf.mxu0
      %v3121 = vadd.f32 %v3007, %v3120
      %v3122 = vpop.f32.mrf.mxu0
      %v3123 = vadd.f32 %v3007, %v3122
      %3124 = vmatmul.bf16.gmra.mxu0 %v2986
      %v3125 = vpop.f32.mrf.mxu0
      %v3126 = vadd.f32 %v3007, %v3125
      %v3127 = vpop.f32.mrf.mxu0
      %v3128 = vadd.f32 %v3007, %v3127
      %3129 = vmatmul.bf16.gmra.mxu0 %v2987
      %v3130 = vpop.f32.mrf.mxu0
      %v3131 = vadd.f32 %v3007, %v3130
      %v3132 = vpop.f32.mrf.mxu0
      %v3133 = vadd.f32 %v3007, %v3132
      %3134 = vmatmul.bf16.gmra.mxu0 %v2988
      %v3135 = vpop.f32.mrf.mxu0
      %v3136 = vadd.f32 %v3007, %v3135
      %v3137 = vpop.f32.mrf.mxu0
      %v3138 = vadd.f32 %v3007, %v3137
      %3139 = vdwg.mxu0
      %3140 = vmatpush.bf16.msra.mxu0 %v3074
      %3141 = vmatpush.bf16.msra.mxu0 %v3072
      %3142 = vmatpush.bf16.msra.mxu0 %v3070
      %3143 = vmatpush.bf16.msra.mxu0 %v3068
      %3144 = vmatpush.bf16.msra.mxu0 %v3066
      %3145 = vmatpush.bf16.msra.mxu0 %v3064
      %3146 = vmatpush.bf16.msra.mxu0 %v3062
      %3147 = vmatpush.bf16.msra.mxu0 %v3060
      %3148 = vmatmul.bf16.gmra.mxu0 %v2981
      %v3149 = vpop.f32.mrf.mxu0
      %v3150 = vadd.f32 %v3008, %v3149
      %v3151 = vpop.f32.mrf.mxu0
      %v3152 = vadd.f32 %v3008, %v3151
      %3153 = vmatmul.bf16.gmra.mxu0 %v2982
      %v3154 = vpop.f32.mrf.mxu0
      %v3155 = vadd.f32 %v3008, %v3154
      %v3156 = vpop.f32.mrf.mxu0
      %v3157 = vadd.f32 %v3008, %v3156
      %3158 = vmatmul.bf16.gmra.mxu0 %v2983
      %v3159 = vpop.f32.mrf.mxu0
      %v3160 = vadd.f32 %v3008, %v3159
      %v3161 = vpop.f32.mrf.mxu0
      %v3162 = vadd.f32 %v3008, %v3161
      %3163 = vmatmul.bf16.gmra.mxu0 %v2984
      %v3164 = vpop.f32.mrf.mxu0
      %v3165 = vadd.f32 %v3008, %v3164
      %v3166 = vpop.f32.mrf.mxu0
      %v3167 = vadd.f32 %v3008, %v3166
      %3168 = vmatmul.bf16.gmra.mxu0 %v2985
      %v3169 = vpop.f32.mrf.mxu0
      %v3170 = vadd.f32 %v3008, %v3169
      %v3171 = vpop.f32.mrf.mxu0
      %v3172 = vadd.f32 %v3008, %v3171
      %3173 = vmatmul.bf16.gmra.mxu0 %v2986
      %v3174 = vpop.f32.mrf.mxu0
      %v3175 = vadd.f32 %v3008, %v3174
      %v3176 = vpop.f32.mrf.mxu0
      %v3177 = vadd.f32 %v3008, %v3176
      %3178 = vmatmul.bf16.gmra.mxu0 %v2987
      %v3179 = vpop.f32.mrf.mxu0
      %v3180 = vadd.f32 %v3008, %v3179
      %v3181 = vpop.f32.mrf.mxu0
      %v3182 = vadd.f32 %v3008, %v3181
      %3183 = vmatmul.bf16.gmra.mxu0 %v2988
      %v3184 = vpop.f32.mrf.mxu0
      %v3185 = vadd.f32 %v3008, %v3184
      %v3186 = vpop.f32.mrf.mxu0
      %v3187 = vadd.f32 %v3008, %v3186
      %3188 = vdwg.mxu0
      %3189 = vst [vmem:[%s475] sm:$0xff] %v3101
      %3190 = vst [vmem:[%s475 + $0x8] sm:$0xff] %v3150
      %3191 = vst [vmem:[%s475 + $0x10] sm:$0xff] %v3103
      %3192 = vst [vmem:[%s475 + $0x18] sm:$0xff] %v3152
      %3193 = vst [vmem:[%s475 + $0x20] sm:$0xff] %v3106
      %3194 = vst [vmem:[%s475 + $0x28] sm:$0xff] %v3155
      %3195 = vst [vmem:[%s475 + $0x30] sm:$0xff] %v3108
      %3196 = vst [vmem:[%s475 + $0x38] sm:$0xff] %v3157
      %3197 = vst [vmem:[%s475 + $0x40] sm:$0xff] %v3111
      %3198 = vst [vmem:[%s475 + $0x48] sm:$0xff] %v3160
      %3199 = vst [vmem:[%s475 + $0x50] sm:$0xff] %v3113
      %3200 = vst [vmem:[%s475 + $0x58] sm:$0xff] %v3162
      %3201 = vst [vmem:[%s475 + $0x60] sm:$0xff] %v3116
      %3202 = vst [vmem:[%s475 + $0x68] sm:$0xff] %v3165
      %3203 = vst [vmem:[%s475 + $0x70] sm:$0xff] %v3118
      %3204 = vst [vmem:[%s475 + $0x78] sm:$0xff] %v3167
      %3205 = vst [vmem:[%s475 + $0x80] sm:$0xff] %v3121
      %3206 = vst [vmem:[%s475 + $0x88] sm:$0xff] %v3170
      %3207 = vst [vmem:[%s475 + $0x90] sm:$0xff] %v3123
      %3208 = vst [vmem:[%s475 + $0x98] sm:$0xff] %v3172
      %3209 = vst [vmem:[%s475 + $0xa0] sm:$0xff] %v3126
      %3210 = vst [vmem:[%s475 + $0xa8] sm:$0xff] %v3175
      %3211 = vst [vmem:[%s475 + $0xb0] sm:$0xff] %v3128
      %3212 = vst [vmem:[%s475 + $0xb8] sm:$0xff] %v3177
      %3213 = vst [vmem:[%s475 + $0xc0] sm:$0xff] %v3131
      %3214 = vst [vmem:[%s475 + $0xc8] sm:$0xff] %v3180
      %3215 = vst [vmem:[%s475 + $0xd0] sm:$0xff] %v3133
      %3216 = vst [vmem:[%s475 + $0xd8] sm:$0xff] %v3182
      %3217 = vst [vmem:[%s475 + $0xe0] sm:$0xff] %v3136
      %3218 = vst [vmem:[%s475 + $0xe8] sm:$0xff] %v3185
      %3219 = vst [vmem:[%s475 + $0xf0] sm:$0xff] %v3138
      %3220 = vst [vmem:[%s475 + $0xf8] sm:$0xff] %v3187
      %3221 = vst [vmem:[%s480] sm:$0xff] %v2545
      %3222 = vst [vmem:[%s480 + $0x8] sm:$0xff] %v2546
      %3223 = vst [vmem:[%s480 + $0x10] sm:$0xff] %v2547
      %3224 = vst [vmem:[%s480 + $0x18] sm:$0xff] %v2548
      %3225 = vst [vmem:[%s480 + $0x20] sm:$0xff] %v2549
      %3226 = vst [vmem:[%s480 + $0x28] sm:$0xff] %v2550
      %3227 = vst [vmem:[%s480 + $0x30] sm:$0xff] %v2551
      %3228 = vst [vmem:[%s480 + $0x38] sm:$0xff] %v2552
      %3229 = vst [vmem:[%s480 + $0x40] sm:$0xff] %v2553
      %3230 = vst [vmem:[%s480 + $0x48] sm:$0xff] %v2554
      %3231 = vst [vmem:[%s480 + $0x50] sm:$0xff] %v2555
      %3232 = vst [vmem:[%s480 + $0x58] sm:$0xff] %v2556
      %3233 = vst [vmem:[%s480 + $0x60] sm:$0xff] %v2557
      %3234 = vst [vmem:[%s480 + $0x68] sm:$0xff] %v2558
      %3235 = vst [vmem:[%s480 + $0x70] sm:$0xff] %v2559
      %3236 = vst [vmem:[%s480 + $0x78] sm:$0xff] %v2560
      %3237 = vst [vmem:[%s480 + $0x80] sm:$0xff] %v2561
      %3238 = vst [vmem:[%s480 + $0x88] sm:$0xff] %v2562
      %3239 = vst [vmem:[%s480 + $0x90] sm:$0xff] %v2563
      %3240 = vst [vmem:[%s480 + $0x98] sm:$0xff] %v2564
      %3241 = vst [vmem:[%s480 + $0xa0] sm:$0xff] %v2565
      %3242 = vst [vmem:[%s480 + $0xa8] sm:$0xff] %v2566
      %3243 = vst [vmem:[%s480 + $0xb0] sm:$0xff] %v2567
      %3244 = vst [vmem:[%s480 + $0xb8] sm:$0xff] %v2568
      %3245 = vst [vmem:[%s480 + $0xc0] sm:$0xff] %v2569
      %3246 = vst [vmem:[%s480 + $0xc8] sm:$0xff] %v2570
      %3247 = vst [vmem:[%s480 + $0xd0] sm:$0xff] %v2571
      %3248 = vst [vmem:[%s480 + $0xd8] sm:$0xff] %v2572
      %3249 = vst [vmem:[%s480 + $0xe0] sm:$0xff] %v2573
      %3250 = vst [vmem:[%s480 + $0xe8] sm:$0xff] %v2574
      %3251 = vst [vmem:[%s480 + $0xf0] sm:$0xff] %v2575
      %3252 = vst [vmem:[%s480 + $0xf8] sm:$0xff] %v2576
      %p3253 = scmp.lt.s32.totalorder %s26, 1
      %s3254 = scalar_select %p3253, %s26, 1
      %s3255 = smul.addr %s3254, 32
      %s3256 = smul.addr %s3255, 8
      %s3257 = scalar_lea.vmem %s13, %s3256
      %p3258 = scmp.lt.s32.totalorder %s26, 1
      %s3259 = scalar_select %p3258, %s26, 1
      %s3260 = smul.addr %s3259, 32
      %s3261 = smul.addr %s3260, 8
      %s3262 = scalar_lea.vmem %s14, %s3261
      // Predicated region
      $region73: #{simsiam_forward.1} parent=71 // pred_check
        %p3263 = pneg %p322
      $region74: #{simsiam_forward.1} parent=71 // pred_check_branch
        %3265 = sbr.rel (%p3263) target = $region76
      $region75: #{simsiam_forward.1} parent=71 // pred_region
        _
      $region76: #{simsiam_forward.1} parent=71 // pred_fallthru
        _
      // Predicated region
      $region77: #{simsiam_forward.1} parent=71 // pred_check
        %p3266 = pneg %p348
      $region78: #{simsiam_forward.1} parent=71 // pred_check_branch
        %3268 = sbr.rel (%p3266) target = $region80
      $region79: #{simsiam_forward.1} parent=71 // pred_region
        _
      $region80: #{simsiam_forward.1} parent=71 // pred_fallthru
        _
    $region72: #{simsiam_forward.1} parent=5 // pred_fallthru
      _
    %p3269 = scmp.le.s32.totalorder 2, %s21
    // Predicated region
    $region81: #{simsiam_forward.1} parent=5 // pred_check
      %p3270 = pneg %p3269
    $region82: #{simsiam_forward.1} parent=5 // pred_check_branch
      %3272 = sbr.rel (%p3270) target = $region84
    $region83: #{simsiam_forward.1} parent=5 // pred_region
      %s3273 = ssub.s32 %s21, 2
      // Predicated region
      $region85: #{simsiam_forward.1} parent=83 // pred_check
        %p3274 = pneg %p328
      $region86: #{simsiam_forward.1} parent=83 // pred_check_branch
        %3276 = sbr.rel (%p3274) target = $region88
      $region87: #{simsiam_forward.1} parent=83 // pred_region
        %p3277 = scmp.lt.s32.totalorder %s27, 1
        %s3278 = scalar_select %p3277, %s27, 1
        %s3279 = smul.addr %s3278, 32
        %s3280 = smul.addr %s3279, 8
        %s3281 = scalar_lea.vmem %s13, %s3280
      $region88: #{simsiam_forward.1} parent=83 // pred_fallthru
        _
      // Predicated region
      $region89: #{simsiam_forward.1} parent=83 // pred_check
        %p3282 = pneg %p354
      $region90: #{simsiam_forward.1} parent=83 // pred_check_branch
        %3284 = sbr.rel (%p3282) target = $region92
      $region91: #{simsiam_forward.1} parent=83 // pred_region
        %p3285 = scmp.lt.s32.totalorder %s27, 1
        %s3286 = scalar_select %p3285, %s27, 1
        %s3287 = smul.addr %s3286, 32
        %s3288 = smul.addr %s3287, 8
        %s3289 = scalar_lea.vmem %s14, %s3288
      $region92: #{simsiam_forward.1} parent=83 // pred_fallthru
        _
    $region84: #{simsiam_forward.1} parent=5 // pred_fallthru
      _
  $region6: #{simsiam_forward.1} parent=0 // loop_footer
    %s25 = sadd.s32 1, %s21
  $region7: #{simsiam_forward.1} parent=0 // loop_footer_branch
    %20 = sbr.rel target = $region3
  $region8: #{simsiam_forward.1} parent=0 // loop_exit
    _

</llo_original>
